<compile_context>
chip_gen: v7x
topology: tpu7x:2x2x1
jax: 0.10.0
libtpu: 0.0.40
codegen_flags: <defaults>
</compile_context>

<pallas_src>
import jax
import jax.numpy as jnp
from jax.experimental import pallas as pl
from jax.experimental.pallas import tpu as pltpu

MASK_VAL = -1.0
BN_EPS = 1e-5


# ----------------------------------------------------------------------------
# Single fused kernel: mask -> 3x (2-layer LSTM, batched block-diag) ->
# concat (implicit, lane-dense) -> Linear -> BN(eval) -> LeakyReLU(0.2) ->
# Dropout(id) -> Linear -> BN(eval)
# ----------------------------------------------------------------------------
def decoder_fused_kernel(x_ref, wih0_ref, whh0_ref, b0_ref,
                         wih1_ref, whh1_ref, b1_ref,
                         w1_ref, s1_ref, t1_ref,
                         w2_ref, s2_ref, t2_ref,
                         out_ref):
    B = out_ref.shape[0]
    TB = x_ref.shape[0]
    T = TB // B
    HT = whh0_ref.shape[0]                 # sum of hidden dims (= 112 here)

    # Mask (x == -1) -> 0, fused into the kernel (module semantics).
    x = x_ref[...]
    x = x * (x != MASK_VAL).astype(x.dtype)

    # Hoisted, time-invariant layer-0 input projection: one wide MXU push
    # (T*B, D_in) x (D_in, 4*HT) instead of T tiny ones; bias folded in.
    xg = (jnp.dot(x, wih0_ref[...], preferred_element_type=jnp.float32)
          + b0_ref[...])                   # (T*B, 4*HT)

    h0 = jnp.zeros((B, HT), jnp.float32)
    c0 = jnp.zeros((B, HT), jnp.float32)
    h1 = jnp.zeros((B, HT), jnp.float32)
    c1 = jnp.zeros((B, HT), jnp.float32)

    def act(gates):
        # Gate groups are laid out [i | f | o | g]: one full-width sigmoid
        # EUP pass + one narrow tanh pass, then cheap lane slices.
        sg = jax.nn.sigmoid(gates)
        g = jnp.tanh(gates[:, 3 * HT:])
        return sg[:, 0:HT], sg[:, HT:2 * HT], sg[:, 2 * HT:3 * HT], g

    # T is small & static and the recurrence is inherently sequential.
    # Weights are re-read from VMEM each step (vld is cheap) rather than
    # pinned in vregs across the whole unrolled loop.
    for t in range(T):
        # Both recurrent matmuls depend only on step t-1 state -> issue them
        # back-to-back so the MXU pipelines while VPU/EUP finish layer 0.
        r0 = jnp.dot(h0, whh0_ref[...], preferred_element_type=jnp.float32)
        r1 = jnp.dot(h1, whh1_ref[...], preferred_element_type=jnp.float32)

        i0, f0, o0, g0 = act(xg[t * B:(t + 1) * B, :] + r0)
        c0 = f0 * c0 + i0 * g0
        h0 = o0 * jnp.tanh(c0)

        # TODO(synk): inter-layer LSTM dropout is identity in eval mode.
        gates1 = (jnp.dot(h0, wih1_ref[...], preferred_element_type=jnp.float32)
                  + r1 + b1_ref[...])
        i1, f1, o1, g1 = act(gates1)
        c1 = f1 * c1 + i1 * g1
        h1 = o1 * jnp.tanh(c1)

    # h1 is already the lane-dense concat of the three decoders' final
    # last-layer hidden states -> feed the projection head directly.
    # Linear -> BN(eval, pre-combined scale/shift) -> LeakyReLU(0.2)
    # -> Dropout(eval = id) -> Linear -> BN(eval).
    h = jnp.dot(h1, w1_ref[...], preferred_element_type=jnp.float32)
    h = h * s1_ref[...] + t1_ref[...]
    h = jnp.where(h >= 0, h, 0.2 * h)
    # TODO(synk): projection Dropout is identity in eval mode (no train-mode RNG).
    y = jnp.dot(h, w2_ref[...], preferred_element_type=jnp.float32)
    out_ref[...] = y * s2_ref[...] + t2_ref[...]


# ----------------------------------------------------------------------------
# Host-side weight fusion (done once, outside the kernel)
# ----------------------------------------------------------------------------
def _split_gates(w, H):
    """Split a (K, 4H) PyTorch-gate-order (i,f,g,o) matrix into (i, f, o, g)."""
    return w[:, 0:H], w[:, H:2 * H], w[:, 3 * H:4 * H], w[:, 2 * H:3 * H]


def fuse_lstm_params(lstm_params_list):
    """Pack the per-decoder 2-layer LSTM weights into fused matrices.

    Column layout: 4 groups of HT=sum(H) columns, group order [i | f | o | g];
    inside a group, decoders are concatenated in order.  Recurrent / layer-1
    weights are block-diagonal over the decoder blocks.
    """
    Hs = [p["whh0"].shape[0] for p in lstm_params_list]
    HT = sum(Hs)
    offs = [0]
    for h in Hs:
        offs.append(offs[-1] + h)

    def fuse_shared_rows(key):
        # all decoders see the same input rows -> concat along columns only
        groups = [[], [], [], []]
        for p, H in zip(lstm_params_list, Hs):
            for gi, chunk in enumerate(_split_gates(p[key], H)):
                groups[gi].append(chunk)
        return jnp.concatenate(
            [jnp.concatenate(g, axis=1) for g in groups], axis=1)

    def fuse_block_diag(key):
        out = jnp.zeros((HT, 4 * HT), jnp.float32)
        for d, (p, H) in enumerate(zip(lstm_params_list, Hs)):
            for gi, chunk in enumerate(_split_gates(p[key], H)):
                out = out.at[offs[d]:offs[d + 1],
                             gi * HT + offs[d]:gi * HT + offs[d + 1]].set(chunk)
        return out

    return dict(
        wih0=fuse_shared_rows("wih0"),
        b0=fuse_shared_rows("b0"),
        whh0=fuse_block_diag("whh0"),
        wih1=fuse_block_diag("wih1"),
        whh1=fuse_block_diag("whh1"),
        b1=fuse_shared_rows("b1"),
    )


def prep_proj_params(p):
    """Fold eval-mode BatchNorm (running stats) + linear bias into per-feature
    scale/shift applied after each matmul (pure f32 VPU math in-kernel)."""
    s1 = p["g1"] * jax.lax.rsqrt(p["v1"] + BN_EPS)
    t1 = (p["bl1"] - p["m1"]) * s1 + p["be1"]
    s2 = p["g2"] * jax.lax.rsqrt(p["v2"] + BN_EPS)
    t2 = (p["bl2"] - p["m2"]) * s2 + p["be2"]
    return dict(w1=p["w1"], s1=s1, t1=t1, w2=p["w2"], s2=s2, t2=t2)


# ----------------------------------------------------------------------------
# Wrapper: the whole forward is ONE pallas_call (no grid, all operands VMEM)
# ----------------------------------------------------------------------------
def multi_lstm_decoder_forward(x, lstm_params_list, proj_params):
    """Full MultiLSTMDecoder.forward (eval mode)."""
    if x.ndim == 2:
        x = x[:, None, :]                   # unsqueeze(1)
    B, T, D = x.shape

    fused = fuse_lstm_params(lstm_params_list)
    proj = prep_proj_params(proj_params)
    ts_dim = proj["w2"].shape[1]

    # Layout plumbing only: present x time-major so each step's rows are a
    # contiguous sublane slice inside the kernel.
    x_tb = jnp.transpose(x, (1, 0, 2)).reshape(T * B, D)

    vmem_specs = [pl.BlockSpec(memory_space=pltpu.MemorySpace.VMEM)
                  for _ in range(13)]
    return pl.pallas_call(
        decoder_fused_kernel,
        out_shape=jax.ShapeDtypeStruct((B, ts_dim), jnp.float32),
        in_specs=vmem_specs,
        out_specs=pl.BlockSpec(memory_space=pltpu.MemorySpace.VMEM),
    )(x_tb, fused["wih0"], fused["whh0"], fused["b0"],
      fused["wih1"], fused["whh1"], fused["b1"],
      proj["w1"], proj["s1"], proj["t1"],
      proj["w2"], proj["s2"], proj["t2"])


# ----------------------------------------------------------------------------
# Deterministic parameter init (PyTorch-like uniform ranges)
# ----------------------------------------------------------------------------
def init_lstm_params(key, input_dim, hidden_dim):
    k = 1.0 / jnp.sqrt(hidden_dim)
    keys = jax.random.split(key, 8)
    u = lambda kk, shape: jax.random.uniform(kk, shape, jnp.float32, -k, k)
    wih0 = u(keys[0], (input_dim, 4 * hidden_dim))
    whh0 = u(keys[1], (hidden_dim, 4 * hidden_dim))
    b0 = u(keys[2], (1, 4 * hidden_dim)) + u(keys[3], (1, 4 * hidden_dim))
    wih1 = u(keys[4], (hidden_dim, 4 * hidden_dim))
    whh1 = u(keys[5], (hidden_dim, 4 * hidden_dim))
    b1 = u(keys[6], (1, 4 * hidden_dim)) + u(keys[7], (1, 4 * hidden_dim))
    return dict(wih0=wih0, whh0=whh0, b0=b0, wih1=wih1, whh1=whh1, b1=b1)


def init_proj_params(key, total_dim, ts_dim):
    half = total_dim // 2
    keys = jax.random.split(key, 4)
    k1 = 1.0 / jnp.sqrt(total_dim)
    k2 = 1.0 / jnp.sqrt(half)
    w1 = jax.random.uniform(keys[0], (total_dim, half), jnp.float32, -k1, k1)
    bl1 = jax.random.uniform(keys[1], (1, half), jnp.float32, -k1, k1)
    w2 = jax.random.uniform(keys[2], (half, ts_dim), jnp.float32, -k2, k2)
    bl2 = jax.random.uniform(keys[3], (1, ts_dim), jnp.float32, -k2, k2)
    # BatchNorm eval-mode params (PyTorch defaults: gamma=1, beta=0, mean=0, var=1)
    return dict(
        w1=w1, bl1=bl1,
        g1=jnp.ones((1, half), jnp.float32), be1=jnp.zeros((1, half), jnp.float32),
        m1=jnp.zeros((1, half), jnp.float32), v1=jnp.ones((1, half), jnp.float32),
        w2=w2, bl2=bl2,
        g2=jnp.ones((1, ts_dim), jnp.float32), be2=jnp.zeros((1, ts_dim), jnp.float32),
        m2=jnp.zeros((1, ts_dim), jnp.float32), v2=jnp.ones((1, ts_dim), jnp.float32),
    )


# ----------------------------------------------------------------------------
# Pure-JAX reference (unfused, PyTorch gate order) for a sanity check
# ----------------------------------------------------------------------------
def ref_forward(x, lstm_params_list, proj):
    if x.ndim == 2:
        x = x[:, None, :]
    x = x * (x != MASK_VAL).astype(x.dtype)
    hiddens = []
    for p in lstm_params_list:
        B, T, _ = x.shape
        H = p["whh0"].shape[0]
        h0 = c0 = h1 = c1 = jnp.zeros((B, H), jnp.float32)

        def cell(x_t, h, c, wih, whh, b):
            g = x_t @ wih + h @ whh + b
            i, f, gg, o = (jax.nn.sigmoid(g[:, :H]), jax.nn.sigmoid(g[:, H:2*H]),
                           jnp.tanh(g[:, 2*H:3*H]), jax.nn.sigmoid(g[:, 3*H:]))
            c = f * c + i * gg
            return o * jnp.tanh(c), c

        for t in range(T):
            h0, c0 = cell(x[:, t, :], h0, c0, p["wih0"], p["whh0"], p["b0"])
            h1, c1 = cell(h0, h1, c1, p["wih1"], p["whh1"], p["b1"])
        hiddens.append(h1)
    comb = jnp.concatenate(hiddens, axis=1)
    h = comb @ proj["w1"] + proj["bl1"]
    h = (h - proj["m1"]) / jnp.sqrt(proj["v1"] + BN_EPS) * proj["g1"] + proj["be1"]
    h = jnp.where(h >= 0, h, 0.2 * h)
    y = h @ proj["w2"] + proj["bl2"]
    y = (y - proj["m2"]) / jnp.sqrt(proj["v2"] + BN_EPS) * proj["g2"] + proj["be2"]
    return y


if __name__ == "__main__":
    # Small shapes consistent with the module's forward:
    #   output_dim (LSTM input feature size) = 4, seq = 8, batch = 2
    #   hidden_dims = [32, 64, 16] (2-layer LSTMs), ts_dim = 16
    B, T, OUTPUT_DIM, TS_DIM = 2, 8, 4, 16
    HIDDEN_DIMS = [32, 64, 16]
    TOTAL = sum(HIDDEN_DIMS)  # 112

    root = jax.random.PRNGKey(0)
    k_x, k_p = jax.random.split(root)
    x = jax.random.normal(k_x, (B, T, OUTPUT_DIM), jnp.float32)
    # sprinkle some mask values (-1) to exercise the masking path
    x = x.at[0, 2, :].set(MASK_VAL)

    lstm_keys = jax.random.split(k_p, len(HIDDEN_DIMS) + 1)
    lstm_params = [init_lstm_params(lstm_keys[i], OUTPUT_DIM, h)
                   for i, h in enumerate(HIDDEN_DIMS)]
    proj_params = init_proj_params(lstm_keys[-1], TOTAL, TS_DIM)

    out = multi_lstm_decoder_forward(x, lstm_params, proj_params)
    out = jax.block_until_ready(out)

    ref = jax.block_until_ready(ref_forward(x, lstm_params, proj_params))
    assert out.shape == (B, TS_DIM)
    assert jnp.allclose(out, ref, atol=2e-3, rtol=2e-3), (
        "max abs diff = %f" % float(jnp.max(jnp.abs(out - ref))))

    print("KERNEL_OK")
</pallas_src>

<mosaic_0001>
module attributes {stable_mosaic.version = 11 : i64} {
  func.func @decoder_fused_kernel(%arg0: memref<16x4xf32, #tpu.memory_space<vmem>>, %arg1: memref<4x448xf32, #tpu.memory_space<vmem>>, %arg2: memref<112x448xf32, #tpu.memory_space<vmem>>, %arg3: memref<1x448xf32, #tpu.memory_space<vmem>>, %arg4: memref<112x448xf32, #tpu.memory_space<vmem>>, %arg5: memref<112x448xf32, #tpu.memory_space<vmem>>, %arg6: memref<1x448xf32, #tpu.memory_space<vmem>>, %arg7: memref<112x56xf32, #tpu.memory_space<vmem>>, %arg8: memref<1x56xf32, #tpu.memory_space<vmem>>, %arg9: memref<1x56xf32, #tpu.memory_space<vmem>>, %arg10: memref<56x16xf32, #tpu.memory_space<vmem>>, %arg11: memref<1x16xf32, #tpu.memory_space<vmem>>, %arg12: memref<1x16xf32, #tpu.memory_space<vmem>>, %arg13: memref<2x16xf32, #tpu.memory_space<vmem>>) attributes {dimension_semantics = [], scalar_prefetch = 0 : i64, scratch_operands = 0 : i64, tpu.core_type = #tpu.core_type<tc>} {
    %c0 = arith.constant 0 : index
    %c0_0 = arith.constant 0 : index
    %0 = vector.load %arg0[%c0, %c0_0] : memref<16x4xf32, #tpu.memory_space<vmem>>, vector<16x4xf32>
    %cst = arith.constant -1.000000e+00 : f32
    %1 = vector.broadcast %cst : f32 to vector<16x4xf32>
    %2 = arith.cmpf one, %0, %1 : vector<16x4xf32>
    %3 = arith.extui %2 : vector<16x4xi1> to vector<16x4xi32>
    %4 = arith.sitofp %3 : vector<16x4xi32> to vector<16x4xf32>
    %5 = arith.mulf %0, %4 : vector<16x4xf32>
    %c0_1 = arith.constant 0 : index
    %c0_2 = arith.constant 0 : index
    %6 = vector.load %arg1[%c0_1, %c0_2] : memref<4x448xf32, #tpu.memory_space<vmem>>, vector<4x448xf32>
    %cst_3 = arith.constant dense<0.000000e+00> : vector<16x448xf32>
    %7 = tpu.matmul %5, %6, %cst_3 {dimension_numbers = #tpu.dot_dimension_numbers<[1], [0], [0], [1], [0, 0, 1, 1], [], []>} : vector<16x4xf32>, vector<4x448xf32>, vector<16x448xf32> -> vector<16x448xf32>
    %c0_4 = arith.constant 0 : index
    %c0_5 = arith.constant 0 : index
    %8 = vector.load %arg3[%c0_4, %c0_5] : memref<1x448xf32, #tpu.memory_space<vmem>>, vector<1x448xf32>
    %9 = vector.broadcast %8 : vector<1x448xf32> to vector<16x448xf32>
    %10 = arith.addf %7, %9 : vector<16x448xf32>
    %cst_6 = arith.constant 0.000000e+00 : f32
    %11 = vector.broadcast %cst_6 : f32 to vector<2x112xf32>
    %cst_7 = arith.constant 0.000000e+00 : f32
    %12 = vector.broadcast %cst_7 : f32 to vector<2x112xf32>
    %cst_8 = arith.constant 0.000000e+00 : f32
    %13 = vector.broadcast %cst_8 : f32 to vector<2x112xf32>
    %cst_9 = arith.constant 0.000000e+00 : f32
    %14 = vector.broadcast %cst_9 : f32 to vector<2x112xf32>
    %c0_10 = arith.constant 0 : index
    %c0_11 = arith.constant 0 : index
    %15 = vector.load %arg2[%c0_10, %c0_11] : memref<112x448xf32, #tpu.memory_space<vmem>>, vector<112x448xf32>
    %cst_12 = arith.constant dense<0.000000e+00> : vector<2x448xf32>
    %16 = tpu.matmul %11, %15, %cst_12 {dimension_numbers = #tpu.dot_dimension_numbers<[1], [0], [0], [1], [0, 0, 1, 1], [], []>} : vector<2x112xf32>, vector<112x448xf32>, vector<2x448xf32> -> vector<2x448xf32>
    %c0_13 = arith.constant 0 : index
    %c0_14 = arith.constant 0 : index
    %17 = vector.load %arg5[%c0_13, %c0_14] : memref<112x448xf32, #tpu.memory_space<vmem>>, vector<112x448xf32>
    %cst_15 = arith.constant dense<0.000000e+00> : vector<2x448xf32>
    %18 = tpu.matmul %13, %17, %cst_15 {dimension_numbers = #tpu.dot_dimension_numbers<[1], [0], [0], [1], [0, 0, 1, 1], [], []>} : vector<2x112xf32>, vector<112x448xf32>, vector<2x448xf32> -> vector<2x448xf32>
    %19 = vector.extract_strided_slice %10 {offsets = [0, 0], sizes = [2, 448], strides = [1, 1]} : vector<16x448xf32> to vector<2x448xf32>
    %20 = arith.addf %19, %16 : vector<2x448xf32>
    %21 = arith.negf %20 : vector<2x448xf32>
    %22 = math.exp %21 : vector<2x448xf32>
    %cst_16 = arith.constant 1.000000e+00 : f32
    %23 = vector.broadcast %cst_16 : f32 to vector<2x448xf32>
    %24 = arith.addf %23, %22 : vector<2x448xf32>
    %25 = arith.divf %23, %24 : vector<2x448xf32>
    %26 = vector.extract_strided_slice %20 {offsets = [0, 336], sizes = [2, 112], strides = [1, 1]} : vector<2x448xf32> to vector<2x112xf32>
    %27 = math.tanh %26 : vector<2x112xf32>
    %28 = vector.extract_strided_slice %25 {offsets = [0, 0], sizes = [2, 112], strides = [1, 1]} : vector<2x448xf32> to vector<2x112xf32>
    %29 = vector.extract_strided_slice %25 {offsets = [0, 112], sizes = [2, 112], strides = [1, 1]} : vector<2x448xf32> to vector<2x112xf32>
    %30 = vector.extract_strided_slice %25 {offsets = [0, 224], sizes = [2, 112], strides = [1, 1]} : vector<2x448xf32> to vector<2x112xf32>
    %31 = arith.mulf %29, %12 : vector<2x112xf32>
    %32 = arith.mulf %28, %27 : vector<2x112xf32>
    %33 = arith.addf %31, %32 : vector<2x112xf32>
    %34 = math.tanh %33 : vector<2x112xf32>
    %35 = arith.mulf %30, %34 : vector<2x112xf32>
    %c0_17 = arith.constant 0 : index
    %c0_18 = arith.constant 0 : index
    %36 = vector.load %arg4[%c0_17, %c0_18] : memref<112x448xf32, #tpu.memory_space<vmem>>, vector<112x448xf32>
    %cst_19 = arith.constant dense<0.000000e+00> : vector<2x448xf32>
    %37 = tpu.matmul %35, %36, %cst_19 {dimension_numbers = #tpu.dot_dimension_numbers<[1], [0], [0], [1], [0, 0, 1, 1], [], []>} : vector<2x112xf32>, vector<112x448xf32>, vector<2x448xf32> -> vector<2x448xf32>
    %38 = arith.addf %37, %18 : vector<2x448xf32>
    %c0_20 = arith.constant 0 : index
    %c0_21 = arith.constant 0 : index
    %39 = vector.load %arg6[%c0_20, %c0_21] : memref<1x448xf32, #tpu.memory_space<vmem>>, vector<1x448xf32>
    %40 = vector.broadcast %39 : vector<1x448xf32> to vector<2x448xf32>
    %41 = arith.addf %38, %40 : vector<2x448xf32>
    %42 = arith.negf %41 : vector<2x448xf32>
    %43 = math.exp %42 : vector<2x448xf32>
    %cst_22 = arith.constant 1.000000e+00 : f32
    %44 = vector.broadcast %cst_22 : f32 to vector<2x448xf32>
    %45 = arith.addf %44, %43 : vector<2x448xf32>
    %46 = arith.divf %44, %45 : vector<2x448xf32>
    %47 = vector.extract_strided_slice %41 {offsets = [0, 336], sizes = [2, 112], strides = [1, 1]} : vector<2x448xf32> to vector<2x112xf32>
    %48 = math.tanh %47 : vector<2x112xf32>
    %49 = vector.extract_strided_slice %46 {offsets = [0, 0], sizes = [2, 112], strides = [1, 1]} : vector<2x448xf32> to vector<2x112xf32>
    %50 = vector.extract_strided_slice %46 {offsets = [0, 112], sizes = [2, 112], strides = [1, 1]} : vector<2x448xf32> to vector<2x112xf32>
    %51 = vector.extract_strided_slice %46 {offsets = [0, 224], sizes = [2, 112], strides = [1, 1]} : vector<2x448xf32> to vector<2x112xf32>
    %52 = arith.mulf %50, %14 : vector<2x112xf32>
    %53 = arith.mulf %49, %48 : vector<2x112xf32>
    %54 = arith.addf %52, %53 : vector<2x112xf32>
    %55 = math.tanh %54 : vector<2x112xf32>
    %56 = arith.mulf %51, %55 : vector<2x112xf32>
    %c0_23 = arith.constant 0 : index
    %c0_24 = arith.constant 0 : index
    %57 = vector.load %arg2[%c0_23, %c0_24] : memref<112x448xf32, #tpu.memory_space<vmem>>, vector<112x448xf32>
    %cst_25 = arith.constant dense<0.000000e+00> : vector<2x448xf32>
    %58 = tpu.matmul %35, %57, %cst_25 {dimension_numbers = #tpu.dot_dimension_numbers<[1], [0], [0], [1], [0, 0, 1, 1], [], []>} : vector<2x112xf32>, vector<112x448xf32>, vector<2x448xf32> -> vector<2x448xf32>
    %c0_26 = arith.constant 0 : index
    %c0_27 = arith.constant 0 : index
    %59 = vector.load %arg5[%c0_26, %c0_27] : memref<112x448xf32, #tpu.memory_space<vmem>>, vector<112x448xf32>
    %cst_28 = arith.constant dense<0.000000e+00> : vector<2x448xf32>
    %60 = tpu.matmul %56, %59, %cst_28 {dimension_numbers = #tpu.dot_dimension_numbers<[1], [0], [0], [1], [0, 0, 1, 1], [], []>} : vector<2x112xf32>, vector<112x448xf32>, vector<2x448xf32> -> vector<2x448xf32>
    %61 = vector.extract_strided_slice %10 {offsets = [2, 0], sizes = [2, 448], strides = [1, 1]} : vector<16x448xf32> to vector<2x448xf32>
    %62 = arith.addf %61, %58 : vector<2x448xf32>
    %63 = arith.negf %62 : vector<2x448xf32>
    %64 = math.exp %63 : vector<2x448xf32>
    %cst_29 = arith.constant 1.000000e+00 : f32
    %65 = vector.broadcast %cst_29 : f32 to vector<2x448xf32>
    %66 = arith.addf %65, %64 : vector<2x448xf32>
    %67 = arith.divf %65, %66 : vector<2x448xf32>
    %68 = vector.extract_strided_slice %62 {offsets = [0, 336], sizes = [2, 112], strides = [1, 1]} : vector<2x448xf32> to vector<2x112xf32>
    %69 = math.tanh %68 : vector<2x112xf32>
    %70 = vector.extract_strided_slice %67 {offsets = [0, 0], sizes = [2, 112], strides = [1, 1]} : vector<2x448xf32> to vector<2x112xf32>
    %71 = vector.extract_strided_slice %67 {offsets = [0, 112], sizes = [2, 112], strides = [1, 1]} : vector<2x448xf32> to vector<2x112xf32>
    %72 = vector.extract_strided_slice %67 {offsets = [0, 224], sizes = [2, 112], strides = [1, 1]} : vector<2x448xf32> to vector<2x112xf32>
    %73 = arith.mulf %71, %33 : vector<2x112xf32>
    %74 = arith.mulf %70, %69 : vector<2x112xf32>
    %75 = arith.addf %73, %74 : vector<2x112xf32>
    %76 = math.tanh %75 : vector<2x112xf32>
    %77 = arith.mulf %72, %76 : vector<2x112xf32>
    %c0_30 = arith.constant 0 : index
    %c0_31 = arith.constant 0 : index
    %78 = vector.load %arg4[%c0_30, %c0_31] : memref<112x448xf32, #tpu.memory_space<vmem>>, vector<112x448xf32>
    %cst_32 = arith.constant dense<0.000000e+00> : vector<2x448xf32>
    %79 = tpu.matmul %77, %78, %cst_32 {dimension_numbers = #tpu.dot_dimension_numbers<[1], [0], [0], [1], [0, 0, 1, 1], [], []>} : vector<2x112xf32>, vector<112x448xf32>, vector<2x448xf32> -> vector<2x448xf32>
    %80 = arith.addf %79, %60 : vector<2x448xf32>
    %c0_33 = arith.constant 0 : index
    %c0_34 = arith.constant 0 : index
    %81 = vector.load %arg6[%c0_33, %c0_34] : memref<1x448xf32, #tpu.memory_space<vmem>>, vector<1x448xf32>
    %82 = vector.broadcast %81 : vector<1x448xf32> to vector<2x448xf32>
    %83 = arith.addf %80, %82 : vector<2x448xf32>
    %84 = arith.negf %83 : vector<2x448xf32>
    %85 = math.exp %84 : vector<2x448xf32>
    %cst_35 = arith.constant 1.000000e+00 : f32
    %86 = vector.broadcast %cst_35 : f32 to vector<2x448xf32>
    %87 = arith.addf %86, %85 : vector<2x448xf32>
    %88 = arith.divf %86, %87 : vector<2x448xf32>
    %89 = vector.extract_strided_slice %83 {offsets = [0, 336], sizes = [2, 112], strides = [1, 1]} : vector<2x448xf32> to vector<2x112xf32>
    %90 = math.tanh %89 : vector<2x112xf32>
    %91 = vector.extract_strided_slice %88 {offsets = [0, 0], sizes = [2, 112], strides = [1, 1]} : vector<2x448xf32> to vector<2x112xf32>
    %92 = vector.extract_strided_slice %88 {offsets = [0, 112], sizes = [2, 112], strides = [1, 1]} : vector<2x448xf32> to vector<2x112xf32>
    %93 = vector.extract_strided_slice %88 {offsets = [0, 224], sizes = [2, 112], strides = [1, 1]} : vector<2x448xf32> to vector<2x112xf32>
    %94 = arith.mulf %92, %54 : vector<2x112xf32>
    %95 = arith.mulf %91, %90 : vector<2x112xf32>
    %96 = arith.addf %94, %95 : vector<2x112xf32>
    %97 = math.tanh %96 : vector<2x112xf32>
    %98 = arith.mulf %93, %97 : vector<2x112xf32>
    %c0_36 = arith.constant 0 : index
    %c0_37 = arith.constant 0 : index
    %99 = vector.load %arg2[%c0_36, %c0_37] : memref<112x448xf32, #tpu.memory_space<vmem>>, vector<112x448xf32>
    %cst_38 = arith.constant dense<0.000000e+00> : vector<2x448xf32>
    %100 = tpu.matmul %77, %99, %cst_38 {dimension_numbers = #tpu.dot_dimension_numbers<[1], [0], [0], [1], [0, 0, 1, 1], [], []>} : vector<2x112xf32>, vector<112x448xf32>, vector<2x448xf32> -> vector<2x448xf32>
    %c0_39 = arith.constant 0 : index
    %c0_40 = arith.constant 0 : index
    %101 = vector.load %arg5[%c0_39, %c0_40] : memref<112x448xf32, #tpu.memory_space<vmem>>, vector<112x448xf32>
    %cst_41 = arith.constant dense<0.000000e+00> : vector<2x448xf32>
    %102 = tpu.matmul %98, %101, %cst_41 {dimension_numbers = #tpu.dot_dimension_numbers<[1], [0], [0], [1], [0, 0, 1, 1], [], []>} : vector<2x112xf32>, vector<112x448xf32>, vector<2x448xf32> -> vector<2x448xf32>
    %103 = vector.extract_strided_slice %10 {offsets = [4, 0], sizes = [2, 448], strides = [1, 1]} : vector<16x448xf32> to vector<2x448xf32>
    %104 = arith.addf %103, %100 : vector<2x448xf32>
    %105 = arith.negf %104 : vector<2x448xf32>
    %106 = math.exp %105 : vector<2x448xf32>
    %cst_42 = arith.constant 1.000000e+00 : f32
    %107 = vector.broadcast %cst_42 : f32 to vector<2x448xf32>
    %108 = arith.addf %107, %106 : vector<2x448xf32>
    %109 = arith.divf %107, %108 : vector<2x448xf32>
    %110 = vector.extract_strided_slice %104 {offsets = [0, 336], sizes = [2, 112], strides = [1, 1]} : vector<2x448xf32> to vector<2x112xf32>
    %111 = math.tanh %110 : vector<2x112xf32>
    %112 = vector.extract_strided_slice %109 {offsets = [0, 0], sizes = [2, 112], strides = [1, 1]} : vector<2x448xf32> to vector<2x112xf32>
    %113 = vector.extract_strided_slice %109 {offsets = [0, 112], sizes = [2, 112], strides = [1, 1]} : vector<2x448xf32> to vector<2x112xf32>
    %114 = vector.extract_strided_slice %109 {offsets = [0, 224], sizes = [2, 112], strides = [1, 1]} : vector<2x448xf32> to vector<2x112xf32>
    %115 = arith.mulf %113, %75 : vector<2x112xf32>
    %116 = arith.mulf %112, %111 : vector<2x112xf32>
    %117 = arith.addf %115, %116 : vector<2x112xf32>
    %118 = math.tanh %117 : vector<2x112xf32>
    %119 = arith.mulf %114, %118 : vector<2x112xf32>
    %c0_43 = arith.constant 0 : index
    %c0_44 = arith.constant 0 : index
    %120 = vector.load %arg4[%c0_43, %c0_44] : memref<112x448xf32, #tpu.memory_space<vmem>>, vector<112x448xf32>
    %cst_45 = arith.constant dense<0.000000e+00> : vector<2x448xf32>
    %121 = tpu.matmul %119, %120, %cst_45 {dimension_numbers = #tpu.dot_dimension_numbers<[1], [0], [0], [1], [0, 0, 1, 1], [], []>} : vector<2x112xf32>, vector<112x448xf32>, vector<2x448xf32> -> vector<2x448xf32>
    %122 = arith.addf %121, %102 : vector<2x448xf32>
    %c0_46 = arith.constant 0 : index
    %c0_47 = arith.constant 0 : index
    %123 = vector.load %arg6[%c0_46, %c0_47] : memref<1x448xf32, #tpu.memory_space<vmem>>, vector<1x448xf32>
    %124 = vector.broadcast %123 : vector<1x448xf32> to vector<2x448xf32>
    %125 = arith.addf %122, %124 : vector<2x448xf32>
    %126 = arith.negf %125 : vector<2x448xf32>
    %127 = math.exp %126 : vector<2x448xf32>
    %cst_48 = arith.constant 1.000000e+00 : f32
    %128 = vector.broadcast %cst_48 : f32 to vector<2x448xf32>
    %129 = arith.addf %128, %127 : vector<2x448xf32>
    %130 = arith.divf %128, %129 : vector<2x448xf32>
    %131 = vector.extract_strided_slice %125 {offsets = [0, 336], sizes = [2, 112], strides = [1, 1]} : vector<2x448xf32> to vector<2x112xf32>
    %132 = math.tanh %131 : vector<2x112xf32>
    %133 = vector.extract_strided_slice %130 {offsets = [0, 0], sizes = [2, 112], strides = [1, 1]} : vector<2x448xf32> to vector<2x112xf32>
    %134 = vector.extract_strided_slice %130 {offsets = [0, 112], sizes = [2, 112], strides = [1, 1]} : vector<2x448xf32> to vector<2x112xf32>
    %135 = vector.extract_strided_slice %130 {offsets = [0, 224], sizes = [2, 112], strides = [1, 1]} : vector<2x448xf32> to vector<2x112xf32>
    %136 = arith.mulf %134, %96 : vector<2x112xf32>
    %137 = arith.mulf %133, %132 : vector<2x112xf32>
    %138 = arith.addf %136, %137 : vector<2x112xf32>
    %139 = math.tanh %138 : vector<2x112xf32>
    %140 = arith.mulf %135, %139 : vector<2x112xf32>
    %c0_49 = arith.constant 0 : index
    %c0_50 = arith.constant 0 : index
    %141 = vector.load %arg2[%c0_49, %c0_50] : memref<112x448xf32, #tpu.memory_space<vmem>>, vector<112x448xf32>
    %cst_51 = arith.constant dense<0.000000e+00> : vector<2x448xf32>
    %142 = tpu.matmul %119, %141, %cst_51 {dimension_numbers = #tpu.dot_dimension_numbers<[1], [0], [0], [1], [0, 0, 1, 1], [], []>} : vector<2x112xf32>, vector<112x448xf32>, vector<2x448xf32> -> vector<2x448xf32>
    %c0_52 = arith.constant 0 : index
    %c0_53 = arith.constant 0 : index
    %143 = vector.load %arg5[%c0_52, %c0_53] : memref<112x448xf32, #tpu.memory_space<vmem>>, vector<112x448xf32>
    %cst_54 = arith.constant dense<0.000000e+00> : vector<2x448xf32>
    %144 = tpu.matmul %140, %143, %cst_54 {dimension_numbers = #tpu.dot_dimension_numbers<[1], [0], [0], [1], [0, 0, 1, 1], [], []>} : vector<2x112xf32>, vector<112x448xf32>, vector<2x448xf32> -> vector<2x448xf32>
    %145 = vector.extract_strided_slice %10 {offsets = [6, 0], sizes = [2, 448], strides = [1, 1]} : vector<16x448xf32> to vector<2x448xf32>
    %146 = arith.addf %145, %142 : vector<2x448xf32>
    %147 = arith.negf %146 : vector<2x448xf32>
    %148 = math.exp %147 : vector<2x448xf32>
    %cst_55 = arith.constant 1.000000e+00 : f32
    %149 = vector.broadcast %cst_55 : f32 to vector<2x448xf32>
    %150 = arith.addf %149, %148 : vector<2x448xf32>
    %151 = arith.divf %149, %150 : vector<2x448xf32>
    %152 = vector.extract_strided_slice %146 {offsets = [0, 336], sizes = [2, 112], strides = [1, 1]} : vector<2x448xf32> to vector<2x112xf32>
    %153 = math.tanh %152 : vector<2x112xf32>
    %154 = vector.extract_strided_slice %151 {offsets = [0, 0], sizes = [2, 112], strides = [1, 1]} : vector<2x448xf32> to vector<2x112xf32>
    %155 = vector.extract_strided_slice %151 {offsets = [0, 112], sizes = [2, 112], strides = [1, 1]} : vector<2x448xf32> to vector<2x112xf32>
    %156 = vector.extract_strided_slice %151 {offsets = [0, 224], sizes = [2, 112], strides = [1, 1]} : vector<2x448xf32> to vector<2x112xf32>
    %157 = arith.mulf %155, %117 : vector<2x112xf32>
    %158 = arith.mulf %154, %153 : vector<2x112xf32>
    %159 = arith.addf %157, %158 : vector<2x112xf32>
    %160 = math.tanh %159 : vector<2x112xf32>
    %161 = arith.mulf %156, %160 : vector<2x112xf32>
    %c0_56 = arith.constant 0 : index
    %c0_57 = arith.constant 0 : index
    %162 = vector.load %arg4[%c0_56, %c0_57] : memref<112x448xf32, #tpu.memory_space<vmem>>, vector<112x448xf32>
    %cst_58 = arith.constant dense<0.000000e+00> : vector<2x448xf32>
    %163 = tpu.matmul %161, %162, %cst_58 {dimension_numbers = #tpu.dot_dimension_numbers<[1], [0], [0], [1], [0, 0, 1, 1], [], []>} : vector<2x112xf32>, vector<112x448xf32>, vector<2x448xf32> -> vector<2x448xf32>
    %164 = arith.addf %163, %144 : vector<2x448xf32>
    %c0_59 = arith.constant 0 : index
    %c0_60 = arith.constant 0 : index
    %165 = vector.load %arg6[%c0_59, %c0_60] : memref<1x448xf32, #tpu.memory_space<vmem>>, vector<1x448xf32>
    %166 = vector.broadcast %165 : vector<1x448xf32> to vector<2x448xf32>
    %167 = arith.addf %164, %166 : vector<2x448xf32>
    %168 = arith.negf %167 : vector<2x448xf32>
    %169 = math.exp %168 : vector<2x448xf32>
    %cst_61 = arith.constant 1.000000e+00 : f32
    %170 = vector.broadcast %cst_61 : f32 to vector<2x448xf32>
    %171 = arith.addf %170, %169 : vector<2x448xf32>
    %172 = arith.divf %170, %171 : vector<2x448xf32>
    %173 = vector.extract_strided_slice %167 {offsets = [0, 336], sizes = [2, 112], strides = [1, 1]} : vector<2x448xf32> to vector<2x112xf32>
    %174 = math.tanh %173 : vector<2x112xf32>
    %175 = vector.extract_strided_slice %172 {offsets = [0, 0], sizes = [2, 112], strides = [1, 1]} : vector<2x448xf32> to vector<2x112xf32>
    %176 = vector.extract_strided_slice %172 {offsets = [0, 112], sizes = [2, 112], strides = [1, 1]} : vector<2x448xf32> to vector<2x112xf32>
    %177 = vector.extract_strided_slice %172 {offsets = [0, 224], sizes = [2, 112], strides = [1, 1]} : vector<2x448xf32> to vector<2x112xf32>
    %178 = arith.mulf %176, %138 : vector<2x112xf32>
    %179 = arith.mulf %175, %174 : vector<2x112xf32>
    %180 = arith.addf %178, %179 : vector<2x112xf32>
    %181 = math.tanh %180 : vector<2x112xf32>
    %182 = arith.mulf %177, %181 : vector<2x112xf32>
    %c0_62 = arith.constant 0 : index
    %c0_63 = arith.constant 0 : index
    %183 = vector.load %arg2[%c0_62, %c0_63] : memref<112x448xf32, #tpu.memory_space<vmem>>, vector<112x448xf32>
    %cst_64 = arith.constant dense<0.000000e+00> : vector<2x448xf32>
    %184 = tpu.matmul %161, %183, %cst_64 {dimension_numbers = #tpu.dot_dimension_numbers<[1], [0], [0], [1], [0, 0, 1, 1], [], []>} : vector<2x112xf32>, vector<112x448xf32>, vector<2x448xf32> -> vector<2x448xf32>
    %c0_65 = arith.constant 0 : index
    %c0_66 = arith.constant 0 : index
    %185 = vector.load %arg5[%c0_65, %c0_66] : memref<112x448xf32, #tpu.memory_space<vmem>>, vector<112x448xf32>
    %cst_67 = arith.constant dense<0.000000e+00> : vector<2x448xf32>
    %186 = tpu.matmul %182, %185, %cst_67 {dimension_numbers = #tpu.dot_dimension_numbers<[1], [0], [0], [1], [0, 0, 1, 1], [], []>} : vector<2x112xf32>, vector<112x448xf32>, vector<2x448xf32> -> vector<2x448xf32>
    %187 = vector.extract_strided_slice %10 {offsets = [8, 0], sizes = [2, 448], strides = [1, 1]} : vector<16x448xf32> to vector<2x448xf32>
    %188 = arith.addf %187, %184 : vector<2x448xf32>
    %189 = arith.negf %188 : vector<2x448xf32>
    %190 = math.exp %189 : vector<2x448xf32>
    %cst_68 = arith.constant 1.000000e+00 : f32
    %191 = vector.broadcast %cst_68 : f32 to vector<2x448xf32>
    %192 = arith.addf %191, %190 : vector<2x448xf32>
    %193 = arith.divf %191, %192 : vector<2x448xf32>
    %194 = vector.extract_strided_slice %188 {offsets = [0, 336], sizes = [2, 112], strides = [1, 1]} : vector<2x448xf32> to vector<2x112xf32>
    %195 = math.tanh %194 : vector<2x112xf32>
    %196 = vector.extract_strided_slice %193 {offsets = [0, 0], sizes = [2, 112], strides = [1, 1]} : vector<2x448xf32> to vector<2x112xf32>
    %197 = vector.extract_strided_slice %193 {offsets = [0, 112], sizes = [2, 112], strides = [1, 1]} : vector<2x448xf32> to vector<2x112xf32>
    %198 = vector.extract_strided_slice %193 {offsets = [0, 224], sizes = [2, 112], strides = [1, 1]} : vector<2x448xf32> to vector<2x112xf32>
    %199 = arith.mulf %197, %159 : vector<2x112xf32>
    %200 = arith.mulf %196, %195 : vector<2x112xf32>
    %201 = arith.addf %199, %200 : vector<2x112xf32>
    %202 = math.tanh %201 : vector<2x112xf32>
    %203 = arith.mulf %198, %202 : vector<2x112xf32>
    %c0_69 = arith.constant 0 : index
    %c0_70 = arith.constant 0 : index
    %204 = vector.load %arg4[%c0_69, %c0_70] : memref<112x448xf32, #tpu.memory_space<vmem>>, vector<112x448xf32>
    %cst_71 = arith.constant dense<0.000000e+00> : vector<2x448xf32>
    %205 = tpu.matmul %203, %204, %cst_71 {dimension_numbers = #tpu.dot_dimension_numbers<[1], [0], [0], [1], [0, 0, 1, 1], [], []>} : vector<2x112xf32>, vector<112x448xf32>, vector<2x448xf32> -> vector<2x448xf32>
    %206 = arith.addf %205, %186 : vector<2x448xf32>
    %c0_72 = arith.constant 0 : index
    %c0_73 = arith.constant 0 : index
    %207 = vector.load %arg6[%c0_72, %c0_73] : memref<1x448xf32, #tpu.memory_space<vmem>>, vector<1x448xf32>
    %208 = vector.broadcast %207 : vector<1x448xf32> to vector<2x448xf32>
    %209 = arith.addf %206, %208 : vector<2x448xf32>
    %210 = arith.negf %209 : vector<2x448xf32>
    %211 = math.exp %210 : vector<2x448xf32>
    %cst_74 = arith.constant 1.000000e+00 : f32
    %212 = vector.broadcast %cst_74 : f32 to vector<2x448xf32>
    %213 = arith.addf %212, %211 : vector<2x448xf32>
    %214 = arith.divf %212, %213 : vector<2x448xf32>
    %215 = vector.extract_strided_slice %209 {offsets = [0, 336], sizes = [2, 112], strides = [1, 1]} : vector<2x448xf32> to vector<2x112xf32>
    %216 = math.tanh %215 : vector<2x112xf32>
    %217 = vector.extract_strided_slice %214 {offsets = [0, 0], sizes = [2, 112], strides = [1, 1]} : vector<2x448xf32> to vector<2x112xf32>
    %218 = vector.extract_strided_slice %214 {offsets = [0, 112], sizes = [2, 112], strides = [1, 1]} : vector<2x448xf32> to vector<2x112xf32>
    %219 = vector.extract_strided_slice %214 {offsets = [0, 224], sizes = [2, 112], strides = [1, 1]} : vector<2x448xf32> to vector<2x112xf32>
    %220 = arith.mulf %218, %180 : vector<2x112xf32>
    %221 = arith.mulf %217, %216 : vector<2x112xf32>
    %222 = arith.addf %220, %221 : vector<2x112xf32>
    %223 = math.tanh %222 : vector<2x112xf32>
    %224 = arith.mulf %219, %223 : vector<2x112xf32>
    %c0_75 = arith.constant 0 : index
    %c0_76 = arith.constant 0 : index
    %225 = vector.load %arg2[%c0_75, %c0_76] : memref<112x448xf32, #tpu.memory_space<vmem>>, vector<112x448xf32>
    %cst_77 = arith.constant dense<0.000000e+00> : vector<2x448xf32>
    %226 = tpu.matmul %203, %225, %cst_77 {dimension_numbers = #tpu.dot_dimension_numbers<[1], [0], [0], [1], [0, 0, 1, 1], [], []>} : vector<2x112xf32>, vector<112x448xf32>, vector<2x448xf32> -> vector<2x448xf32>
    %c0_78 = arith.constant 0 : index
    %c0_79 = arith.constant 0 : index
    %227 = vector.load %arg5[%c0_78, %c0_79] : memref<112x448xf32, #tpu.memory_space<vmem>>, vector<112x448xf32>
    %cst_80 = arith.constant dense<0.000000e+00> : vector<2x448xf32>
    %228 = tpu.matmul %224, %227, %cst_80 {dimension_numbers = #tpu.dot_dimension_numbers<[1], [0], [0], [1], [0, 0, 1, 1], [], []>} : vector<2x112xf32>, vector<112x448xf32>, vector<2x448xf32> -> vector<2x448xf32>
    %229 = vector.extract_strided_slice %10 {offsets = [10, 0], sizes = [2, 448], strides = [1, 1]} : vector<16x448xf32> to vector<2x448xf32>
    %230 = arith.addf %229, %226 : vector<2x448xf32>
    %231 = arith.negf %230 : vector<2x448xf32>
    %232 = math.exp %231 : vector<2x448xf32>
    %cst_81 = arith.constant 1.000000e+00 : f32
    %233 = vector.broadcast %cst_81 : f32 to vector<2x448xf32>
    %234 = arith.addf %233, %232 : vector<2x448xf32>
    %235 = arith.divf %233, %234 : vector<2x448xf32>
    %236 = vector.extract_strided_slice %230 {offsets = [0, 336], sizes = [2, 112], strides = [1, 1]} : vector<2x448xf32> to vector<2x112xf32>
    %237 = math.tanh %236 : vector<2x112xf32>
    %238 = vector.extract_strided_slice %235 {offsets = [0, 0], sizes = [2, 112], strides = [1, 1]} : vector<2x448xf32> to vector<2x112xf32>
    %239 = vector.extract_strided_slice %235 {offsets = [0, 112], sizes = [2, 112], strides = [1, 1]} : vector<2x448xf32> to vector<2x112xf32>
    %240 = vector.extract_strided_slice %235 {offsets = [0, 224], sizes = [2, 112], strides = [1, 1]} : vector<2x448xf32> to vector<2x112xf32>
    %241 = arith.mulf %239, %201 : vector<2x112xf32>
    %242 = arith.mulf %238, %237 : vector<2x112xf32>
    %243 = arith.addf %241, %242 : vector<2x112xf32>
    %244 = math.tanh %243 : vector<2x112xf32>
    %245 = arith.mulf %240, %244 : vector<2x112xf32>
    %c0_82 = arith.constant 0 : index
    %c0_83 = arith.constant 0 : index
    %246 = vector.load %arg4[%c0_82, %c0_83] : memref<112x448xf32, #tpu.memory_space<vmem>>, vector<112x448xf32>
    %cst_84 = arith.constant dense<0.000000e+00> : vector<2x448xf32>
    %247 = tpu.matmul %245, %246, %cst_84 {dimension_numbers = #tpu.dot_dimension_numbers<[1], [0], [0], [1], [0, 0, 1, 1], [], []>} : vector<2x112xf32>, vector<112x448xf32>, vector<2x448xf32> -> vector<2x448xf32>
    %248 = arith.addf %247, %228 : vector<2x448xf32>
    %c0_85 = arith.constant 0 : index
    %c0_86 = arith.constant 0 : index
    %249 = vector.load %arg6[%c0_85, %c0_86] : memref<1x448xf32, #tpu.memory_space<vmem>>, vector<1x448xf32>
    %250 = vector.broadcast %249 : vector<1x448xf32> to vector<2x448xf32>
    %251 = arith.addf %248, %250 : vector<2x448xf32>
    %252 = arith.negf %251 : vector<2x448xf32>
    %253 = math.exp %252 : vector<2x448xf32>
    %cst_87 = arith.constant 1.000000e+00 : f32
    %254 = vector.broadcast %cst_87 : f32 to vector<2x448xf32>
    %255 = arith.addf %254, %253 : vector<2x448xf32>
    %256 = arith.divf %254, %255 : vector<2x448xf32>
    %257 = vector.extract_strided_slice %251 {offsets = [0, 336], sizes = [2, 112], strides = [1, 1]} : vector<2x448xf32> to vector<2x112xf32>
    %258 = math.tanh %257 : vector<2x112xf32>
    %259 = vector.extract_strided_slice %256 {offsets = [0, 0], sizes = [2, 112], strides = [1, 1]} : vector<2x448xf32> to vector<2x112xf32>
    %260 = vector.extract_strided_slice %256 {offsets = [0, 112], sizes = [2, 112], strides = [1, 1]} : vector<2x448xf32> to vector<2x112xf32>
    %261 = vector.extract_strided_slice %256 {offsets = [0, 224], sizes = [2, 112], strides = [1, 1]} : vector<2x448xf32> to vector<2x112xf32>
    %262 = arith.mulf %260, %222 : vector<2x112xf32>
    %263 = arith.mulf %259, %258 : vector<2x112xf32>
    %264 = arith.addf %262, %263 : vector<2x112xf32>
    %265 = math.tanh %264 : vector<2x112xf32>
    %266 = arith.mulf %261, %265 : vector<2x112xf32>
    %c0_88 = arith.constant 0 : index
    %c0_89 = arith.constant 0 : index
    %267 = vector.load %arg2[%c0_88, %c0_89] : memref<112x448xf32, #tpu.memory_space<vmem>>, vector<112x448xf32>
    %cst_90 = arith.constant dense<0.000000e+00> : vector<2x448xf32>
    %268 = tpu.matmul %245, %267, %cst_90 {dimension_numbers = #tpu.dot_dimension_numbers<[1], [0], [0], [1], [0, 0, 1, 1], [], []>} : vector<2x112xf32>, vector<112x448xf32>, vector<2x448xf32> -> vector<2x448xf32>
    %c0_91 = arith.constant 0 : index
    %c0_92 = arith.constant 0 : index
    %269 = vector.load %arg5[%c0_91, %c0_92] : memref<112x448xf32, #tpu.memory_space<vmem>>, vector<112x448xf32>
    %cst_93 = arith.constant dense<0.000000e+00> : vector<2x448xf32>
    %270 = tpu.matmul %266, %269, %cst_93 {dimension_numbers = #tpu.dot_dimension_numbers<[1], [0], [0], [1], [0, 0, 1, 1], [], []>} : vector<2x112xf32>, vector<112x448xf32>, vector<2x448xf32> -> vector<2x448xf32>
    %271 = vector.extract_strided_slice %10 {offsets = [12, 0], sizes = [2, 448], strides = [1, 1]} : vector<16x448xf32> to vector<2x448xf32>
    %272 = arith.addf %271, %268 : vector<2x448xf32>
    %273 = arith.negf %272 : vector<2x448xf32>
    %274 = math.exp %273 : vector<2x448xf32>
    %cst_94 = arith.constant 1.000000e+00 : f32
    %275 = vector.broadcast %cst_94 : f32 to vector<2x448xf32>
    %276 = arith.addf %275, %274 : vector<2x448xf32>
    %277 = arith.divf %275, %276 : vector<2x448xf32>
    %278 = vector.extract_strided_slice %272 {offsets = [0, 336], sizes = [2, 112], strides = [1, 1]} : vector<2x448xf32> to vector<2x112xf32>
    %279 = math.tanh %278 : vector<2x112xf32>
    %280 = vector.extract_strided_slice %277 {offsets = [0, 0], sizes = [2, 112], strides = [1, 1]} : vector<2x448xf32> to vector<2x112xf32>
    %281 = vector.extract_strided_slice %277 {offsets = [0, 112], sizes = [2, 112], strides = [1, 1]} : vector<2x448xf32> to vector<2x112xf32>
    %282 = vector.extract_strided_slice %277 {offsets = [0, 224], sizes = [2, 112], strides = [1, 1]} : vector<2x448xf32> to vector<2x112xf32>
    %283 = arith.mulf %281, %243 : vector<2x112xf32>
    %284 = arith.mulf %280, %279 : vector<2x112xf32>
    %285 = arith.addf %283, %284 : vector<2x112xf32>
    %286 = math.tanh %285 : vector<2x112xf32>
    %287 = arith.mulf %282, %286 : vector<2x112xf32>
    %c0_95 = arith.constant 0 : index
    %c0_96 = arith.constant 0 : index
    %288 = vector.load %arg4[%c0_95, %c0_96] : memref<112x448xf32, #tpu.memory_space<vmem>>, vector<112x448xf32>
    %cst_97 = arith.constant dense<0.000000e+00> : vector<2x448xf32>
    %289 = tpu.matmul %287, %288, %cst_97 {dimension_numbers = #tpu.dot_dimension_numbers<[1], [0], [0], [1], [0, 0, 1, 1], [], []>} : vector<2x112xf32>, vector<112x448xf32>, vector<2x448xf32> -> vector<2x448xf32>
    %290 = arith.addf %289, %270 : vector<2x448xf32>
    %c0_98 = arith.constant 0 : index
    %c0_99 = arith.constant 0 : index
    %291 = vector.load %arg6[%c0_98, %c0_99] : memref<1x448xf32, #tpu.memory_space<vmem>>, vector<1x448xf32>
    %292 = vector.broadcast %291 : vector<1x448xf32> to vector<2x448xf32>
    %293 = arith.addf %290, %292 : vector<2x448xf32>
    %294 = arith.negf %293 : vector<2x448xf32>
    %295 = math.exp %294 : vector<2x448xf32>
    %cst_100 = arith.constant 1.000000e+00 : f32
    %296 = vector.broadcast %cst_100 : f32 to vector<2x448xf32>
    %297 = arith.addf %296, %295 : vector<2x448xf32>
    %298 = arith.divf %296, %297 : vector<2x448xf32>
    %299 = vector.extract_strided_slice %293 {offsets = [0, 336], sizes = [2, 112], strides = [1, 1]} : vector<2x448xf32> to vector<2x112xf32>
    %300 = math.tanh %299 : vector<2x112xf32>
    %301 = vector.extract_strided_slice %298 {offsets = [0, 0], sizes = [2, 112], strides = [1, 1]} : vector<2x448xf32> to vector<2x112xf32>
    %302 = vector.extract_strided_slice %298 {offsets = [0, 112], sizes = [2, 112], strides = [1, 1]} : vector<2x448xf32> to vector<2x112xf32>
    %303 = vector.extract_strided_slice %298 {offsets = [0, 224], sizes = [2, 112], strides = [1, 1]} : vector<2x448xf32> to vector<2x112xf32>
    %304 = arith.mulf %302, %264 : vector<2x112xf32>
    %305 = arith.mulf %301, %300 : vector<2x112xf32>
    %306 = arith.addf %304, %305 : vector<2x112xf32>
    %307 = math.tanh %306 : vector<2x112xf32>
    %308 = arith.mulf %303, %307 : vector<2x112xf32>
    %c0_101 = arith.constant 0 : index
    %c0_102 = arith.constant 0 : index
    %309 = vector.load %arg2[%c0_101, %c0_102] : memref<112x448xf32, #tpu.memory_space<vmem>>, vector<112x448xf32>
    %cst_103 = arith.constant dense<0.000000e+00> : vector<2x448xf32>
    %310 = tpu.matmul %287, %309, %cst_103 {dimension_numbers = #tpu.dot_dimension_numbers<[1], [0], [0], [1], [0, 0, 1, 1], [], []>} : vector<2x112xf32>, vector<112x448xf32>, vector<2x448xf32> -> vector<2x448xf32>
    %c0_104 = arith.constant 0 : index
    %c0_105 = arith.constant 0 : index
    %311 = vector.load %arg5[%c0_104, %c0_105] : memref<112x448xf32, #tpu.memory_space<vmem>>, vector<112x448xf32>
    %cst_106 = arith.constant dense<0.000000e+00> : vector<2x448xf32>
    %312 = tpu.matmul %308, %311, %cst_106 {dimension_numbers = #tpu.dot_dimension_numbers<[1], [0], [0], [1], [0, 0, 1, 1], [], []>} : vector<2x112xf32>, vector<112x448xf32>, vector<2x448xf32> -> vector<2x448xf32>
    %313 = vector.extract_strided_slice %10 {offsets = [14, 0], sizes = [2, 448], strides = [1, 1]} : vector<16x448xf32> to vector<2x448xf32>
    %314 = arith.addf %313, %310 : vector<2x448xf32>
    %315 = arith.negf %314 : vector<2x448xf32>
    %316 = math.exp %315 : vector<2x448xf32>
    %cst_107 = arith.constant 1.000000e+00 : f32
    %317 = vector.broadcast %cst_107 : f32 to vector<2x448xf32>
    %318 = arith.addf %317, %316 : vector<2x448xf32>
    %319 = arith.divf %317, %318 : vector<2x448xf32>
    %320 = vector.extract_strided_slice %314 {offsets = [0, 336], sizes = [2, 112], strides = [1, 1]} : vector<2x448xf32> to vector<2x112xf32>
    %321 = math.tanh %320 : vector<2x112xf32>
    %322 = vector.extract_strided_slice %319 {offsets = [0, 0], sizes = [2, 112], strides = [1, 1]} : vector<2x448xf32> to vector<2x112xf32>
    %323 = vector.extract_strided_slice %319 {offsets = [0, 112], sizes = [2, 112], strides = [1, 1]} : vector<2x448xf32> to vector<2x112xf32>
    %324 = vector.extract_strided_slice %319 {offsets = [0, 224], sizes = [2, 112], strides = [1, 1]} : vector<2x448xf32> to vector<2x112xf32>
    %325 = arith.mulf %323, %285 : vector<2x112xf32>
    %326 = arith.mulf %322, %321 : vector<2x112xf32>
    %327 = arith.addf %325, %326 : vector<2x112xf32>
    %328 = math.tanh %327 : vector<2x112xf32>
    %329 = arith.mulf %324, %328 : vector<2x112xf32>
    %c0_108 = arith.constant 0 : index
    %c0_109 = arith.constant 0 : index
    %330 = vector.load %arg4[%c0_108, %c0_109] : memref<112x448xf32, #tpu.memory_space<vmem>>, vector<112x448xf32>
    %cst_110 = arith.constant dense<0.000000e+00> : vector<2x448xf32>
    %331 = tpu.matmul %329, %330, %cst_110 {dimension_numbers = #tpu.dot_dimension_numbers<[1], [0], [0], [1], [0, 0, 1, 1], [], []>} : vector<2x112xf32>, vector<112x448xf32>, vector<2x448xf32> -> vector<2x448xf32>
    %332 = arith.addf %331, %312 : vector<2x448xf32>
    %c0_111 = arith.constant 0 : index
    %c0_112 = arith.constant 0 : index
    %333 = vector.load %arg6[%c0_111, %c0_112] : memref<1x448xf32, #tpu.memory_space<vmem>>, vector<1x448xf32>
    %334 = vector.broadcast %333 : vector<1x448xf32> to vector<2x448xf32>
    %335 = arith.addf %332, %334 : vector<2x448xf32>
    %336 = arith.negf %335 : vector<2x448xf32>
    %337 = math.exp %336 : vector<2x448xf32>
    %cst_113 = arith.constant 1.000000e+00 : f32
    %338 = vector.broadcast %cst_113 : f32 to vector<2x448xf32>
    %339 = arith.addf %338, %337 : vector<2x448xf32>
    %340 = arith.divf %338, %339 : vector<2x448xf32>
    %341 = vector.extract_strided_slice %335 {offsets = [0, 336], sizes = [2, 112], strides = [1, 1]} : vector<2x448xf32> to vector<2x112xf32>
    %342 = math.tanh %341 : vector<2x112xf32>
    %343 = vector.extract_strided_slice %340 {offsets = [0, 0], sizes = [2, 112], strides = [1, 1]} : vector<2x448xf32> to vector<2x112xf32>
    %344 = vector.extract_strided_slice %340 {offsets = [0, 112], sizes = [2, 112], strides = [1, 1]} : vector<2x448xf32> to vector<2x112xf32>
    %345 = vector.extract_strided_slice %340 {offsets = [0, 224], sizes = [2, 112], strides = [1, 1]} : vector<2x448xf32> to vector<2x112xf32>
    %346 = arith.mulf %344, %306 : vector<2x112xf32>
    %347 = arith.mulf %343, %342 : vector<2x112xf32>
    %348 = arith.addf %346, %347 : vector<2x112xf32>
    %349 = math.tanh %348 : vector<2x112xf32>
    %350 = arith.mulf %345, %349 : vector<2x112xf32>
    %c0_114 = arith.constant 0 : index
    %c0_115 = arith.constant 0 : index
    %351 = vector.load %arg7[%c0_114, %c0_115] : memref<112x56xf32, #tpu.memory_space<vmem>>, vector<112x56xf32>
    %cst_116 = arith.constant dense<0.000000e+00> : vector<2x56xf32>
    %352 = tpu.matmul %350, %351, %cst_116 {dimension_numbers = #tpu.dot_dimension_numbers<[1], [0], [0], [1], [0, 0, 1, 1], [], []>} : vector<2x112xf32>, vector<112x56xf32>, vector<2x56xf32> -> vector<2x56xf32>
    %c0_117 = arith.constant 0 : index
    %c0_118 = arith.constant 0 : index
    %353 = vector.load %arg8[%c0_117, %c0_118] : memref<1x56xf32, #tpu.memory_space<vmem>>, vector<1x56xf32>
    %354 = vector.broadcast %353 : vector<1x56xf32> to vector<2x56xf32>
    %355 = arith.mulf %352, %354 : vector<2x56xf32>
    %c0_119 = arith.constant 0 : index
    %c0_120 = arith.constant 0 : index
    %356 = vector.load %arg9[%c0_119, %c0_120] : memref<1x56xf32, #tpu.memory_space<vmem>>, vector<1x56xf32>
    %357 = vector.broadcast %356 : vector<1x56xf32> to vector<2x56xf32>
    %358 = arith.addf %355, %357 : vector<2x56xf32>
    %cst_121 = arith.constant 0.000000e+00 : f32
    %359 = vector.broadcast %cst_121 : f32 to vector<2x56xf32>
    %360 = arith.cmpf oge, %358, %359 : vector<2x56xf32>
    %cst_122 = arith.constant 2.000000e-01 : f32
    %361 = vector.broadcast %cst_122 : f32 to vector<2x56xf32>
    %362 = arith.mulf %361, %358 : vector<2x56xf32>
    %363 = arith.select %360, %358, %362 : vector<2x56xi1>, vector<2x56xf32>
    %c0_123 = arith.constant 0 : index
    %c0_124 = arith.constant 0 : index
    %364 = vector.load %arg10[%c0_123, %c0_124] : memref<56x16xf32, #tpu.memory_space<vmem>>, vector<56x16xf32>
    %cst_125 = arith.constant dense<0.000000e+00> : vector<2x16xf32>
    %365 = tpu.matmul %363, %364, %cst_125 {dimension_numbers = #tpu.dot_dimension_numbers<[1], [0], [0], [1], [0, 0, 1, 1], [], []>} : vector<2x56xf32>, vector<56x16xf32>, vector<2x16xf32> -> vector<2x16xf32>
    %c0_126 = arith.constant 0 : index
    %c0_127 = arith.constant 0 : index
    %366 = vector.load %arg11[%c0_126, %c0_127] : memref<1x16xf32, #tpu.memory_space<vmem>>, vector<1x16xf32>
    %367 = vector.broadcast %366 : vector<1x16xf32> to vector<2x16xf32>
    %368 = arith.mulf %365, %367 : vector<2x16xf32>
    %c0_128 = arith.constant 0 : index
    %c0_129 = arith.constant 0 : index
    %369 = vector.load %arg12[%c0_128, %c0_129] : memref<1x16xf32, #tpu.memory_space<vmem>>, vector<1x16xf32>
    %370 = vector.broadcast %369 : vector<1x16xf32> to vector<2x16xf32>
    %371 = arith.addf %368, %370 : vector<2x16xf32>
    %c0_130 = arith.constant 0 : index
    %c0_131 = arith.constant 0 : index
    %372 = vector.load %arg13[%c0_130, %c0_131] : memref<2x16xf32, #tpu.memory_space<vmem>>, vector<2x16xf32>
    tpu.vector_store %arg13[%c0_130, %c0_131], %371 {strides = array<i32>} : memref<2x16xf32, #tpu.memory_space<vmem>>, vector<2x16xf32>,
    return
  }
}

</mosaic_0001>

<llo_original>
// kernel: tpu_custom_call.1
$region0: #{tpu_custom_call.1}
  #allocation0 [shape = 'u32[]', space=smem, size = 0x4, offset = 0x4, fixed_abs, tag = 'smem constant byte address 0x4 - core index']
  #allocation1 [shape = 'u32[144,128]{1,0:T(1,128)}', space=vmem, size = 0x12000, scoped, tag = 'internal scratch']
  %s0 = inlined_call_operand.vmem [shape: f32[16,4], index: 0, kind: input, shape index: {}]
  %s1 = inlined_call_operand.vmem [shape: f32[4,448], index: 1, kind: input, shape index: {}]
  %s2 = inlined_call_operand.hbm [shape: f32[112,448], index: 2, kind: input, shape index: {}]
  %s3 = inlined_call_operand.vmem [shape: f32[1,448], index: 3, kind: input, shape index: {}]
  %s4 = inlined_call_operand.hbm [shape: f32[112,448], index: 4, kind: input, shape index: {}]
  %s5 = inlined_call_operand.hbm [shape: f32[112,448], index: 5, kind: input, shape index: {}]
  %s6 = inlined_call_operand.vmem [shape: f32[1,448], index: 6, kind: input, shape index: {}]
  %s7 = inlined_call_operand.vmem [shape: f32[112,56], index: 7, kind: input, shape index: {}]
  %s8 = inlined_call_operand.vmem [shape: f32[1,56], index: 8, kind: input, shape index: {}]
  %s9 = inlined_call_operand.vmem [shape: f32[1,56], index: 9, kind: input, shape index: {}]
  %s10 = inlined_call_operand.vmem [shape: f32[56,16], index: 10, kind: input, shape index: {}]
  %s11 = inlined_call_operand.vmem [shape: f32[1,16], index: 11, kind: input, shape index: {}]
  %s12 = inlined_call_operand.vmem [shape: f32[1,16], index: 12, kind: input, shape index: {}]
  %s13 = inlined_call_operand.hbm [shape: f32[2,16], index: 13, kind: output, shape index: {}]
  %s14 = sld [smem:[#allocation0]]
  $region74: #{tpu_custom_call.1} parent=0
    _
  %s16 = ssub.s32 1, %s14
  %s17 = scalar_select 0, %s16, %s14
  $region1: #{tpu_custom_call.1} parent=0
    #allocation2 [shape = 'u8[229376]{0}', space=vmem, size = 0x38000, scoped, tag = 'input window, operand 2, single buffered']
    #allocation3 [shape = 's32[1]{0}', space=sflag, size = 0x4, scoped, tag = 'scoped memory for tpu_custom_call.1']
    #allocation4 [shape = 's32[1]{0}', space=sflag, size = 0x4, scoped, tag = 'scoped memory for tpu_custom_call.1']
    #allocation5 [shape = 'u8[229376]{0}', space=vmem, size = 0x38000, scoped, tag = 'input window, operand 4, single buffered']
    #allocation6 [shape = 's32[1]{0}', space=sflag, size = 0x4, scoped, tag = 'scoped memory for tpu_custom_call.1']
    #allocation7 [shape = 'u8[229376]{0}', space=vmem, size = 0x38000, scoped, tag = 'input window, operand 5, single buffered']
    #allocation8 [shape = 'u8[1024]{0}', space=vmem, size = 0x400, scoped, tag = 'output window, operand 0, single buffered']
    %18 = vsyncpa [#allocation3], 0
    %19 = vsyncpa [#allocation6], 0
    %20 = vsyncpa [#allocation4], 0
    // Predicated region
    $region2: #{tpu_custom_call.1} parent=1 // pred_check
      _
    $region3: #{tpu_custom_call.1} parent=1 // pred_check_branch
      %22 = sbr.rel (0) target = $region5
    $region4: #{tpu_custom_call.1} parent=1 // pred_region
      _
    $region5: #{tpu_custom_call.1} parent=1 // pred_fallthru
      _
    // Predicated region
    $region6: #{tpu_custom_call.1} parent=1 // pred_check
      _
    $region7: #{tpu_custom_call.1} parent=1 // pred_check_branch
      %24 = sbr.rel (0) target = $region9
    $region8: #{tpu_custom_call.1} parent=1 // pred_region
      _
    $region9: #{tpu_custom_call.1} parent=1 // pred_fallthru
      _
    // Predicated region
    $region10: #{tpu_custom_call.1} parent=1 // pred_check
      _
    $region11: #{tpu_custom_call.1} parent=1 // pred_check_branch
      %26 = sbr.rel (0) target = $region13
    $region12: #{tpu_custom_call.1} parent=1 // pred_region
      %s28 = ssub.s32 7168, 7168
      %29 = vsyncadd [#allocation3], %s28
      %s30 = sshll.u32 [#allocation2], 4
      %s31 = int_to_ptr.vmem [resolvable:$true] %s30
      %36 = dma.hbm_to_vmem [thread:$0]  %s2, 7168, %s31, [#allocation3], 512, 512, 32
    $region13: #{tpu_custom_call.1} parent=1 // pred_fallthru
      _
    // Predicated region
    $region14: #{tpu_custom_call.1} parent=1 // pred_check
      _
    $region15: #{tpu_custom_call.1} parent=1 // pred_check_branch
      %38 = sbr.rel (0) target = $region17
    $region16: #{tpu_custom_call.1} parent=1 // pred_region
      _
    $region17: #{tpu_custom_call.1} parent=1 // pred_fallthru
      _
    // Predicated region
    $region18: #{tpu_custom_call.1} parent=1 // pred_check
      _
    $region19: #{tpu_custom_call.1} parent=1 // pred_check_branch
      %40 = sbr.rel (0) target = $region21
    $region20: #{tpu_custom_call.1} parent=1 // pred_region
      %s42 = ssub.s32 7168, 7168
      %43 = vsyncadd [#allocation6], %s42
      %s44 = sshll.u32 [#allocation5], 4
      %s45 = int_to_ptr.vmem [resolvable:$true] %s44
      %50 = dma.hbm_to_vmem [thread:$0]  %s4, 7168, %s45, [#allocation6], 512, 512, 32
    $region21: #{tpu_custom_call.1} parent=1 // pred_fallthru
      _
    // Predicated region
    $region22: #{tpu_custom_call.1} parent=1 // pred_check
      _
    $region23: #{tpu_custom_call.1} parent=1 // pred_check_branch
      %52 = sbr.rel (0) target = $region25
    $region24: #{tpu_custom_call.1} parent=1 // pred_region
      %s54 = ssub.s32 7168, 7168
      %55 = vsyncadd [#allocation6], %s54
      %s56 = sshll.u32 [#allocation7], 4
      %s57 = int_to_ptr.vmem [resolvable:$true] %s56
      %62 = dma.hbm_to_vmem [thread:$0]  %s5, 7168, %s57, [#allocation6], 512, 512, 32
    $region25: #{tpu_custom_call.1} parent=1 // pred_fallthru
      _
    // Predicated region
    $region26: #{tpu_custom_call.1} parent=1 // pred_check
      _
    $region27: #{tpu_custom_call.1} parent=1 // pred_check_branch
      %64 = sbr.rel (0) target = $region29
    $region28: #{tpu_custom_call.1} parent=1 // pred_region
      _
    $region29: #{tpu_custom_call.1} parent=1 // pred_fallthru
      _
    // Predicated region
    $region30: #{tpu_custom_call.1} parent=1 // pred_check
      _
    $region31: #{tpu_custom_call.1} parent=1 // pred_check_branch
      %66 = sbr.rel (0) target = $region33
    $region32: #{tpu_custom_call.1} parent=1 // pred_region
      _
    $region33: #{tpu_custom_call.1} parent=1 // pred_fallthru
      _
    // Predicated region
    $region34: #{tpu_custom_call.1} parent=1 // pred_check
      _
    $region35: #{tpu_custom_call.1} parent=1 // pred_check_branch
      %68 = sbr.rel (0) target = $region37
    $region36: #{tpu_custom_call.1} parent=1 // pred_region
      _
    $region37: #{tpu_custom_call.1} parent=1 // pred_fallthru
      _
    // Predicated region
    $region38: #{tpu_custom_call.1} parent=1 // pred_check
      _
    $region39: #{tpu_custom_call.1} parent=1 // pred_check_branch
      %70 = sbr.rel (0) target = $region41
    $region40: #{tpu_custom_call.1} parent=1 // pred_region
      _
    $region41: #{tpu_custom_call.1} parent=1 // pred_fallthru
      _
    // Predicated region
    $region42: #{tpu_custom_call.1} parent=1 // pred_check
      _
    $region43: #{tpu_custom_call.1} parent=1 // pred_check_branch
      %72 = sbr.rel (0) target = $region45
    $region44: #{tpu_custom_call.1} parent=1 // pred_region
      _
    $region45: #{tpu_custom_call.1} parent=1 // pred_fallthru
      _
    // Predicated region
    $region46: #{tpu_custom_call.1} parent=1 // pred_check
      _
    $region47: #{tpu_custom_call.1} parent=1 // pred_check_branch
      %74 = sbr.rel (0) target = $region49
    $region48: #{tpu_custom_call.1} parent=1 // pred_region
      _
    $region49: #{tpu_custom_call.1} parent=1 // pred_fallthru
      _
    // Predicated region
    $region50: #{tpu_custom_call.1} parent=1 // pred_check
      _
    $region51: #{tpu_custom_call.1} parent=1 // pred_check_branch
      %76 = sbr.rel (0) target = $region53
    $region52: #{tpu_custom_call.1} parent=1 // pred_region
      _
    $region53: #{tpu_custom_call.1} parent=1 // pred_fallthru
      _
    // Predicated region
    $region54: #{tpu_custom_call.1} parent=1 // pred_check
      _
    $region55: #{tpu_custom_call.1} parent=1 // pred_check_branch
      %78 = sbr.rel (0) target = $region57
    $region56: #{tpu_custom_call.1} parent=1 // pred_region
      %79 = dma.done [#allocation3], 7168
    $region57: #{tpu_custom_call.1} parent=1 // pred_fallthru
      _
    // Predicated region
    $region58: #{tpu_custom_call.1} parent=1 // pred_check
      _
    $region59: #{tpu_custom_call.1} parent=1 // pred_check_branch
      %81 = sbr.rel (0) target = $region61
    $region60: #{tpu_custom_call.1} parent=1 // pred_region
      %82 = dma.done [#allocation6], 7168
    $region61: #{tpu_custom_call.1} parent=1 // pred_fallthru
      _
    // Predicated region
    $region62: #{tpu_custom_call.1} parent=1 // pred_check
      _
    $region63: #{tpu_custom_call.1} parent=1 // pred_check_branch
      %84 = sbr.rel (0) target = $region65
    $region64: #{tpu_custom_call.1} parent=1 // pred_region
      %85 = dma.done [#allocation6], 7168
    $region65: #{tpu_custom_call.1} parent=1 // pred_fallthru
      _
    %v86 = vld [vmem:[%s0] sm:$0xff]
    %v87 = vld [vmem:[%s0 + $0x8] sm:$0xff]
    %vm88 = vcmp.ne.f32.partialorder %v86, -1.0
    %vm89 = vcmp.ne.f32.partialorder %v87, -1.0
    %v90 = vsel %vm88, 1, 0
    %v91 = vsel %vm89, 1, 0
    %v92 = vcvt.s32.f32 %v90
    %v93 = vcvt.s32.f32 %v91
    %v94 = vmul.f32 %v86, %v92
    %v95 = vmul.f32 %v87, %v93
    %v96 = vld [vmem:[%s1] sm:$0xff]
    %v97 = vld [vmem:[%s1 + $0x8] sm:$0xff]
    %v98 = vld [vmem:[%s3] sm:$0xf]
    %v100 = vlaneseq
    %v101 = vshrl.u32 %v100, 7
    %v102 = vsub.s32 0, %v101
    %v103 = vrot.slane %v98, %v102
    %v104 = vlaneseq
    %v105 = vshrl.u32 %v104, 7
    %v106 = vsub.s32 1, %v105
    %v107 = vrot.slane %v98, %v106
    %v108 = vlaneseq
    %v109 = vshrl.u32 %v108, 7
    %v110 = vsub.s32 2, %v109
    %v111 = vrot.slane %v98, %v110
    %v112 = vlaneseq
    %v113 = vshrl.u32 %v112, 7
    %v114 = vsub.s32 3, %v113
    %v115 = vrot.slane %v98, %v114
    %v122 = vcombine.high %v96, %v96
    %v123 = vcombine.high %v97, %v97
    %vm124 = vcmask 31744
    %v126 = vsel %vm124, %v94, 0
    %v129 = vsel %vm124, %v95, 0
    %vm131 = vcmask 1043456
    %v132 = vsel %vm131, %v96, 0
    %v134 = vsel %vm131, %v122, 0
    %v136 = vsel %vm131, %v97, 0
    %v138 = vsel %vm131, %v123, 0
    %140 = vmatprep.subr.mxu0 %v134
    %141 = vmatpush1.msra.mxu0 %v132
    %142 = vmatprep.subr.mxu0 0.0
    %143 = vmatpush1.msra.mxu0 0.0
    %144 = vmatprep.subr.mxu0 0.0
    %145 = vmatpush1.msra.mxu0 0.0
    %146 = vmatprep.subr.mxu0 0.0
    %147 = vmatpush1.msra.mxu0 0.0
    %148 = vmatprep.subr.mxu0 0.0
    %149 = vmatpush1.msra.mxu0 0.0
    %150 = vmatprep.subr.mxu0 0.0
    %151 = vmatpush1.msra.mxu0 0.0
    %152 = vmatprep.subr.mxu0 0.0
    %153 = vmatpush1.msra.mxu0 0.0
    %154 = vmatprep.subr.mxu0 0.0
    %155 = vmatpush1.msra.mxu0 0.0
    %156 = vmatprep.subr.mxu0 0.0
    %157 = vmatpush1.msra.mxu0 0.0
    %158 = vmatprep.subr.mxu0 0.0
    %159 = vmatpush1.msra.mxu0 0.0
    %160 = vmatprep.subr.mxu0 0.0
    %161 = vmatpush1.msra.mxu0 0.0
    %162 = vmatprep.subr.mxu0 0.0
    %163 = vmatpush1.msra.mxu0 0.0
    %164 = vmatprep.subr.mxu0 0.0
    %165 = vmatpush1.msra.mxu0 0.0
    %166 = vmatprep.subr.mxu0 0.0
    %167 = vmatpush1.msra.mxu0 0.0
    %168 = vmatprep.subr.mxu0 0.0
    %169 = vmatpush1.msra.mxu0 0.0
    %170 = vmatprep.subr.mxu0 0.0
    %171 = vmatpush1.msra.mxu0 0.0
    %172 = vmatprep.subr.mxu0 0.0
    %173 = vmatpush1.msra.mxu0 0.0
    %174 = vmatprep.subr.mxu0 0.0
    %175 = vmatpush1.msra.mxu0 0.0
    %176 = vmatprep.subr.mxu0 0.0
    %177 = vmatpush1.msra.mxu0 0.0
    %178 = vmatprep.subr.mxu0 0.0
    %179 = vmatpush1.msra.mxu0 0.0
    %180 = vmatprep.subr.mxu0 0.0
    %181 = vmatpush1.msra.mxu0 0.0
    %182 = vmatprep.subr.mxu0 0.0
    %183 = vmatpush1.msra.mxu0 0.0
    %184 = vmatprep.subr.mxu0 0.0
    %185 = vmatpush1.msra.mxu0 0.0
    %186 = vmatprep.subr.mxu0 0.0
    %187 = vmatpush1.msra.mxu0 0.0
    %188 = vmatprep.subr.mxu0 0.0
    %189 = vmatpush1.msra.mxu0 0.0
    %190 = vmatprep.subr.mxu0 0.0
    %191 = vmatpush1.msra.mxu0 0.0
    %192 = vmatprep.subr.mxu0 0.0
    %193 = vmatpush1.msra.mxu0 0.0
    %194 = vmatprep.subr.mxu0 0.0
    %195 = vmatpush1.msra.mxu0 0.0
    %196 = vmatprep.subr.mxu0 0.0
    %197 = vmatpush1.msra.mxu0 0.0
    %198 = vmatprep.subr.mxu0 0.0
    %199 = vmatpush1.msra.mxu0 0.0
    %200 = vmatprep.subr.mxu0 0.0
    %201 = vmatpush1.msra.mxu0 0.0
    %202 = vmatprep.subr.mxu0 0.0
    %203 = vmatpush1.msra.mxu0 0.0
    %204 = vmatprep.mubr.f32.mxu0 0.0
    %205 = vmatmul.mubr.f32.gmra.mrb[0].mxu0 %v126
    %v206 = vpop.f32.mrb[0].mxu0
    %v207 = vadd.f32 %v103, %v206
    %v208 = vpop.f32.mrb[0].mxu0
    %v209 = vadd.f32 %v107, %v208
    %210 = vmatprep.mubr.f32.mxu0 0.0
    %211 = vmatmul.mubr.f32.gmra.mrb[0].mxu0 %v129
    %v212 = vpop.f32.mrb[0].mxu0
    %v213 = vadd.f32 %v103, %v212
    %v214 = vpop.f32.mrb[0].mxu0
    %v215 = vadd.f32 %v107, %v214
    %216 = vdwg.mxu0
    %217 = vmatprep.subr.mxu0 %v138
    %218 = vmatpush1.msra.mxu0 %v136
    %219 = vmatprep.subr.mxu0 0.0
    %220 = vmatpush1.msra.mxu0 0.0
    %221 = vmatprep.subr.mxu0 0.0
    %222 = vmatpush1.msra.mxu0 0.0
    %223 = vmatprep.subr.mxu0 0.0
    %224 = vmatpush1.msra.mxu0 0.0
    %225 = vmatprep.subr.mxu0 0.0
    %226 = vmatpush1.msra.mxu0 0.0
    %227 = vmatprep.subr.mxu0 0.0
    %228 = vmatpush1.msra.mxu0 0.0
    %229 = vmatprep.subr.mxu0 0.0
    %230 = vmatpush1.msra.mxu0 0.0
    %231 = vmatprep.subr.mxu0 0.0
    %232 = vmatpush1.msra.mxu0 0.0
    %233 = vmatprep.subr.mxu0 0.0
    %234 = vmatpush1.msra.mxu0 0.0
    %235 = vmatprep.subr.mxu0 0.0
    %236 = vmatpush1.msra.mxu0 0.0
    %237 = vmatprep.subr.mxu0 0.0
    %238 = vmatpush1.msra.mxu0 0.0
    %239 = vmatprep.subr.mxu0 0.0
    %240 = vmatpush1.msra.mxu0 0.0
    %241 = vmatprep.subr.mxu0 0.0
    %242 = vmatpush1.msra.mxu0 0.0
    %243 = vmatprep.subr.mxu0 0.0
    %244 = vmatpush1.msra.mxu0 0.0
    %245 = vmatprep.subr.mxu0 0.0
    %246 = vmatpush1.msra.mxu0 0.0
    %247 = vmatprep.subr.mxu0 0.0
    %248 = vmatpush1.msra.mxu0 0.0
    %249 = vmatprep.subr.mxu0 0.0
    %250 = vmatpush1.msra.mxu0 0.0
    %251 = vmatprep.subr.mxu0 0.0
    %252 = vmatpush1.msra.mxu0 0.0
    %253 = vmatprep.subr.mxu0 0.0
    %254 = vmatpush1.msra.mxu0 0.0
    %255 = vmatprep.subr.mxu0 0.0
    %256 = vmatpush1.msra.mxu0 0.0
    %257 = vmatprep.subr.mxu0 0.0
    %258 = vmatpush1.msra.mxu0 0.0
    %259 = vmatprep.subr.mxu0 0.0
    %260 = vmatpush1.msra.mxu0 0.0
    %261 = vmatprep.subr.mxu0 0.0
    %262 = vmatpush1.msra.mxu0 0.0
    %263 = vmatprep.subr.mxu0 0.0
    %264 = vmatpush1.msra.mxu0 0.0
    %265 = vmatprep.subr.mxu0 0.0
    %266 = vmatpush1.msra.mxu0 0.0
    %267 = vmatprep.subr.mxu0 0.0
    %268 = vmatpush1.msra.mxu0 0.0
    %269 = vmatprep.subr.mxu0 0.0
    %270 = vmatpush1.msra.mxu0 0.0
    %271 = vmatprep.subr.mxu0 0.0
    %272 = vmatpush1.msra.mxu0 0.0
    %273 = vmatprep.subr.mxu0 0.0
    %274 = vmatpush1.msra.mxu0 0.0
    %275 = vmatprep.subr.mxu0 0.0
    %276 = vmatpush1.msra.mxu0 0.0
    %277 = vmatprep.subr.mxu0 0.0
    %278 = vmatpush1.msra.mxu0 0.0
    %279 = vmatprep.subr.mxu0 0.0
    %280 = vmatpush1.msra.mxu0 0.0
    %281 = vmatprep.mubr.f32.mxu0 0.0
    %282 = vmatmul.mubr.f32.gmra.mrb[0].mxu0 %v126
    %v283 = vpop.f32.mrb[0].mxu0
    %v284 = vadd.f32 %v111, %v283
    %v285 = vpop.f32.mrb[0].mxu0
    %v286 = vadd.f32 %v115, %v285
    %287 = vmatprep.mubr.f32.mxu0 0.0
    %288 = vmatmul.mubr.f32.gmra.mrb[0].mxu0 %v129
    %v289 = vpop.f32.mrb[0].mxu0
    %v290 = vadd.f32 %v111, %v289
    %v291 = vpop.f32.mrb[0].mxu0
    %v292 = vadd.f32 %v115, %v291
    %293 = vdwg.mxu0
    %v294 = vld [vmem:[#allocation2] sm:$0xff]
    %v295 = vld [vmem:[#allocation2 + $0x8] sm:$0xff]
    %v296 = vld [vmem:[#allocation2 + $0x10] sm:$0xff]
    %v297 = vld [vmem:[#allocation2 + $0x18] sm:$0xff]
    %v298 = vld [vmem:[#allocation2 + $0x20] sm:$0xff]
    %v299 = vld [vmem:[#allocation2 + $0x28] sm:$0xff]
    %v300 = vld [vmem:[#allocation2 + $0x30] sm:$0xff]
    %v301 = vld [vmem:[#allocation2 + $0x38] sm:$0xff]
    %v302 = vld [vmem:[#allocation2 + $0x40] sm:$0xff]
    %v303 = vld [vmem:[#allocation2 + $0x48] sm:$0xff]
    %v304 = vld [vmem:[#allocation2 + $0x50] sm:$0xff]
    %v305 = vld [vmem:[#allocation2 + $0x58] sm:$0xff]
    %v306 = vld [vmem:[#allocation2 + $0x60] sm:$0xff]
    %v307 = vld [vmem:[#allocation2 + $0x68] sm:$0xff]
    %v308 = vld [vmem:[#allocation2 + $0x70] sm:$0xff]
    %v309 = vld [vmem:[#allocation2 + $0x78] sm:$0xff]
    %v310 = vld [vmem:[#allocation2 + $0x80] sm:$0xff]
    %v311 = vld [vmem:[#allocation2 + $0x88] sm:$0xff]
    %v312 = vld [vmem:[#allocation2 + $0x90] sm:$0xff]
    %v313 = vld [vmem:[#allocation2 + $0x98] sm:$0xff]
    %v314 = vld [vmem:[#allocation2 + $0xa0] sm:$0xff]
    %v315 = vld [vmem:[#allocation2 + $0xa8] sm:$0xff]
    %v316 = vld [vmem:[#allocation2 + $0xb0] sm:$0xff]
    %v317 = vld [vmem:[#allocation2 + $0xb8] sm:$0xff]
    %v318 = vld [vmem:[#allocation2 + $0xc0] sm:$0xff]
    %v319 = vld [vmem:[#allocation2 + $0xc8] sm:$0xff]
    %v320 = vld [vmem:[#allocation2 + $0xd0] sm:$0xff]
    %v321 = vld [vmem:[#allocation2 + $0xd8] sm:$0xff]
    %v322 = vld [vmem:[#allocation2 + $0xe0] sm:$0xff]
    %v323 = vld [vmem:[#allocation2 + $0xe8] sm:$0xff]
    %v324 = vld [vmem:[#allocation2 + $0xf0] sm:$0xff]
    %v325 = vld [vmem:[#allocation2 + $0xf8] sm:$0xff]
    %v326 = vld [vmem:[#allocation2 + $0x100] sm:$0xff]
    %v327 = vld [vmem:[#allocation2 + $0x108] sm:$0xff]
    %v328 = vld [vmem:[#allocation2 + $0x110] sm:$0xff]
    %v329 = vld [vmem:[#allocation2 + $0x118] sm:$0xff]
    %v330 = vld [vmem:[#allocation2 + $0x120] sm:$0xff]
    %v331 = vld [vmem:[#allocation2 + $0x128] sm:$0xff]
    %v332 = vld [vmem:[#allocation2 + $0x130] sm:$0xff]
    %v333 = vld [vmem:[#allocation2 + $0x138] sm:$0xff]
    %v334 = vld [vmem:[#allocation2 + $0x140] sm:$0xff]
    %v335 = vld [vmem:[#allocation2 + $0x148] sm:$0xff]
    %v336 = vld [vmem:[#allocation2 + $0x150] sm:$0xff]
    %v337 = vld [vmem:[#allocation2 + $0x158] sm:$0xff]
    %v338 = vld [vmem:[#allocation2 + $0x160] sm:$0xff]
    %v339 = vld [vmem:[#allocation2 + $0x168] sm:$0xff]
    %v340 = vld [vmem:[#allocation2 + $0x170] sm:$0xff]
    %v341 = vld [vmem:[#allocation2 + $0x178] sm:$0xff]
    %v342 = vld [vmem:[#allocation2 + $0x180] sm:$0xff]
    %v343 = vld [vmem:[#allocation2 + $0x188] sm:$0xff]
    %v344 = vld [vmem:[#allocation2 + $0x190] sm:$0xff]
    %v345 = vld [vmem:[#allocation2 + $0x198] sm:$0xff]
    %v346 = vld [vmem:[#allocation2 + $0x1a0] sm:$0xff]
    %v347 = vld [vmem:[#allocation2 + $0x1a8] sm:$0xff]
    %v348 = vld [vmem:[#allocation2 + $0x1b0] sm:$0xff]
    %v349 = vld [vmem:[#allocation2 + $0x1b8] sm:$0xff]
    %vm350 = vcmask 916480
    %v352 = vsel %vm350, 0.0, 0
    %354 = vmatprep.subr.mxu0 %v295
    %355 = vmatpush1.msra.mxu0 %v294
    %356 = vmatprep.subr.mxu0 %v299
    %357 = vmatpush1.msra.mxu0 %v298
    %358 = vmatprep.subr.mxu0 %v303
    %359 = vmatpush1.msra.mxu0 %v302
    %360 = vmatprep.subr.mxu0 %v307
    %361 = vmatpush1.msra.mxu0 %v306
    %362 = vmatprep.subr.mxu0 %v311
    %363 = vmatpush1.msra.mxu0 %v310
    %364 = vmatprep.subr.mxu0 %v315
    %365 = vmatpush1.msra.mxu0 %v314
    %366 = vmatprep.subr.mxu0 %v319
    %367 = vmatpush1.msra.mxu0 %v318
    %368 = vmatprep.subr.mxu0 %v323
    %369 = vmatpush1.msra.mxu0 %v322
    %370 = vmatprep.subr.mxu0 %v327
    %371 = vmatpush1.msra.mxu0 %v326
    %372 = vmatprep.subr.mxu0 %v331
    %373 = vmatpush1.msra.mxu0 %v330
    %374 = vmatprep.subr.mxu0 %v335
    %375 = vmatpush1.msra.mxu0 %v334
    %376 = vmatprep.subr.mxu0 %v339
    %377 = vmatpush1.msra.mxu0 %v338
    %378 = vmatprep.subr.mxu0 %v343
    %379 = vmatpush1.msra.mxu0 %v342
    %380 = vmatprep.subr.mxu0 %v347
    %381 = vmatpush1.msra.mxu0 %v346
    %382 = vmatprep.subr.mxu0 0.0
    %383 = vmatpush1.msra.mxu0 0.0
    %384 = vmatprep.subr.mxu0 0.0
    %385 = vmatpush1.msra.mxu0 0.0
    %386 = vmatprep.subr.mxu0 0.0
    %387 = vmatpush1.msra.mxu0 0.0
    %388 = vmatprep.subr.mxu0 0.0
    %389 = vmatpush1.msra.mxu0 0.0
    %390 = vmatprep.subr.mxu0 0.0
    %391 = vmatpush1.msra.mxu0 0.0
    %392 = vmatprep.subr.mxu0 0.0
    %393 = vmatpush1.msra.mxu0 0.0
    %394 = vmatprep.subr.mxu0 0.0
    %395 = vmatpush1.msra.mxu0 0.0
    %396 = vmatprep.subr.mxu0 0.0
    %397 = vmatpush1.msra.mxu0 0.0
    %398 = vmatprep.subr.mxu0 0.0
    %399 = vmatpush1.msra.mxu0 0.0
    %400 = vmatprep.subr.mxu0 0.0
    %401 = vmatpush1.msra.mxu0 0.0
    %402 = vmatprep.subr.mxu0 0.0
    %403 = vmatpush1.msra.mxu0 0.0
    %404 = vmatprep.subr.mxu0 0.0
    %405 = vmatpush1.msra.mxu0 0.0
    %406 = vmatprep.subr.mxu0 0.0
    %407 = vmatpush1.msra.mxu0 0.0
    %408 = vmatprep.subr.mxu0 0.0
    %409 = vmatpush1.msra.mxu0 0.0
    %410 = vmatprep.subr.mxu0 0.0
    %411 = vmatpush1.msra.mxu0 0.0
    %412 = vmatprep.subr.mxu0 0.0
    %413 = vmatpush1.msra.mxu0 0.0
    %414 = vmatprep.subr.mxu0 0.0
    %415 = vmatpush1.msra.mxu0 0.0
    %416 = vmatprep.subr.mxu0 0.0
    %417 = vmatpush1.msra.mxu0 0.0
    %418 = vmatprep.mubr.f32.mxu0 0.0
    %419 = vmatmul.mubr.f32.gmra.mrb[0].mxu0 %v352
    %v420 = vpop.f32.mrb[0].mxu0
    %v421 = vadd.f32 0.0, %v420
    %v422 = vpop.f32.mrb[0].mxu0
    %v423 = vadd.f32 0.0, %v422
    %424 = vdwg.mxu0
    %425 = vmatprep.subr.mxu0 %v297
    %426 = vmatpush1.msra.mxu0 %v296
    %427 = vmatprep.subr.mxu0 %v301
    %428 = vmatpush1.msra.mxu0 %v300
    %429 = vmatprep.subr.mxu0 %v305
    %430 = vmatpush1.msra.mxu0 %v304
    %431 = vmatprep.subr.mxu0 %v309
    %432 = vmatpush1.msra.mxu0 %v308
    %433 = vmatprep.subr.mxu0 %v313
    %434 = vmatpush1.msra.mxu0 %v312
    %435 = vmatprep.subr.mxu0 %v317
    %436 = vmatpush1.msra.mxu0 %v316
    %437 = vmatprep.subr.mxu0 %v321
    %438 = vmatpush1.msra.mxu0 %v320
    %439 = vmatprep.subr.mxu0 %v325
    %440 = vmatpush1.msra.mxu0 %v324
    %441 = vmatprep.subr.mxu0 %v329
    %442 = vmatpush1.msra.mxu0 %v328
    %443 = vmatprep.subr.mxu0 %v333
    %444 = vmatpush1.msra.mxu0 %v332
    %445 = vmatprep.subr.mxu0 %v337
    %446 = vmatpush1.msra.mxu0 %v336
    %447 = vmatprep.subr.mxu0 %v341
    %448 = vmatpush1.msra.mxu0 %v340
    %449 = vmatprep.subr.mxu0 %v345
    %450 = vmatpush1.msra.mxu0 %v344
    %451 = vmatprep.subr.mxu0 %v349
    %452 = vmatpush1.msra.mxu0 %v348
    %453 = vmatprep.subr.mxu0 0.0
    %454 = vmatpush1.msra.mxu0 0.0
    %455 = vmatprep.subr.mxu0 0.0
    %456 = vmatpush1.msra.mxu0 0.0
    %457 = vmatprep.subr.mxu0 0.0
    %458 = vmatpush1.msra.mxu0 0.0
    %459 = vmatprep.subr.mxu0 0.0
    %460 = vmatpush1.msra.mxu0 0.0
    %461 = vmatprep.subr.mxu0 0.0
    %462 = vmatpush1.msra.mxu0 0.0
    %463 = vmatprep.subr.mxu0 0.0
    %464 = vmatpush1.msra.mxu0 0.0
    %465 = vmatprep.subr.mxu0 0.0
    %466 = vmatpush1.msra.mxu0 0.0
    %467 = vmatprep.subr.mxu0 0.0
    %468 = vmatpush1.msra.mxu0 0.0
    %469 = vmatprep.subr.mxu0 0.0
    %470 = vmatpush1.msra.mxu0 0.0
    %471 = vmatprep.subr.mxu0 0.0
    %472 = vmatpush1.msra.mxu0 0.0
    %473 = vmatprep.subr.mxu0 0.0
    %474 = vmatpush1.msra.mxu0 0.0
    %475 = vmatprep.subr.mxu0 0.0
    %476 = vmatpush1.msra.mxu0 0.0
    %477 = vmatprep.subr.mxu0 0.0
    %478 = vmatpush1.msra.mxu0 0.0
    %479 = vmatprep.subr.mxu0 0.0
    %480 = vmatpush1.msra.mxu0 0.0
    %481 = vmatprep.subr.mxu0 0.0
    %482 = vmatpush1.msra.mxu0 0.0
    %483 = vmatprep.subr.mxu0 0.0
    %484 = vmatpush1.msra.mxu0 0.0
    %485 = vmatprep.subr.mxu0 0.0
    %486 = vmatpush1.msra.mxu0 0.0
    %487 = vmatprep.subr.mxu0 0.0
    %488 = vmatpush1.msra.mxu0 0.0
    %489 = vmatprep.mubr.f32.mxu0 0.0
    %490 = vmatmul.mubr.f32.gmra.mrb[0].mxu0 %v352
    %v491 = vpop.f32.mrb[0].mxu0
    %v492 = vadd.f32 0.0, %v491
    %v493 = vpop.f32.mrb[0].mxu0
    %v494 = vadd.f32 0.0, %v493
    %495 = vdwg.mxu0
    %v496 = vld [vmem:[#allocation7] sm:$0xff]
    %v497 = vld [vmem:[#allocation7 + $0x8] sm:$0xff]
    %v498 = vld [vmem:[#allocation7 + $0x10] sm:$0xff]
    %v499 = vld [vmem:[#allocation7 + $0x18] sm:$0xff]
    %v500 = vld [vmem:[#allocation7 + $0x20] sm:$0xff]
    %v501 = vld [vmem:[#allocation7 + $0x28] sm:$0xff]
    %v502 = vld [vmem:[#allocation7 + $0x30] sm:$0xff]
    %v503 = vld [vmem:[#allocation7 + $0x38] sm:$0xff]
    %v504 = vld [vmem:[#allocation7 + $0x40] sm:$0xff]
    %v505 = vld [vmem:[#allocation7 + $0x48] sm:$0xff]
    %v506 = vld [vmem:[#allocation7 + $0x50] sm:$0xff]
    %v507 = vld [vmem:[#allocation7 + $0x58] sm:$0xff]
    %v508 = vld [vmem:[#allocation7 + $0x60] sm:$0xff]
    %v509 = vld [vmem:[#allocation7 + $0x68] sm:$0xff]
    %v510 = vld [vmem:[#allocation7 + $0x70] sm:$0xff]
    %v511 = vld [vmem:[#allocation7 + $0x78] sm:$0xff]
    %v512 = vld [vmem:[#allocation7 + $0x80] sm:$0xff]
    %v513 = vld [vmem:[#allocation7 + $0x88] sm:$0xff]
    %v514 = vld [vmem:[#allocation7 + $0x90] sm:$0xff]
    %v515 = vld [vmem:[#allocation7 + $0x98] sm:$0xff]
    %v516 = vld [vmem:[#allocation7 + $0xa0] sm:$0xff]
    %v517 = vld [vmem:[#allocation7 + $0xa8] sm:$0xff]
    %v518 = vld [vmem:[#allocation7 + $0xb0] sm:$0xff]
    %v519 = vld [vmem:[#allocation7 + $0xb8] sm:$0xff]
    %v520 = vld [vmem:[#allocation7 + $0xc0] sm:$0xff]
    %v521 = vld [vmem:[#allocation7 + $0xc8] sm:$0xff]
    %v522 = vld [vmem:[#allocation7 + $0xd0] sm:$0xff]
    %v523 = vld [vmem:[#allocation7 + $0xd8] sm:$0xff]
    %v524 = vld [vmem:[#allocation7 + $0xe0] sm:$0xff]
    %v525 = vld [vmem:[#allocation7 + $0xe8] sm:$0xff]
    %v526 = vld [vmem:[#allocation7 + $0xf0] sm:$0xff]
    %v527 = vld [vmem:[#allocation7 + $0xf8] sm:$0xff]
    %v528 = vld [vmem:[#allocation7 + $0x100] sm:$0xff]
    %v529 = vld [vmem:[#allocation7 + $0x108] sm:$0xff]
    %v530 = vld [vmem:[#allocation7 + $0x110] sm:$0xff]
    %v531 = vld [vmem:[#allocation7 + $0x118] sm:$0xff]
    %v532 = vld [vmem:[#allocation7 + $0x120] sm:$0xff]
    %v533 = vld [vmem:[#allocation7 + $0x128] sm:$0xff]
    %v534 = vld [vmem:[#allocation7 + $0x130] sm:$0xff]
    %v535 = vld [vmem:[#allocation7 + $0x138] sm:$0xff]
    %v536 = vld [vmem:[#allocation7 + $0x140] sm:$0xff]
    %v537 = vld [vmem:[#allocation7 + $0x148] sm:$0xff]
    %v538 = vld [vmem:[#allocation7 + $0x150] sm:$0xff]
    %v539 = vld [vmem:[#allocation7 + $0x158] sm:$0xff]
    %v540 = vld [vmem:[#allocation7 + $0x160] sm:$0xff]
    %v541 = vld [vmem:[#allocation7 + $0x168] sm:$0xff]
    %v542 = vld [vmem:[#allocation7 + $0x170] sm:$0xff]
    %v543 = vld [vmem:[#allocation7 + $0x178] sm:$0xff]
    %v544 = vld [vmem:[#allocation7 + $0x180] sm:$0xff]
    %v545 = vld [vmem:[#allocation7 + $0x188] sm:$0xff]
    %v546 = vld [vmem:[#allocation7 + $0x190] sm:$0xff]
    %v547 = vld [vmem:[#allocation7 + $0x198] sm:$0xff]
    %v548 = vld [vmem:[#allocation7 + $0x1a0] sm:$0xff]
    %v549 = vld [vmem:[#allocation7 + $0x1a8] sm:$0xff]
    %v550 = vld [vmem:[#allocation7 + $0x1b0] sm:$0xff]
    %v551 = vld [vmem:[#allocation7 + $0x1b8] sm:$0xff]
    %552 = vmatprep.subr.mxu0 %v497
    %553 = vmatpush1.msra.mxu0 %v496
    %554 = vmatprep.subr.mxu0 %v501
    %555 = vmatpush1.msra.mxu0 %v500
    %556 = vmatprep.subr.mxu0 %v505
    %557 = vmatpush1.msra.mxu0 %v504
    %558 = vmatprep.subr.mxu0 %v509
    %559 = vmatpush1.msra.mxu0 %v508
    %560 = vmatprep.subr.mxu0 %v513
    %561 = vmatpush1.msra.mxu0 %v512
    %562 = vmatprep.subr.mxu0 %v517
    %563 = vmatpush1.msra.mxu0 %v516
    %564 = vmatprep.subr.mxu0 %v521
    %565 = vmatpush1.msra.mxu0 %v520
    %566 = vmatprep.subr.mxu0 %v525
    %567 = vmatpush1.msra.mxu0 %v524
    %568 = vmatprep.subr.mxu0 %v529
    %569 = vmatpush1.msra.mxu0 %v528
    %570 = vmatprep.subr.mxu0 %v533
    %571 = vmatpush1.msra.mxu0 %v532
    %572 = vmatprep.subr.mxu0 %v537
    %573 = vmatpush1.msra.mxu0 %v536
    %574 = vmatprep.subr.mxu0 %v541
    %575 = vmatpush1.msra.mxu0 %v540
    %576 = vmatprep.subr.mxu0 %v545
    %577 = vmatpush1.msra.mxu0 %v544
    %578 = vmatprep.subr.mxu0 %v549
    %579 = vmatpush1.msra.mxu0 %v548
    %580 = vmatprep.subr.mxu0 0.0
    %581 = vmatpush1.msra.mxu0 0.0
    %582 = vmatprep.subr.mxu0 0.0
    %583 = vmatpush1.msra.mxu0 0.0
    %584 = vmatprep.subr.mxu0 0.0
    %585 = vmatpush1.msra.mxu0 0.0
    %586 = vmatprep.subr.mxu0 0.0
    %587 = vmatpush1.msra.mxu0 0.0
    %588 = vmatprep.subr.mxu0 0.0
    %589 = vmatpush1.msra.mxu0 0.0
    %590 = vmatprep.subr.mxu0 0.0
    %591 = vmatpush1.msra.mxu0 0.0
    %592 = vmatprep.subr.mxu0 0.0
    %593 = vmatpush1.msra.mxu0 0.0
    %594 = vmatprep.subr.mxu0 0.0
    %595 = vmatpush1.msra.mxu0 0.0
    %596 = vmatprep.subr.mxu0 0.0
    %597 = vmatpush1.msra.mxu0 0.0
    %598 = vmatprep.subr.mxu0 0.0
    %599 = vmatpush1.msra.mxu0 0.0
    %600 = vmatprep.subr.mxu0 0.0
    %601 = vmatpush1.msra.mxu0 0.0
    %602 = vmatprep.subr.mxu0 0.0
    %603 = vmatpush1.msra.mxu0 0.0
    %604 = vmatprep.subr.mxu0 0.0
    %605 = vmatpush1.msra.mxu0 0.0
    %606 = vmatprep.subr.mxu0 0.0
    %607 = vmatpush1.msra.mxu0 0.0
    %608 = vmatprep.subr.mxu0 0.0
    %609 = vmatpush1.msra.mxu0 0.0
    %610 = vmatprep.subr.mxu0 0.0
    %611 = vmatpush1.msra.mxu0 0.0
    %612 = vmatprep.subr.mxu0 0.0
    %613 = vmatpush1.msra.mxu0 0.0
    %614 = vmatprep.subr.mxu0 0.0
    %615 = vmatpush1.msra.mxu0 0.0
    %616 = vmatprep.mubr.f32.mxu0 0.0
    %617 = vmatmul.mubr.f32.gmra.mrb[0].mxu0 %v352
    %v618 = vpop.f32.mrb[0].mxu0
    %v619 = vadd.f32 0.0, %v618
    %v620 = vpop.f32.mrb[0].mxu0
    %v621 = vadd.f32 0.0, %v620
    %622 = vdwg.mxu0
    %623 = vmatprep.subr.mxu0 %v499
    %624 = vmatpush1.msra.mxu0 %v498
    %625 = vmatprep.subr.mxu0 %v503
    %626 = vmatpush1.msra.mxu0 %v502
    %627 = vmatprep.subr.mxu0 %v507
    %628 = vmatpush1.msra.mxu0 %v506
    %629 = vmatprep.subr.mxu0 %v511
    %630 = vmatpush1.msra.mxu0 %v510
    %631 = vmatprep.subr.mxu0 %v515
    %632 = vmatpush1.msra.mxu0 %v514
    %633 = vmatprep.subr.mxu0 %v519
    %634 = vmatpush1.msra.mxu0 %v518
    %635 = vmatprep.subr.mxu0 %v523
    %636 = vmatpush1.msra.mxu0 %v522
    %637 = vmatprep.subr.mxu0 %v527
    %638 = vmatpush1.msra.mxu0 %v526
    %639 = vmatprep.subr.mxu0 %v531
    %640 = vmatpush1.msra.mxu0 %v530
    %641 = vmatprep.subr.mxu0 %v535
    %642 = vmatpush1.msra.mxu0 %v534
    %643 = vmatprep.subr.mxu0 %v539
    %644 = vmatpush1.msra.mxu0 %v538
    %645 = vmatprep.subr.mxu0 %v543
    %646 = vmatpush1.msra.mxu0 %v542
    %647 = vmatprep.subr.mxu0 %v547
    %648 = vmatpush1.msra.mxu0 %v546
    %649 = vmatprep.subr.mxu0 %v551
    %650 = vmatpush1.msra.mxu0 %v550
    %651 = vmatprep.subr.mxu0 0.0
    %652 = vmatpush1.msra.mxu0 0.0
    %653 = vmatprep.subr.mxu0 0.0
    %654 = vmatpush1.msra.mxu0 0.0
    %655 = vmatprep.subr.mxu0 0.0
    %656 = vmatpush1.msra.mxu0 0.0
    %657 = vmatprep.subr.mxu0 0.0
    %658 = vmatpush1.msra.mxu0 0.0
    %659 = vmatprep.subr.mxu0 0.0
    %660 = vmatpush1.msra.mxu0 0.0
    %661 = vmatprep.subr.mxu0 0.0
    %662 = vmatpush1.msra.mxu0 0.0
    %663 = vmatprep.subr.mxu0 0.0
    %664 = vmatpush1.msra.mxu0 0.0
    %665 = vmatprep.subr.mxu0 0.0
    %666 = vmatpush1.msra.mxu0 0.0
    %667 = vmatprep.subr.mxu0 0.0
    %668 = vmatpush1.msra.mxu0 0.0
    %669 = vmatprep.subr.mxu0 0.0
    %670 = vmatpush1.msra.mxu0 0.0
    %671 = vmatprep.subr.mxu0 0.0
    %672 = vmatpush1.msra.mxu0 0.0
    %673 = vmatprep.subr.mxu0 0.0
    %674 = vmatpush1.msra.mxu0 0.0
    %675 = vmatprep.subr.mxu0 0.0
    %676 = vmatpush1.msra.mxu0 0.0
    %677 = vmatprep.subr.mxu0 0.0
    %678 = vmatpush1.msra.mxu0 0.0
    %679 = vmatprep.subr.mxu0 0.0
    %680 = vmatpush1.msra.mxu0 0.0
    %681 = vmatprep.subr.mxu0 0.0
    %682 = vmatpush1.msra.mxu0 0.0
    %683 = vmatprep.subr.mxu0 0.0
    %684 = vmatpush1.msra.mxu0 0.0
    %685 = vmatprep.subr.mxu0 0.0
    %686 = vmatpush1.msra.mxu0 0.0
    %687 = vmatprep.mubr.f32.mxu0 0.0
    %688 = vmatmul.mubr.f32.gmra.mrb[0].mxu0 %v352
    %v689 = vpop.f32.mrb[0].mxu0
    %v690 = vadd.f32 0.0, %v689
    %v691 = vpop.f32.mrb[0].mxu0
    %v692 = vadd.f32 0.0, %v691
    %693 = vdwg.mxu0
    %v694 = vadd.f32 %v207, %v421
    %v695 = vadd.f32 %v209, %v423
    %v696 = vadd.f32 %v284, %v492
    %v697 = vadd.f32 %v286, %v494
    %v698 = vxor.u32 %v694, 2147483648
    %v699 = vxor.u32 %v695, 2147483648
    %v700 = vxor.u32 %v696, 2147483648
    %v701 = vmul.f32 %v698, 1.442695
    %v702 = vpow.pop %v701
    %v703 = vmul.f32 %v699, 1.442695
    %v704 = vpow.pop %v703
    %v705 = vmul.f32 %v700, 1.442695
    %v706 = vpow.pop %v705
    %v707 = vadd.f32 %v702, 1.0
    %v708 = vadd.f32 %v704, 1.0
    %v709 = vadd.f32 %v706, 1.0
    %v710 = vrcp.pop %v707
    %v711 = vmul.f32 1.0, %v710
    %v712 = vrcp.pop %v708
    %v713 = vmul.f32 1.0, %v712
    %v714 = vrcp.pop %v709
    %v715 = vmul.f32 1.0, %v714
    %v716 = vtanh.pop %v696
    %v717 = vtanh.pop %v697
    %v718 = vmul.f32 %v711, 0.0
    %v719 = vmul.f32 %v713, 0.0
    %722 = vrot.lane.b32.xlu0 %v716, 48
    %v723 = vpop.permute.xlu0 %722
    %724 = vrot.lane.b32.xlu0 %v717, 48
    %v725 = vpop.permute.xlu0 %724
    %vm726 = vcmask 392192
    %v727 = vsel %vm726, %v723, %v725
    %v729 = vmul.f32 %v711, %v727
    %731 = vrot.lane.b32.xlu0 %v729, 112
    %v732 = vpop.permute.xlu0 %731
    %v734 = vadd.f32 %v718, %v732
    %v735 = vadd.f32 %v719, %v732
    %v736 = vtanh.pop %v734
    %v737 = vtanh.pop %v735
    %740 = vrot.lane.b32.xlu0 %v736, 112
    %v741 = vpop.permute.xlu0 %740
    %742 = vrot.lane.b32.xlu0 %v737, 112
    %v743 = vpop.permute.xlu0 %742
    %v744 = vsel %vm350, %v741, %v743
    %v747 = vmul.f32 %v713, %v744
    %v748 = vmul.f32 %v715, %v743
    %v749 = vld [vmem:[#allocation5] sm:$0xff]
    %v750 = vld [vmem:[#allocation5 + $0x8] sm:$0xff]
    %v751 = vld [vmem:[#allocation5 + $0x10] sm:$0xff]
    %v752 = vld [vmem:[#allocation5 + $0x18] sm:$0xff]
    %v753 = vld [vmem:[#allocation5 + $0x20] sm:$0xff]
    %v754 = vld [vmem:[#allocation5 + $0x28] sm:$0xff]
    %v755 = vld [vmem:[#allocation5 + $0x30] sm:$0xff]
    %v756 = vld [vmem:[#allocation5 + $0x38] sm:$0xff]
    %v757 = vld [vmem:[#allocation5 + $0x40] sm:$0xff]
    %v758 = vld [vmem:[#allocation5 + $0x48] sm:$0xff]
    %v759 = vld [vmem:[#allocation5 + $0x50] sm:$0xff]
    %v760 = vld [vmem:[#allocation5 + $0x58] sm:$0xff]
    %v761 = vld [vmem:[#allocation5 + $0x60] sm:$0xff]
    %v762 = vld [vmem:[#allocation5 + $0x68] sm:$0xff]
    %v763 = vld [vmem:[#allocation5 + $0x70] sm:$0xff]
    %v764 = vld [vmem:[#allocation5 + $0x78] sm:$0xff]
    %v765 = vld [vmem:[#allocation5 + $0x80] sm:$0xff]
    %v766 = vld [vmem:[#allocation5 + $0x88] sm:$0xff]
    %v767 = vld [vmem:[#allocation5 + $0x90] sm:$0xff]
    %v768 = vld [vmem:[#allocation5 + $0x98] sm:$0xff]
    %v769 = vld [vmem:[#allocation5 + $0xa0] sm:$0xff]
    %v770 = vld [vmem:[#allocation5 + $0xa8] sm:$0xff]
    %v771 = vld [vmem:[#allocation5 + $0xb0] sm:$0xff]
    %v772 = vld [vmem:[#allocation5 + $0xb8] sm:$0xff]
    %v773 = vld [vmem:[#allocation5 + $0xc0] sm:$0xff]
    %v774 = vld [vmem:[#allocation5 + $0xc8] sm:$0xff]
    %v775 = vld [vmem:[#allocation5 + $0xd0] sm:$0xff]
    %v776 = vld [vmem:[#allocation5 + $0xd8] sm:$0xff]
    %v777 = vld [vmem:[#allocation5 + $0xe0] sm:$0xff]
    %v778 = vld [vmem:[#allocation5 + $0xe8] sm:$0xff]
    %v779 = vld [vmem:[#allocation5 + $0xf0] sm:$0xff]
    %v780 = vld [vmem:[#allocation5 + $0xf8] sm:$0xff]
    %v781 = vld [vmem:[#allocation5 + $0x100] sm:$0xff]
    %v782 = vld [vmem:[#allocation5 + $0x108] sm:$0xff]
    %v783 = vld [vmem:[#allocation5 + $0x110] sm:$0xff]
    %v784 = vld [vmem:[#allocation5 + $0x118] sm:$0xff]
    %v785 = vld [vmem:[#allocation5 + $0x120] sm:$0xff]
    %v786 = vld [vmem:[#allocation5 + $0x128] sm:$0xff]
    %v787 = vld [vmem:[#allocation5 + $0x130] sm:$0xff]
    %v788 = vld [vmem:[#allocation5 + $0x138] sm:$0xff]
    %v789 = vld [vmem:[#allocation5 + $0x140] sm:$0xff]
    %v790 = vld [vmem:[#allocation5 + $0x148] sm:$0xff]
    %v791 = vld [vmem:[#allocation5 + $0x150] sm:$0xff]
    %v792 = vld [vmem:[#allocation5 + $0x158] sm:$0xff]
    %v793 = vld [vmem:[#allocation5 + $0x160] sm:$0xff]
    %v794 = vld [vmem:[#allocation5 + $0x168] sm:$0xff]
    %v795 = vld [vmem:[#allocation5 + $0x170] sm:$0xff]
    %v796 = vld [vmem:[#allocation5 + $0x178] sm:$0xff]
    %v797 = vld [vmem:[#allocation5 + $0x180] sm:$0xff]
    %v798 = vld [vmem:[#allocation5 + $0x188] sm:$0xff]
    %v799 = vld [vmem:[#allocation5 + $0x190] sm:$0xff]
    %v800 = vld [vmem:[#allocation5 + $0x198] sm:$0xff]
    %v801 = vld [vmem:[#allocation5 + $0x1a0] sm:$0xff]
    %v802 = vld [vmem:[#allocation5 + $0x1a8] sm:$0xff]
    %v803 = vld [vmem:[#allocation5 + $0x1b0] sm:$0xff]
    %v804 = vld [vmem:[#allocation5 + $0x1b8] sm:$0xff]
    %807 = vrot.lane.b32.xlu0 %v747, 32
    %v808 = vpop.permute.xlu0 %807
    %809 = vrot.lane.b32.xlu0 %v748, 32
    %v810 = vpop.permute.xlu0 %809
    %vm811 = vcmask 261120
    %v812 = vsel %vm811, %v808, %v810
    %v813 = vsel %vm350, %v812, 0
    %815 = vmatprep.subr.mxu0 %v750
    %816 = vmatpush1.msra.mxu0 %v749
    %817 = vmatprep.subr.mxu0 %v754
    %818 = vmatpush1.msra.mxu0 %v753
    %819 = vmatprep.subr.mxu0 %v758
    %820 = vmatpush1.msra.mxu0 %v757
    %821 = vmatprep.subr.mxu0 %v762
    %822 = vmatpush1.msra.mxu0 %v761
    %823 = vmatprep.subr.mxu0 %v766
    %824 = vmatpush1.msra.mxu0 %v765
    %825 = vmatprep.subr.mxu0 %v770
    %826 = vmatpush1.msra.mxu0 %v769
    %827 = vmatprep.subr.mxu0 %v774
    %828 = vmatpush1.msra.mxu0 %v773
    %829 = vmatprep.subr.mxu0 %v778
    %830 = vmatpush1.msra.mxu0 %v777
    %831 = vmatprep.subr.mxu0 %v782
    %832 = vmatpush1.msra.mxu0 %v781
    %833 = vmatprep.subr.mxu0 %v786
    %834 = vmatpush1.msra.mxu0 %v785
    %835 = vmatprep.subr.mxu0 %v790
    %836 = vmatpush1.msra.mxu0 %v789
    %837 = vmatprep.subr.mxu0 %v794
    %838 = vmatpush1.msra.mxu0 %v793
    %839 = vmatprep.subr.mxu0 %v798
    %840 = vmatpush1.msra.mxu0 %v797
    %841 = vmatprep.subr.mxu0 %v802
    %842 = vmatpush1.msra.mxu0 %v801
    %843 = vmatprep.subr.mxu0 0.0
    %844 = vmatpush1.msra.mxu0 0.0
    %845 = vmatprep.subr.mxu0 0.0
    %846 = vmatpush1.msra.mxu0 0.0
    %847 = vmatprep.subr.mxu0 0.0
    %848 = vmatpush1.msra.mxu0 0.0
    %849 = vmatprep.subr.mxu0 0.0
    %850 = vmatpush1.msra.mxu0 0.0
    %851 = vmatprep.subr.mxu0 0.0
    %852 = vmatpush1.msra.mxu0 0.0
    %853 = vmatprep.subr.mxu0 0.0
    %854 = vmatpush1.msra.mxu0 0.0
    %855 = vmatprep.subr.mxu0 0.0
    %856 = vmatpush1.msra.mxu0 0.0
    %857 = vmatprep.subr.mxu0 0.0
    %858 = vmatpush1.msra.mxu0 0.0
    %859 = vmatprep.subr.mxu0 0.0
    %860 = vmatpush1.msra.mxu0 0.0
    %861 = vmatprep.subr.mxu0 0.0
    %862 = vmatpush1.msra.mxu0 0.0
    %863 = vmatprep.subr.mxu0 0.0
    %864 = vmatpush1.msra.mxu0 0.0
    %865 = vmatprep.subr.mxu0 0.0
    %866 = vmatpush1.msra.mxu0 0.0
    %867 = vmatprep.subr.mxu0 0.0
    %868 = vmatpush1.msra.mxu0 0.0
    %869 = vmatprep.subr.mxu0 0.0
    %870 = vmatpush1.msra.mxu0 0.0
    %871 = vmatprep.subr.mxu0 0.0
    %872 = vmatpush1.msra.mxu0 0.0
    %873 = vmatprep.subr.mxu0 0.0
    %874 = vmatpush1.msra.mxu0 0.0
    %875 = vmatprep.subr.mxu0 0.0
    %876 = vmatpush1.msra.mxu0 0.0
    %877 = vmatprep.subr.mxu0 0.0
    %878 = vmatpush1.msra.mxu0 0.0
    %879 = vmatprep.mubr.f32.mxu0 0.0
    %880 = vmatmul.mubr.f32.gmra.mrb[0].mxu0 %v813
    %v881 = vpop.f32.mrb[0].mxu0
    %v882 = vadd.f32 %v619, %v881
    %v883 = vpop.f32.mrb[0].mxu0
    %v884 = vadd.f32 %v621, %v883
    %885 = vdwg.mxu0
    %886 = vmatprep.subr.mxu0 %v752
    %887 = vmatpush1.msra.mxu0 %v751
    %888 = vmatprep.subr.mxu0 %v756
    %889 = vmatpush1.msra.mxu0 %v755
    %890 = vmatprep.subr.mxu0 %v760
    %891 = vmatpush1.msra.mxu0 %v759
    %892 = vmatprep.subr.mxu0 %v764
    %893 = vmatpush1.msra.mxu0 %v763
    %894 = vmatprep.subr.mxu0 %v768
    %895 = vmatpush1.msra.mxu0 %v767
    %896 = vmatprep.subr.mxu0 %v772
    %897 = vmatpush1.msra.mxu0 %v771
    %898 = vmatprep.subr.mxu0 %v776
    %899 = vmatpush1.msra.mxu0 %v775
    %900 = vmatprep.subr.mxu0 %v780
    %901 = vmatpush1.msra.mxu0 %v779
    %902 = vmatprep.subr.mxu0 %v784
    %903 = vmatpush1.msra.mxu0 %v783
    %904 = vmatprep.subr.mxu0 %v788
    %905 = vmatpush1.msra.mxu0 %v787
    %906 = vmatprep.subr.mxu0 %v792
    %907 = vmatpush1.msra.mxu0 %v791
    %908 = vmatprep.subr.mxu0 %v796
    %909 = vmatpush1.msra.mxu0 %v795
    %910 = vmatprep.subr.mxu0 %v800
    %911 = vmatpush1.msra.mxu0 %v799
    %912 = vmatprep.subr.mxu0 %v804
    %913 = vmatpush1.msra.mxu0 %v803
    %914 = vmatprep.subr.mxu0 0.0
    %915 = vmatpush1.msra.mxu0 0.0
    %916 = vmatprep.subr.mxu0 0.0
    %917 = vmatpush1.msra.mxu0 0.0
    %918 = vmatprep.subr.mxu0 0.0
    %919 = vmatpush1.msra.mxu0 0.0
    %920 = vmatprep.subr.mxu0 0.0
    %921 = vmatpush1.msra.mxu0 0.0
    %922 = vmatprep.subr.mxu0 0.0
    %923 = vmatpush1.msra.mxu0 0.0
    %924 = vmatprep.subr.mxu0 0.0
    %925 = vmatpush1.msra.mxu0 0.0
    %926 = vmatprep.subr.mxu0 0.0
    %927 = vmatpush1.msra.mxu0 0.0
    %928 = vmatprep.subr.mxu0 0.0
    %929 = vmatpush1.msra.mxu0 0.0
    %930 = vmatprep.subr.mxu0 0.0
    %931 = vmatpush1.msra.mxu0 0.0
    %932 = vmatprep.subr.mxu0 0.0
    %933 = vmatpush1.msra.mxu0 0.0
    %934 = vmatprep.subr.mxu0 0.0
    %935 = vmatpush1.msra.mxu0 0.0
    %936 = vmatprep.subr.mxu0 0.0
    %937 = vmatpush1.msra.mxu0 0.0
    %938 = vmatprep.subr.mxu0 0.0
    %939 = vmatpush1.msra.mxu0 0.0
    %940 = vmatprep.subr.mxu0 0.0
    %941 = vmatpush1.msra.mxu0 0.0
    %942 = vmatprep.subr.mxu0 0.0
    %943 = vmatpush1.msra.mxu0 0.0
    %944 = vmatprep.subr.mxu0 0.0
    %945 = vmatpush1.msra.mxu0 0.0
    %946 = vmatprep.subr.mxu0 0.0
    %947 = vmatpush1.msra.mxu0 0.0
    %948 = vmatprep.subr.mxu0 0.0
    %949 = vmatpush1.msra.mxu0 0.0
    %950 = vmatprep.mubr.f32.mxu0 0.0
    %951 = vmatmul.mubr.f32.gmra.mrb[0].mxu0 %v813
    %v952 = vpop.f32.mrb[0].mxu0
    %v953 = vadd.f32 %v690, %v952
    %v954 = vpop.f32.mrb[0].mxu0
    %v955 = vadd.f32 %v692, %v954
    %956 = vdwg.mxu0
    %v957 = vld [vmem:[%s6] sm:$0xf]
    %v959 = vlaneseq
    %v960 = vshrl.u32 %v959, 7
    %v961 = vsub.s32 0, %v960
    %v962 = vrot.slane %v957, %v961
    %v963 = vlaneseq
    %v964 = vshrl.u32 %v963, 7
    %v965 = vsub.s32 1, %v964
    %v966 = vrot.slane %v957, %v965
    %v967 = vlaneseq
    %v968 = vshrl.u32 %v967, 7
    %v969 = vsub.s32 2, %v968
    %v970 = vrot.slane %v957, %v969
    %v971 = vlaneseq
    %v972 = vshrl.u32 %v971, 7
    %v973 = vsub.s32 3, %v972
    %v974 = vrot.slane %v957, %v973
    %v979 = vadd.f32 %v882, %v962
    %v980 = vadd.f32 %v884, %v966
    %v981 = vadd.f32 %v953, %v970
    %v982 = vadd.f32 %v955, %v974
    %v983 = vxor.u32 %v979, 2147483648
    %v984 = vxor.u32 %v980, 2147483648
    %v985 = vxor.u32 %v981, 2147483648
    %v986 = vmul.f32 %v983, 1.442695
    %v987 = vpow.pop %v986
    %v988 = vmul.f32 %v984, 1.442695
    %v989 = vpow.pop %v988
    %v990 = vmul.f32 %v985, 1.442695
    %v991 = vpow.pop %v990
    %v992 = vadd.f32 %v987, 1.0
    %v993 = vadd.f32 %v989, 1.0
    %v994 = vadd.f32 %v991, 1.0
    %v995 = vrcp.pop %v992
    %v996 = vmul.f32 1.0, %v995
    %v997 = vrcp.pop %v993
    %v998 = vmul.f32 1.0, %v997
    %v999 = vrcp.pop %v994
    %v1000 = vmul.f32 1.0, %v999
    %v1001 = vtanh.pop %v981
    %v1002 = vtanh.pop %v982
    %v1003 = vmul.f32 %v996, 0.0
    %v1004 = vmul.f32 %v998, 0.0
    %1007 = vrot.lane.b32.xlu0 %v1001, 48
    %v1008 = vpop.permute.xlu0 %1007
    %1009 = vrot.lane.b32.xlu0 %v1002, 48
    %v1010 = vpop.permute.xlu0 %1009
    %v1011 = vsel %vm726, %v1008, %v1010
    %v1013 = vmul.f32 %v996, %v1011
    %1015 = vrot.lane.b32.xlu0 %v1013, 112
    %v1016 = vpop.permute.xlu0 %1015
    %v1018 = vadd.f32 %v1003, %v1016
    %v1019 = vadd.f32 %v1004, %v1016
    %v1020 = vtanh.pop %v1018
    %v1021 = vtanh.pop %v1019
    %1024 = vrot.lane.b32.xlu0 %v1020, 112
    %v1025 = vpop.permute.xlu0 %1024
    %1026 = vrot.lane.b32.xlu0 %v1021, 112
    %v1027 = vpop.permute.xlu0 %1026
    %v1028 = vsel %vm350, %v1025, %v1027
    %v1031 = vmul.f32 %v998, %v1028
    %v1032 = vmul.f32 %v1000, %v1027
    %1033 = vmatprep.subr.mxu0 %v295
    %1034 = vmatpush1.msra.mxu0 %v294
    %1035 = vmatprep.subr.mxu0 %v299
    %1036 = vmatpush1.msra.mxu0 %v298
    %1037 = vmatprep.subr.mxu0 %v303
    %1038 = vmatpush1.msra.mxu0 %v302
    %1039 = vmatprep.subr.mxu0 %v307
    %1040 = vmatpush1.msra.mxu0 %v306
    %1041 = vmatprep.subr.mxu0 %v311
    %1042 = vmatpush1.msra.mxu0 %v310
    %1043 = vmatprep.subr.mxu0 %v315
    %1044 = vmatpush1.msra.mxu0 %v314
    %1045 = vmatprep.subr.mxu0 %v319
    %1046 = vmatpush1.msra.mxu0 %v318
    %1047 = vmatprep.subr.mxu0 %v323
    %1048 = vmatpush1.msra.mxu0 %v322
    %1049 = vmatprep.subr.mxu0 %v327
    %1050 = vmatpush1.msra.mxu0 %v326
    %1051 = vmatprep.subr.mxu0 %v331
    %1052 = vmatpush1.msra.mxu0 %v330
    %1053 = vmatprep.subr.mxu0 %v335
    %1054 = vmatpush1.msra.mxu0 %v334
    %1055 = vmatprep.subr.mxu0 %v339
    %1056 = vmatpush1.msra.mxu0 %v338
    %1057 = vmatprep.subr.mxu0 %v343
    %1058 = vmatpush1.msra.mxu0 %v342
    %1059 = vmatprep.subr.mxu0 %v347
    %1060 = vmatpush1.msra.mxu0 %v346
    %1061 = vmatprep.subr.mxu0 0.0
    %1062 = vmatpush1.msra.mxu0 0.0
    %1063 = vmatprep.subr.mxu0 0.0
    %1064 = vmatpush1.msra.mxu0 0.0
    %1065 = vmatprep.subr.mxu0 0.0
    %1066 = vmatpush1.msra.mxu0 0.0
    %1067 = vmatprep.subr.mxu0 0.0
    %1068 = vmatpush1.msra.mxu0 0.0
    %1069 = vmatprep.subr.mxu0 0.0
    %1070 = vmatpush1.msra.mxu0 0.0
    %1071 = vmatprep.subr.mxu0 0.0
    %1072 = vmatpush1.msra.mxu0 0.0
    %1073 = vmatprep.subr.mxu0 0.0
    %1074 = vmatpush1.msra.mxu0 0.0
    %1075 = vmatprep.subr.mxu0 0.0
    %1076 = vmatpush1.msra.mxu0 0.0
    %1077 = vmatprep.subr.mxu0 0.0
    %1078 = vmatpush1.msra.mxu0 0.0
    %1079 = vmatprep.subr.mxu0 0.0
    %1080 = vmatpush1.msra.mxu0 0.0
    %1081 = vmatprep.subr.mxu0 0.0
    %1082 = vmatpush1.msra.mxu0 0.0
    %1083 = vmatprep.subr.mxu0 0.0
    %1084 = vmatpush1.msra.mxu0 0.0
    %1085 = vmatprep.subr.mxu0 0.0
    %1086 = vmatpush1.msra.mxu0 0.0
    %1087 = vmatprep.subr.mxu0 0.0
    %1088 = vmatpush1.msra.mxu0 0.0
    %1089 = vmatprep.subr.mxu0 0.0
    %1090 = vmatpush1.msra.mxu0 0.0
    %1091 = vmatprep.subr.mxu0 0.0
    %1092 = vmatpush1.msra.mxu0 0.0
    %1093 = vmatprep.subr.mxu0 0.0
    %1094 = vmatpush1.msra.mxu0 0.0
    %1095 = vmatprep.subr.mxu0 0.0
    %1096 = vmatpush1.msra.mxu0 0.0
    %1097 = vmatprep.mubr.f32.mxu0 0.0
    %1098 = vmatmul.mubr.f32.gmra.mrb[0].mxu0 %v813
    %v1099 = vpop.f32.mrb[0].mxu0
    %v1100 = vadd.f32 0.0, %v1099
    %v1101 = vpop.f32.mrb[0].mxu0
    %v1102 = vadd.f32 0.0, %v1101
    %1103 = vdwg.mxu0
    %1104 = vmatprep.subr.mxu0 %v297
    %1105 = vmatpush1.msra.mxu0 %v296
    %1106 = vmatprep.subr.mxu0 %v301
    %1107 = vmatpush1.msra.mxu0 %v300
    %1108 = vmatprep.subr.mxu0 %v305
    %1109 = vmatpush1.msra.mxu0 %v304
    %1110 = vmatprep.subr.mxu0 %v309
    %1111 = vmatpush1.msra.mxu0 %v308
    %1112 = vmatprep.subr.mxu0 %v313
    %1113 = vmatpush1.msra.mxu0 %v312
    %1114 = vmatprep.subr.mxu0 %v317
    %1115 = vmatpush1.msra.mxu0 %v316
    %1116 = vmatprep.subr.mxu0 %v321
    %1117 = vmatpush1.msra.mxu0 %v320
    %1118 = vmatprep.subr.mxu0 %v325
    %1119 = vmatpush1.msra.mxu0 %v324
    %1120 = vmatprep.subr.mxu0 %v329
    %1121 = vmatpush1.msra.mxu0 %v328
    %1122 = vmatprep.subr.mxu0 %v333
    %1123 = vmatpush1.msra.mxu0 %v332
    %1124 = vmatprep.subr.mxu0 %v337
    %1125 = vmatpush1.msra.mxu0 %v336
    %1126 = vmatprep.subr.mxu0 %v341
    %1127 = vmatpush1.msra.mxu0 %v340
    %1128 = vmatprep.subr.mxu0 %v345
    %1129 = vmatpush1.msra.mxu0 %v344
    %1130 = vmatprep.subr.mxu0 %v349
    %1131 = vmatpush1.msra.mxu0 %v348
    %1132 = vmatprep.subr.mxu0 0.0
    %1133 = vmatpush1.msra.mxu0 0.0
    %1134 = vmatprep.subr.mxu0 0.0
    %1135 = vmatpush1.msra.mxu0 0.0
    %1136 = vmatprep.subr.mxu0 0.0
    %1137 = vmatpush1.msra.mxu0 0.0
    %1138 = vmatprep.subr.mxu0 0.0
    %1139 = vmatpush1.msra.mxu0 0.0
    %1140 = vmatprep.subr.mxu0 0.0
    %1141 = vmatpush1.msra.mxu0 0.0
    %1142 = vmatprep.subr.mxu0 0.0
    %1143 = vmatpush1.msra.mxu0 0.0
    %1144 = vmatprep.subr.mxu0 0.0
    %1145 = vmatpush1.msra.mxu0 0.0
    %1146 = vmatprep.subr.mxu0 0.0
    %1147 = vmatpush1.msra.mxu0 0.0
    %1148 = vmatprep.subr.mxu0 0.0
    %1149 = vmatpush1.msra.mxu0 0.0
    %1150 = vmatprep.subr.mxu0 0.0
    %1151 = vmatpush1.msra.mxu0 0.0
    %1152 = vmatprep.subr.mxu0 0.0
    %1153 = vmatpush1.msra.mxu0 0.0
    %1154 = vmatprep.subr.mxu0 0.0
    %1155 = vmatpush1.msra.mxu0 0.0
    %1156 = vmatprep.subr.mxu0 0.0
    %1157 = vmatpush1.msra.mxu0 0.0
    %1158 = vmatprep.subr.mxu0 0.0
    %1159 = vmatpush1.msra.mxu0 0.0
    %1160 = vmatprep.subr.mxu0 0.0
    %1161 = vmatpush1.msra.mxu0 0.0
    %1162 = vmatprep.subr.mxu0 0.0
    %1163 = vmatpush1.msra.mxu0 0.0
    %1164 = vmatprep.subr.mxu0 0.0
    %1165 = vmatpush1.msra.mxu0 0.0
    %1166 = vmatprep.subr.mxu0 0.0
    %1167 = vmatpush1.msra.mxu0 0.0
    %1168 = vmatprep.mubr.f32.mxu0 0.0
    %1169 = vmatmul.mubr.f32.gmra.mrb[0].mxu0 %v813
    %v1170 = vpop.f32.mrb[0].mxu0
    %v1171 = vadd.f32 0.0, %v1170
    %v1172 = vpop.f32.mrb[0].mxu0
    %v1173 = vadd.f32 0.0, %v1172
    %1174 = vdwg.mxu0
    %1177 = vrot.lane.b32.xlu0 %v1031, 32
    %v1178 = vpop.permute.xlu0 %1177
    %1179 = vrot.lane.b32.xlu0 %v1032, 32
    %v1180 = vpop.permute.xlu0 %1179
    %v1181 = vsel %vm811, %v1178, %v1180
    %v1182 = vsel %vm350, %v1181, 0
    %1184 = vmatprep.subr.mxu0 %v497
    %1185 = vmatpush1.msra.mxu0 %v496
    %1186 = vmatprep.subr.mxu0 %v501
    %1187 = vmatpush1.msra.mxu0 %v500
    %1188 = vmatprep.subr.mxu0 %v505
    %1189 = vmatpush1.msra.mxu0 %v504
    %1190 = vmatprep.subr.mxu0 %v509
    %1191 = vmatpush1.msra.mxu0 %v508
    %1192 = vmatprep.subr.mxu0 %v513
    %1193 = vmatpush1.msra.mxu0 %v512
    %1194 = vmatprep.subr.mxu0 %v517
    %1195 = vmatpush1.msra.mxu0 %v516
    %1196 = vmatprep.subr.mxu0 %v521
    %1197 = vmatpush1.msra.mxu0 %v520
    %1198 = vmatprep.subr.mxu0 %v525
    %1199 = vmatpush1.msra.mxu0 %v524
    %1200 = vmatprep.subr.mxu0 %v529
    %1201 = vmatpush1.msra.mxu0 %v528
    %1202 = vmatprep.subr.mxu0 %v533
    %1203 = vmatpush1.msra.mxu0 %v532
    %1204 = vmatprep.subr.mxu0 %v537
    %1205 = vmatpush1.msra.mxu0 %v536
    %1206 = vmatprep.subr.mxu0 %v541
    %1207 = vmatpush1.msra.mxu0 %v540
    %1208 = vmatprep.subr.mxu0 %v545
    %1209 = vmatpush1.msra.mxu0 %v544
    %1210 = vmatprep.subr.mxu0 %v549
    %1211 = vmatpush1.msra.mxu0 %v548
    %1212 = vmatprep.subr.mxu0 0.0
    %1213 = vmatpush1.msra.mxu0 0.0
    %1214 = vmatprep.subr.mxu0 0.0
    %1215 = vmatpush1.msra.mxu0 0.0
    %1216 = vmatprep.subr.mxu0 0.0
    %1217 = vmatpush1.msra.mxu0 0.0
    %1218 = vmatprep.subr.mxu0 0.0
    %1219 = vmatpush1.msra.mxu0 0.0
    %1220 = vmatprep.subr.mxu0 0.0
    %1221 = vmatpush1.msra.mxu0 0.0
    %1222 = vmatprep.subr.mxu0 0.0
    %1223 = vmatpush1.msra.mxu0 0.0
    %1224 = vmatprep.subr.mxu0 0.0
    %1225 = vmatpush1.msra.mxu0 0.0
    %1226 = vmatprep.subr.mxu0 0.0
    %1227 = vmatpush1.msra.mxu0 0.0
    %1228 = vmatprep.subr.mxu0 0.0
    %1229 = vmatpush1.msra.mxu0 0.0
    %1230 = vmatprep.subr.mxu0 0.0
    %1231 = vmatpush1.msra.mxu0 0.0
    %1232 = vmatprep.subr.mxu0 0.0
    %1233 = vmatpush1.msra.mxu0 0.0
    %1234 = vmatprep.subr.mxu0 0.0
    %1235 = vmatpush1.msra.mxu0 0.0
    %1236 = vmatprep.subr.mxu0 0.0
    %1237 = vmatpush1.msra.mxu0 0.0
    %1238 = vmatprep.subr.mxu0 0.0
    %1239 = vmatpush1.msra.mxu0 0.0
    %1240 = vmatprep.subr.mxu0 0.0
    %1241 = vmatpush1.msra.mxu0 0.0
    %1242 = vmatprep.subr.mxu0 0.0
    %1243 = vmatpush1.msra.mxu0 0.0
    %1244 = vmatprep.subr.mxu0 0.0
    %1245 = vmatpush1.msra.mxu0 0.0
    %1246 = vmatprep.subr.mxu0 0.0
    %1247 = vmatpush1.msra.mxu0 0.0
    %1248 = vmatprep.mubr.f32.mxu0 0.0
    %1249 = vmatmul.mubr.f32.gmra.mrb[0].mxu0 %v1182
    %v1250 = vpop.f32.mrb[0].mxu0
    %v1251 = vadd.f32 0.0, %v1250
    %v1252 = vpop.f32.mrb[0].mxu0
    %v1253 = vadd.f32 0.0, %v1252
    %1254 = vdwg.mxu0
    %1255 = vmatprep.subr.mxu0 %v499
    %1256 = vmatpush1.msra.mxu0 %v498
    %1257 = vmatprep.subr.mxu0 %v503
    %1258 = vmatpush1.msra.mxu0 %v502
    %1259 = vmatprep.subr.mxu0 %v507
    %1260 = vmatpush1.msra.mxu0 %v506
    %1261 = vmatprep.subr.mxu0 %v511
    %1262 = vmatpush1.msra.mxu0 %v510
    %1263 = vmatprep.subr.mxu0 %v515
    %1264 = vmatpush1.msra.mxu0 %v514
    %1265 = vmatprep.subr.mxu0 %v519
    %1266 = vmatpush1.msra.mxu0 %v518
    %1267 = vmatprep.subr.mxu0 %v523
    %1268 = vmatpush1.msra.mxu0 %v522
    %1269 = vmatprep.subr.mxu0 %v527
    %1270 = vmatpush1.msra.mxu0 %v526
    %1271 = vmatprep.subr.mxu0 %v531
    %1272 = vmatpush1.msra.mxu0 %v530
    %1273 = vmatprep.subr.mxu0 %v535
    %1274 = vmatpush1.msra.mxu0 %v534
    %1275 = vmatprep.subr.mxu0 %v539
    %1276 = vmatpush1.msra.mxu0 %v538
    %1277 = vmatprep.subr.mxu0 %v543
    %1278 = vmatpush1.msra.mxu0 %v542
    %1279 = vmatprep.subr.mxu0 %v547
    %1280 = vmatpush1.msra.mxu0 %v546
    %1281 = vmatprep.subr.mxu0 %v551
    %1282 = vmatpush1.msra.mxu0 %v550
    %1283 = vmatprep.subr.mxu0 0.0
    %1284 = vmatpush1.msra.mxu0 0.0
    %1285 = vmatprep.subr.mxu0 0.0
    %1286 = vmatpush1.msra.mxu0 0.0
    %1287 = vmatprep.subr.mxu0 0.0
    %1288 = vmatpush1.msra.mxu0 0.0
    %1289 = vmatprep.subr.mxu0 0.0
    %1290 = vmatpush1.msra.mxu0 0.0
    %1291 = vmatprep.subr.mxu0 0.0
    %1292 = vmatpush1.msra.mxu0 0.0
    %1293 = vmatprep.subr.mxu0 0.0
    %1294 = vmatpush1.msra.mxu0 0.0
    %1295 = vmatprep.subr.mxu0 0.0
    %1296 = vmatpush1.msra.mxu0 0.0
    %1297 = vmatprep.subr.mxu0 0.0
    %1298 = vmatpush1.msra.mxu0 0.0
    %1299 = vmatprep.subr.mxu0 0.0
    %1300 = vmatpush1.msra.mxu0 0.0
    %1301 = vmatprep.subr.mxu0 0.0
    %1302 = vmatpush1.msra.mxu0 0.0
    %1303 = vmatprep.subr.mxu0 0.0
    %1304 = vmatpush1.msra.mxu0 0.0
    %1305 = vmatprep.subr.mxu0 0.0
    %1306 = vmatpush1.msra.mxu0 0.0
    %1307 = vmatprep.subr.mxu0 0.0
    %1308 = vmatpush1.msra.mxu0 0.0
    %1309 = vmatprep.subr.mxu0 0.0
    %1310 = vmatpush1.msra.mxu0 0.0
    %1311 = vmatprep.subr.mxu0 0.0
    %1312 = vmatpush1.msra.mxu0 0.0
    %1313 = vmatprep.subr.mxu0 0.0
    %1314 = vmatpush1.msra.mxu0 0.0
    %1315 = vmatprep.subr.mxu0 0.0
    %1316 = vmatpush1.msra.mxu0 0.0
    %1317 = vmatprep.subr.mxu0 0.0
    %1318 = vmatpush1.msra.mxu0 0.0
    %1319 = vmatprep.mubr.f32.mxu0 0.0
    %1320 = vmatmul.mubr.f32.gmra.mrb[0].mxu0 %v1182
    %v1321 = vpop.f32.mrb[0].mxu0
    %v1322 = vadd.f32 0.0, %v1321
    %v1323 = vpop.f32.mrb[0].mxu0
    %v1324 = vadd.f32 0.0, %v1323
    %1325 = vdwg.mxu0
    %v1330 = vrot.slane %v1100, 6
    %v1331 = vrot.slane %v1102, 6
    %v1332 = vrot.slane %v1171, 6
    %v1333 = vrot.slane %v1173, 6
    %v1338 = vadd.f32 %v207, %v1330
    %v1339 = vadd.f32 %v209, %v1331
    %v1340 = vadd.f32 %v284, %v1332
    %v1341 = vadd.f32 %v286, %v1333
    %v1342 = vxor.u32 %v1338, 2147483648
    %v1343 = vxor.u32 %v1339, 2147483648
    %v1344 = vxor.u32 %v1340, 2147483648
    %v1345 = vmul.f32 %v1342, 1.442695
    %v1346 = vpow.pop %v1345
    %v1347 = vmul.f32 %v1343, 1.442695
    %v1348 = vpow.pop %v1347
    %v1349 = vmul.f32 %v1344, 1.442695
    %v1350 = vpow.pop %v1349
    %v1351 = vadd.f32 %v1346, 1.0
    %v1352 = vadd.f32 %v1348, 1.0
    %v1353 = vadd.f32 %v1350, 1.0
    %v1354 = vrcp.pop %v1351
    %v1355 = vmul.f32 1.0, %v1354
    %v1356 = vrcp.pop %v1352
    %v1357 = vmul.f32 1.0, %v1356
    %v1358 = vrcp.pop %v1353
    %v1359 = vmul.f32 1.0, %v1358
    %v1360 = vtanh.pop %v1340
    %v1361 = vtanh.pop %v1341
    %v1364 = vrot.slane %v734, 6
    %v1365 = vrot.slane %v735, 6
    %v1368 = vmul.f32 %v1355, %v1364
    %v1369 = vmul.f32 %v1357, %v1365
    %1372 = vrot.lane.b32.xlu0 %v1360, 48
    %v1373 = vpop.permute.xlu0 %1372
    %1374 = vrot.lane.b32.xlu0 %v1361, 48
    %v1375 = vpop.permute.xlu0 %1374
    %v1376 = vsel %vm726, %v1373, %v1375
    %v1378 = vmul.f32 %v1355, %v1376
    %1380 = vrot.lane.b32.xlu0 %v1378, 112
    %v1381 = vpop.permute.xlu0 %1380
    %v1383 = vadd.f32 %v1368, %v1381
    %v1384 = vadd.f32 %v1369, %v1381
    %v1385 = vtanh.pop %v1383
    %v1386 = vtanh.pop %v1384
    %1389 = vrot.lane.b32.xlu0 %v1385, 112
    %v1390 = vpop.permute.xlu0 %1389
    %1391 = vrot.lane.b32.xlu0 %v1386, 112
    %v1392 = vpop.permute.xlu0 %1391
    %v1393 = vsel %vm350, %v1390, %v1392
    %v1396 = vmul.f32 %v1357, %v1393
    %v1397 = vmul.f32 %v1359, %v1392
    %v1400 = vrot.slane %v1396, 2
    %v1401 = vrot.slane %v1397, 2
    %1402 = vrot.lane.b32.xlu0 %v1400, 32
    %v1403 = vpop.permute.xlu0 %1402
    %1404 = vrot.lane.b32.xlu0 %v1401, 32
    %v1405 = vpop.permute.xlu0 %1404
    %v1406 = vsel %vm811, %v1403, %v1405
    %v1407 = vsel %vm350, %v1406, 0
    %1409 = vmatprep.subr.mxu0 %v750
    %1410 = vmatpush1.msra.mxu0 %v749
    %1411 = vmatprep.subr.mxu0 %v754
    %1412 = vmatpush1.msra.mxu0 %v753
    %1413 = vmatprep.subr.mxu0 %v758
    %1414 = vmatpush1.msra.mxu0 %v757
    %1415 = vmatprep.subr.mxu0 %v762
    %1416 = vmatpush1.msra.mxu0 %v761
    %1417 = vmatprep.subr.mxu0 %v766
    %1418 = vmatpush1.msra.mxu0 %v765
    %1419 = vmatprep.subr.mxu0 %v770
    %1420 = vmatpush1.msra.mxu0 %v769
    %1421 = vmatprep.subr.mxu0 %v774
    %1422 = vmatpush1.msra.mxu0 %v773
    %1423 = vmatprep.subr.mxu0 %v778
    %1424 = vmatpush1.msra.mxu0 %v777
    %1425 = vmatprep.subr.mxu0 %v782
    %1426 = vmatpush1.msra.mxu0 %v781
    %1427 = vmatprep.subr.mxu0 %v786
    %1428 = vmatpush1.msra.mxu0 %v785
    %1429 = vmatprep.subr.mxu0 %v790
    %1430 = vmatpush1.msra.mxu0 %v789
    %1431 = vmatprep.subr.mxu0 %v794
    %1432 = vmatpush1.msra.mxu0 %v793
    %1433 = vmatprep.subr.mxu0 %v798
    %1434 = vmatpush1.msra.mxu0 %v797
    %1435 = vmatprep.subr.mxu0 %v802
    %1436 = vmatpush1.msra.mxu0 %v801
    %1437 = vmatprep.subr.mxu0 0.0
    %1438 = vmatpush1.msra.mxu0 0.0
    %1439 = vmatprep.subr.mxu0 0.0
    %1440 = vmatpush1.msra.mxu0 0.0
    %1441 = vmatprep.subr.mxu0 0.0
    %1442 = vmatpush1.msra.mxu0 0.0
    %1443 = vmatprep.subr.mxu0 0.0
    %1444 = vmatpush1.msra.mxu0 0.0
    %1445 = vmatprep.subr.mxu0 0.0
    %1446 = vmatpush1.msra.mxu0 0.0
    %1447 = vmatprep.subr.mxu0 0.0
    %1448 = vmatpush1.msra.mxu0 0.0
    %1449 = vmatprep.subr.mxu0 0.0
    %1450 = vmatpush1.msra.mxu0 0.0
    %1451 = vmatprep.subr.mxu0 0.0
    %1452 = vmatpush1.msra.mxu0 0.0
    %1453 = vmatprep.subr.mxu0 0.0
    %1454 = vmatpush1.msra.mxu0 0.0
    %1455 = vmatprep.subr.mxu0 0.0
    %1456 = vmatpush1.msra.mxu0 0.0
    %1457 = vmatprep.subr.mxu0 0.0
    %1458 = vmatpush1.msra.mxu0 0.0
    %1459 = vmatprep.subr.mxu0 0.0
    %1460 = vmatpush1.msra.mxu0 0.0
    %1461 = vmatprep.subr.mxu0 0.0
    %1462 = vmatpush1.msra.mxu0 0.0
    %1463 = vmatprep.subr.mxu0 0.0
    %1464 = vmatpush1.msra.mxu0 0.0
    %1465 = vmatprep.subr.mxu0 0.0
    %1466 = vmatpush1.msra.mxu0 0.0
    %1467 = vmatprep.subr.mxu0 0.0
    %1468 = vmatpush1.msra.mxu0 0.0
    %1469 = vmatprep.subr.mxu0 0.0
    %1470 = vmatpush1.msra.mxu0 0.0
    %1471 = vmatprep.subr.mxu0 0.0
    %1472 = vmatpush1.msra.mxu0 0.0
    %1473 = vmatprep.mubr.f32.mxu0 0.0
    %1474 = vmatmul.mubr.f32.gmra.mrb[0].mxu0 %v1407
    %v1475 = vpop.f32.mrb[0].mxu0
    %v1476 = vadd.f32 %v1251, %v1475
    %v1477 = vpop.f32.mrb[0].mxu0
    %v1478 = vadd.f32 %v1253, %v1477
    %1479 = vdwg.mxu0
    %1480 = vmatprep.subr.mxu0 %v752
    %1481 = vmatpush1.msra.mxu0 %v751
    %1482 = vmatprep.subr.mxu0 %v756
    %1483 = vmatpush1.msra.mxu0 %v755
    %1484 = vmatprep.subr.mxu0 %v760
    %1485 = vmatpush1.msra.mxu0 %v759
    %1486 = vmatprep.subr.mxu0 %v764
    %1487 = vmatpush1.msra.mxu0 %v763
    %1488 = vmatprep.subr.mxu0 %v768
    %1489 = vmatpush1.msra.mxu0 %v767
    %1490 = vmatprep.subr.mxu0 %v772
    %1491 = vmatpush1.msra.mxu0 %v771
    %1492 = vmatprep.subr.mxu0 %v776
    %1493 = vmatpush1.msra.mxu0 %v775
    %1494 = vmatprep.subr.mxu0 %v780
    %1495 = vmatpush1.msra.mxu0 %v779
    %1496 = vmatprep.subr.mxu0 %v784
    %1497 = vmatpush1.msra.mxu0 %v783
    %1498 = vmatprep.subr.mxu0 %v788
    %1499 = vmatpush1.msra.mxu0 %v787
    %1500 = vmatprep.subr.mxu0 %v792
    %1501 = vmatpush1.msra.mxu0 %v791
    %1502 = vmatprep.subr.mxu0 %v796
    %1503 = vmatpush1.msra.mxu0 %v795
    %1504 = vmatprep.subr.mxu0 %v800
    %1505 = vmatpush1.msra.mxu0 %v799
    %1506 = vmatprep.subr.mxu0 %v804
    %1507 = vmatpush1.msra.mxu0 %v803
    %1508 = vmatprep.subr.mxu0 0.0
    %1509 = vmatpush1.msra.mxu0 0.0
    %1510 = vmatprep.subr.mxu0 0.0
    %1511 = vmatpush1.msra.mxu0 0.0
    %1512 = vmatprep.subr.mxu0 0.0
    %1513 = vmatpush1.msra.mxu0 0.0
    %1514 = vmatprep.subr.mxu0 0.0
    %1515 = vmatpush1.msra.mxu0 0.0
    %1516 = vmatprep.subr.mxu0 0.0
    %1517 = vmatpush1.msra.mxu0 0.0
    %1518 = vmatprep.subr.mxu0 0.0
    %1519 = vmatpush1.msra.mxu0 0.0
    %1520 = vmatprep.subr.mxu0 0.0
    %1521 = vmatpush1.msra.mxu0 0.0
    %1522 = vmatprep.subr.mxu0 0.0
    %1523 = vmatpush1.msra.mxu0 0.0
    %1524 = vmatprep.subr.mxu0 0.0
    %1525 = vmatpush1.msra.mxu0 0.0
    %1526 = vmatprep.subr.mxu0 0.0
    %1527 = vmatpush1.msra.mxu0 0.0
    %1528 = vmatprep.subr.mxu0 0.0
    %1529 = vmatpush1.msra.mxu0 0.0
    %1530 = vmatprep.subr.mxu0 0.0
    %1531 = vmatpush1.msra.mxu0 0.0
    %1532 = vmatprep.subr.mxu0 0.0
    %1533 = vmatpush1.msra.mxu0 0.0
    %1534 = vmatprep.subr.mxu0 0.0
    %1535 = vmatpush1.msra.mxu0 0.0
    %1536 = vmatprep.subr.mxu0 0.0
    %1537 = vmatpush1.msra.mxu0 0.0
    %1538 = vmatprep.subr.mxu0 0.0
    %1539 = vmatpush1.msra.mxu0 0.0
    %1540 = vmatprep.subr.mxu0 0.0
    %1541 = vmatpush1.msra.mxu0 0.0
    %1542 = vmatprep.subr.mxu0 0.0
    %1543 = vmatpush1.msra.mxu0 0.0
    %1544 = vmatprep.mubr.f32.mxu0 0.0
    %1545 = vmatmul.mubr.f32.gmra.mrb[0].mxu0 %v1407
    %v1546 = vpop.f32.mrb[0].mxu0
    %v1547 = vadd.f32 %v1322, %v1546
    %v1548 = vpop.f32.mrb[0].mxu0
    %v1549 = vadd.f32 %v1324, %v1548
    %1550 = vdwg.mxu0
    %v1551 = vadd.f32 %v1476, %v962
    %v1552 = vadd.f32 %v1478, %v966
    %v1553 = vadd.f32 %v1547, %v970
    %v1554 = vadd.f32 %v1549, %v974
    %v1555 = vxor.u32 %v1551, 2147483648
    %v1556 = vxor.u32 %v1552, 2147483648
    %v1557 = vxor.u32 %v1553, 2147483648
    %v1558 = vmul.f32 %v1555, 1.442695
    %v1559 = vpow.pop %v1558
    %v1560 = vmul.f32 %v1556, 1.442695
    %v1561 = vpow.pop %v1560
    %v1562 = vmul.f32 %v1557, 1.442695
    %v1563 = vpow.pop %v1562
    %v1564 = vadd.f32 %v1559, 1.0
    %v1565 = vadd.f32 %v1561, 1.0
    %v1566 = vadd.f32 %v1563, 1.0
    %v1567 = vrcp.pop %v1564
    %v1568 = vmul.f32 1.0, %v1567
    %v1569 = vrcp.pop %v1565
    %v1570 = vmul.f32 1.0, %v1569
    %v1571 = vrcp.pop %v1566
    %v1572 = vmul.f32 1.0, %v1571
    %v1573 = vtanh.pop %v1553
    %v1574 = vtanh.pop %v1554
    %v1575 = vmul.f32 %v1568, %v1018
    %v1576 = vmul.f32 %v1570, %v1019
    %1579 = vrot.lane.b32.xlu0 %v1573, 48
    %v1580 = vpop.permute.xlu0 %1579
    %1581 = vrot.lane.b32.xlu0 %v1574, 48
    %v1582 = vpop.permute.xlu0 %1581
    %v1583 = vsel %vm726, %v1580, %v1582
    %v1585 = vmul.f32 %v1568, %v1583
    %1587 = vrot.lane.b32.xlu0 %v1585, 112
    %v1588 = vpop.permute.xlu0 %1587
    %v1590 = vadd.f32 %v1575, %v1588
    %v1591 = vadd.f32 %v1576, %v1588
    %v1592 = vtanh.pop %v1590
    %v1593 = vtanh.pop %v1591
    %1596 = vrot.lane.b32.xlu0 %v1592, 112
    %v1597 = vpop.permute.xlu0 %1596
    %1598 = vrot.lane.b32.xlu0 %v1593, 112
    %v1599 = vpop.permute.xlu0 %1598
    %v1600 = vsel %vm350, %v1597, %v1599
    %v1603 = vmul.f32 %v1570, %v1600
    %v1604 = vmul.f32 %v1572, %v1599
    %1605 = vmatprep.subr.mxu0 %v295
    %1606 = vmatpush1.msra.mxu0 %v294
    %1607 = vmatprep.subr.mxu0 %v299
    %1608 = vmatpush1.msra.mxu0 %v298
    %1609 = vmatprep.subr.mxu0 %v303
    %1610 = vmatpush1.msra.mxu0 %v302
    %1611 = vmatprep.subr.mxu0 %v307
    %1612 = vmatpush1.msra.mxu0 %v306
    %1613 = vmatprep.subr.mxu0 %v311
    %1614 = vmatpush1.msra.mxu0 %v310
    %1615 = vmatprep.subr.mxu0 %v315
    %1616 = vmatpush1.msra.mxu0 %v314
    %1617 = vmatprep.subr.mxu0 %v319
    %1618 = vmatpush1.msra.mxu0 %v318
    %1619 = vmatprep.subr.mxu0 %v323
    %1620 = vmatpush1.msra.mxu0 %v322
    %1621 = vmatprep.subr.mxu0 %v327
    %1622 = vmatpush1.msra.mxu0 %v326
    %1623 = vmatprep.subr.mxu0 %v331
    %1624 = vmatpush1.msra.mxu0 %v330
    %1625 = vmatprep.subr.mxu0 %v335
    %1626 = vmatpush1.msra.mxu0 %v334
    %1627 = vmatprep.subr.mxu0 %v339
    %1628 = vmatpush1.msra.mxu0 %v338
    %1629 = vmatprep.subr.mxu0 %v343
    %1630 = vmatpush1.msra.mxu0 %v342
    %1631 = vmatprep.subr.mxu0 %v347
    %1632 = vmatpush1.msra.mxu0 %v346
    %1633 = vmatprep.subr.mxu0 0.0
    %1634 = vmatpush1.msra.mxu0 0.0
    %1635 = vmatprep.subr.mxu0 0.0
    %1636 = vmatpush1.msra.mxu0 0.0
    %1637 = vmatprep.subr.mxu0 0.0
    %1638 = vmatpush1.msra.mxu0 0.0
    %1639 = vmatprep.subr.mxu0 0.0
    %1640 = vmatpush1.msra.mxu0 0.0
    %1641 = vmatprep.subr.mxu0 0.0
    %1642 = vmatpush1.msra.mxu0 0.0
    %1643 = vmatprep.subr.mxu0 0.0
    %1644 = vmatpush1.msra.mxu0 0.0
    %1645 = vmatprep.subr.mxu0 0.0
    %1646 = vmatpush1.msra.mxu0 0.0
    %1647 = vmatprep.subr.mxu0 0.0
    %1648 = vmatpush1.msra.mxu0 0.0
    %1649 = vmatprep.subr.mxu0 0.0
    %1650 = vmatpush1.msra.mxu0 0.0
    %1651 = vmatprep.subr.mxu0 0.0
    %1652 = vmatpush1.msra.mxu0 0.0
    %1653 = vmatprep.subr.mxu0 0.0
    %1654 = vmatpush1.msra.mxu0 0.0
    %1655 = vmatprep.subr.mxu0 0.0
    %1656 = vmatpush1.msra.mxu0 0.0
    %1657 = vmatprep.subr.mxu0 0.0
    %1658 = vmatpush1.msra.mxu0 0.0
    %1659 = vmatprep.subr.mxu0 0.0
    %1660 = vmatpush1.msra.mxu0 0.0
    %1661 = vmatprep.subr.mxu0 0.0
    %1662 = vmatpush1.msra.mxu0 0.0
    %1663 = vmatprep.subr.mxu0 0.0
    %1664 = vmatpush1.msra.mxu0 0.0
    %1665 = vmatprep.subr.mxu0 0.0
    %1666 = vmatpush1.msra.mxu0 0.0
    %1667 = vmatprep.subr.mxu0 0.0
    %1668 = vmatpush1.msra.mxu0 0.0
    %1669 = vmatprep.mubr.f32.mxu0 0.0
    %1670 = vmatmul.mubr.f32.gmra.mrb[0].mxu0 %v1407
    %v1671 = vpop.f32.mrb[0].mxu0
    %v1672 = vadd.f32 0.0, %v1671
    %v1673 = vpop.f32.mrb[0].mxu0
    %v1674 = vadd.f32 0.0, %v1673
    %1675 = vdwg.mxu0
    %1676 = vmatprep.subr.mxu0 %v297
    %1677 = vmatpush1.msra.mxu0 %v296
    %1678 = vmatprep.subr.mxu0 %v301
    %1679 = vmatpush1.msra.mxu0 %v300
    %1680 = vmatprep.subr.mxu0 %v305
    %1681 = vmatpush1.msra.mxu0 %v304
    %1682 = vmatprep.subr.mxu0 %v309
    %1683 = vmatpush1.msra.mxu0 %v308
    %1684 = vmatprep.subr.mxu0 %v313
    %1685 = vmatpush1.msra.mxu0 %v312
    %1686 = vmatprep.subr.mxu0 %v317
    %1687 = vmatpush1.msra.mxu0 %v316
    %1688 = vmatprep.subr.mxu0 %v321
    %1689 = vmatpush1.msra.mxu0 %v320
    %1690 = vmatprep.subr.mxu0 %v325
    %1691 = vmatpush1.msra.mxu0 %v324
    %1692 = vmatprep.subr.mxu0 %v329
    %1693 = vmatpush1.msra.mxu0 %v328
    %1694 = vmatprep.subr.mxu0 %v333
    %1695 = vmatpush1.msra.mxu0 %v332
    %1696 = vmatprep.subr.mxu0 %v337
    %1697 = vmatpush1.msra.mxu0 %v336
    %1698 = vmatprep.subr.mxu0 %v341
    %1699 = vmatpush1.msra.mxu0 %v340
    %1700 = vmatprep.subr.mxu0 %v345
    %1701 = vmatpush1.msra.mxu0 %v344
    %1702 = vmatprep.subr.mxu0 %v349
    %1703 = vmatpush1.msra.mxu0 %v348
    %1704 = vmatprep.subr.mxu0 0.0
    %1705 = vmatpush1.msra.mxu0 0.0
    %1706 = vmatprep.subr.mxu0 0.0
    %1707 = vmatpush1.msra.mxu0 0.0
    %1708 = vmatprep.subr.mxu0 0.0
    %1709 = vmatpush1.msra.mxu0 0.0
    %1710 = vmatprep.subr.mxu0 0.0
    %1711 = vmatpush1.msra.mxu0 0.0
    %1712 = vmatprep.subr.mxu0 0.0
    %1713 = vmatpush1.msra.mxu0 0.0
    %1714 = vmatprep.subr.mxu0 0.0
    %1715 = vmatpush1.msra.mxu0 0.0
    %1716 = vmatprep.subr.mxu0 0.0
    %1717 = vmatpush1.msra.mxu0 0.0
    %1718 = vmatprep.subr.mxu0 0.0
    %1719 = vmatpush1.msra.mxu0 0.0
    %1720 = vmatprep.subr.mxu0 0.0
    %1721 = vmatpush1.msra.mxu0 0.0
    %1722 = vmatprep.subr.mxu0 0.0
    %1723 = vmatpush1.msra.mxu0 0.0
    %1724 = vmatprep.subr.mxu0 0.0
    %1725 = vmatpush1.msra.mxu0 0.0
    %1726 = vmatprep.subr.mxu0 0.0
    %1727 = vmatpush1.msra.mxu0 0.0
    %1728 = vmatprep.subr.mxu0 0.0
    %1729 = vmatpush1.msra.mxu0 0.0
    %1730 = vmatprep.subr.mxu0 0.0
    %1731 = vmatpush1.msra.mxu0 0.0
    %1732 = vmatprep.subr.mxu0 0.0
    %1733 = vmatpush1.msra.mxu0 0.0
    %1734 = vmatprep.subr.mxu0 0.0
    %1735 = vmatpush1.msra.mxu0 0.0
    %1736 = vmatprep.subr.mxu0 0.0
    %1737 = vmatpush1.msra.mxu0 0.0
    %1738 = vmatprep.subr.mxu0 0.0
    %1739 = vmatpush1.msra.mxu0 0.0
    %1740 = vmatprep.mubr.f32.mxu0 0.0
    %1741 = vmatmul.mubr.f32.gmra.mrb[0].mxu0 %v1407
    %v1742 = vpop.f32.mrb[0].mxu0
    %v1743 = vadd.f32 0.0, %v1742
    %v1744 = vpop.f32.mrb[0].mxu0
    %v1745 = vadd.f32 0.0, %v1744
    %1746 = vdwg.mxu0
    %1749 = vrot.lane.b32.xlu0 %v1603, 32
    %v1750 = vpop.permute.xlu0 %1749
    %1751 = vrot.lane.b32.xlu0 %v1604, 32
    %v1752 = vpop.permute.xlu0 %1751
    %v1753 = vsel %vm811, %v1750, %v1752
    %v1754 = vsel %vm350, %v1753, 0
    %1756 = vmatprep.subr.mxu0 %v497
    %1757 = vmatpush1.msra.mxu0 %v496
    %1758 = vmatprep.subr.mxu0 %v501
    %1759 = vmatpush1.msra.mxu0 %v500
    %1760 = vmatprep.subr.mxu0 %v505
    %1761 = vmatpush1.msra.mxu0 %v504
    %1762 = vmatprep.subr.mxu0 %v509
    %1763 = vmatpush1.msra.mxu0 %v508
    %1764 = vmatprep.subr.mxu0 %v513
    %1765 = vmatpush1.msra.mxu0 %v512
    %1766 = vmatprep.subr.mxu0 %v517
    %1767 = vmatpush1.msra.mxu0 %v516
    %1768 = vmatprep.subr.mxu0 %v521
    %1769 = vmatpush1.msra.mxu0 %v520
    %1770 = vmatprep.subr.mxu0 %v525
    %1771 = vmatpush1.msra.mxu0 %v524
    %1772 = vmatprep.subr.mxu0 %v529
    %1773 = vmatpush1.msra.mxu0 %v528
    %1774 = vmatprep.subr.mxu0 %v533
    %1775 = vmatpush1.msra.mxu0 %v532
    %1776 = vmatprep.subr.mxu0 %v537
    %1777 = vmatpush1.msra.mxu0 %v536
    %1778 = vmatprep.subr.mxu0 %v541
    %1779 = vmatpush1.msra.mxu0 %v540
    %1780 = vmatprep.subr.mxu0 %v545
    %1781 = vmatpush1.msra.mxu0 %v544
    %1782 = vmatprep.subr.mxu0 %v549
    %1783 = vmatpush1.msra.mxu0 %v548
    %1784 = vmatprep.subr.mxu0 0.0
    %1785 = vmatpush1.msra.mxu0 0.0
    %1786 = vmatprep.subr.mxu0 0.0
    %1787 = vmatpush1.msra.mxu0 0.0
    %1788 = vmatprep.subr.mxu0 0.0
    %1789 = vmatpush1.msra.mxu0 0.0
    %1790 = vmatprep.subr.mxu0 0.0
    %1791 = vmatpush1.msra.mxu0 0.0
    %1792 = vmatprep.subr.mxu0 0.0
    %1793 = vmatpush1.msra.mxu0 0.0
    %1794 = vmatprep.subr.mxu0 0.0
    %1795 = vmatpush1.msra.mxu0 0.0
    %1796 = vmatprep.subr.mxu0 0.0
    %1797 = vmatpush1.msra.mxu0 0.0
    %1798 = vmatprep.subr.mxu0 0.0
    %1799 = vmatpush1.msra.mxu0 0.0
    %1800 = vmatprep.subr.mxu0 0.0
    %1801 = vmatpush1.msra.mxu0 0.0
    %1802 = vmatprep.subr.mxu0 0.0
    %1803 = vmatpush1.msra.mxu0 0.0
    %1804 = vmatprep.subr.mxu0 0.0
    %1805 = vmatpush1.msra.mxu0 0.0
    %1806 = vmatprep.subr.mxu0 0.0
    %1807 = vmatpush1.msra.mxu0 0.0
    %1808 = vmatprep.subr.mxu0 0.0
    %1809 = vmatpush1.msra.mxu0 0.0
    %1810 = vmatprep.subr.mxu0 0.0
    %1811 = vmatpush1.msra.mxu0 0.0
    %1812 = vmatprep.subr.mxu0 0.0
    %1813 = vmatpush1.msra.mxu0 0.0
    %1814 = vmatprep.subr.mxu0 0.0
    %1815 = vmatpush1.msra.mxu0 0.0
    %1816 = vmatprep.subr.mxu0 0.0
    %1817 = vmatpush1.msra.mxu0 0.0
    %1818 = vmatprep.subr.mxu0 0.0
    %1819 = vmatpush1.msra.mxu0 0.0
    %1820 = vmatprep.mubr.f32.mxu0 0.0
    %1821 = vmatmul.mubr.f32.gmra.mrb[0].mxu0 %v1754
    %v1822 = vpop.f32.mrb[0].mxu0
    %v1823 = vadd.f32 0.0, %v1822
    %v1824 = vpop.f32.mrb[0].mxu0
    %v1825 = vadd.f32 0.0, %v1824
    %1826 = vdwg.mxu0
    %1827 = vmatprep.subr.mxu0 %v499
    %1828 = vmatpush1.msra.mxu0 %v498
    %1829 = vmatprep.subr.mxu0 %v503
    %1830 = vmatpush1.msra.mxu0 %v502
    %1831 = vmatprep.subr.mxu0 %v507
    %1832 = vmatpush1.msra.mxu0 %v506
    %1833 = vmatprep.subr.mxu0 %v511
    %1834 = vmatpush1.msra.mxu0 %v510
    %1835 = vmatprep.subr.mxu0 %v515
    %1836 = vmatpush1.msra.mxu0 %v514
    %1837 = vmatprep.subr.mxu0 %v519
    %1838 = vmatpush1.msra.mxu0 %v518
    %1839 = vmatprep.subr.mxu0 %v523
    %1840 = vmatpush1.msra.mxu0 %v522
    %1841 = vmatprep.subr.mxu0 %v527
    %1842 = vmatpush1.msra.mxu0 %v526
    %1843 = vmatprep.subr.mxu0 %v531
    %1844 = vmatpush1.msra.mxu0 %v530
    %1845 = vmatprep.subr.mxu0 %v535
    %1846 = vmatpush1.msra.mxu0 %v534
    %1847 = vmatprep.subr.mxu0 %v539
    %1848 = vmatpush1.msra.mxu0 %v538
    %1849 = vmatprep.subr.mxu0 %v543
    %1850 = vmatpush1.msra.mxu0 %v542
    %1851 = vmatprep.subr.mxu0 %v547
    %1852 = vmatpush1.msra.mxu0 %v546
    %1853 = vmatprep.subr.mxu0 %v551
    %1854 = vmatpush1.msra.mxu0 %v550
    %1855 = vmatprep.subr.mxu0 0.0
    %1856 = vmatpush1.msra.mxu0 0.0
    %1857 = vmatprep.subr.mxu0 0.0
    %1858 = vmatpush1.msra.mxu0 0.0
    %1859 = vmatprep.subr.mxu0 0.0
    %1860 = vmatpush1.msra.mxu0 0.0
    %1861 = vmatprep.subr.mxu0 0.0
    %1862 = vmatpush1.msra.mxu0 0.0
    %1863 = vmatprep.subr.mxu0 0.0
    %1864 = vmatpush1.msra.mxu0 0.0
    %1865 = vmatprep.subr.mxu0 0.0
    %1866 = vmatpush1.msra.mxu0 0.0
    %1867 = vmatprep.subr.mxu0 0.0
    %1868 = vmatpush1.msra.mxu0 0.0
    %1869 = vmatprep.subr.mxu0 0.0
    %1870 = vmatpush1.msra.mxu0 0.0
    %1871 = vmatprep.subr.mxu0 0.0
    %1872 = vmatpush1.msra.mxu0 0.0
    %1873 = vmatprep.subr.mxu0 0.0
    %1874 = vmatpush1.msra.mxu0 0.0
    %1875 = vmatprep.subr.mxu0 0.0
    %1876 = vmatpush1.msra.mxu0 0.0
    %1877 = vmatprep.subr.mxu0 0.0
    %1878 = vmatpush1.msra.mxu0 0.0
    %1879 = vmatprep.subr.mxu0 0.0
    %1880 = vmatpush1.msra.mxu0 0.0
    %1881 = vmatprep.subr.mxu0 0.0
    %1882 = vmatpush1.msra.mxu0 0.0
    %1883 = vmatprep.subr.mxu0 0.0
    %1884 = vmatpush1.msra.mxu0 0.0
    %1885 = vmatprep.subr.mxu0 0.0
    %1886 = vmatpush1.msra.mxu0 0.0
    %1887 = vmatprep.subr.mxu0 0.0
    %1888 = vmatpush1.msra.mxu0 0.0
    %1889 = vmatprep.subr.mxu0 0.0
    %1890 = vmatpush1.msra.mxu0 0.0
    %1891 = vmatprep.mubr.f32.mxu0 0.0
    %1892 = vmatmul.mubr.f32.gmra.mrb[0].mxu0 %v1754
    %v1893 = vpop.f32.mrb[0].mxu0
    %v1894 = vadd.f32 0.0, %v1893
    %v1895 = vpop.f32.mrb[0].mxu0
    %v1896 = vadd.f32 0.0, %v1895
    %1897 = vdwg.mxu0
    %v1902 = vrot.slane %v1672, 4
    %v1903 = vrot.slane %v1674, 4
    %v1904 = vrot.slane %v1743, 4
    %v1905 = vrot.slane %v1745, 4
    %v1910 = vadd.f32 %v207, %v1902
    %v1911 = vadd.f32 %v209, %v1903
    %v1912 = vadd.f32 %v284, %v1904
    %v1913 = vadd.f32 %v286, %v1905
    %v1914 = vxor.u32 %v1910, 2147483648
    %v1915 = vxor.u32 %v1911, 2147483648
    %v1916 = vxor.u32 %v1912, 2147483648
    %v1917 = vmul.f32 %v1914, 1.442695
    %v1918 = vpow.pop %v1917
    %v1919 = vmul.f32 %v1915, 1.442695
    %v1920 = vpow.pop %v1919
    %v1921 = vmul.f32 %v1916, 1.442695
    %v1922 = vpow.pop %v1921
    %v1923 = vadd.f32 %v1918, 1.0
    %v1924 = vadd.f32 %v1920, 1.0
    %v1925 = vadd.f32 %v1922, 1.0
    %v1926 = vrcp.pop %v1923
    %v1927 = vmul.f32 1.0, %v1926
    %v1928 = vrcp.pop %v1924
    %v1929 = vmul.f32 1.0, %v1928
    %v1930 = vrcp.pop %v1925
    %v1931 = vmul.f32 1.0, %v1930
    %v1932 = vtanh.pop %v1912
    %v1933 = vtanh.pop %v1913
    %v1936 = vrot.slane %v1383, 6
    %v1937 = vrot.slane %v1384, 6
    %v1940 = vmul.f32 %v1927, %v1936
    %v1941 = vmul.f32 %v1929, %v1937
    %1944 = vrot.lane.b32.xlu0 %v1932, 48
    %v1945 = vpop.permute.xlu0 %1944
    %1946 = vrot.lane.b32.xlu0 %v1933, 48
    %v1947 = vpop.permute.xlu0 %1946
    %v1948 = vsel %vm726, %v1945, %v1947
    %v1950 = vmul.f32 %v1927, %v1948
    %1952 = vrot.lane.b32.xlu0 %v1950, 112
    %v1953 = vpop.permute.xlu0 %1952
    %v1955 = vadd.f32 %v1940, %v1953
    %v1956 = vadd.f32 %v1941, %v1953
    %v1957 = vtanh.pop %v1955
    %v1958 = vtanh.pop %v1956
    %1961 = vrot.lane.b32.xlu0 %v1957, 112
    %v1962 = vpop.permute.xlu0 %1961
    %1963 = vrot.lane.b32.xlu0 %v1958, 112
    %v1964 = vpop.permute.xlu0 %1963
    %v1965 = vsel %vm350, %v1962, %v1964
    %v1968 = vmul.f32 %v1929, %v1965
    %v1969 = vmul.f32 %v1931, %v1964
    %v1972 = vrot.slane %v1968, 4
    %v1973 = vrot.slane %v1969, 4
    %1974 = vrot.lane.b32.xlu0 %v1972, 32
    %v1975 = vpop.permute.xlu0 %1974
    %1976 = vrot.lane.b32.xlu0 %v1973, 32
    %v1977 = vpop.permute.xlu0 %1976
    %v1978 = vsel %vm811, %v1975, %v1977
    %v1979 = vsel %vm350, %v1978, 0
    %1981 = vmatprep.subr.mxu0 %v750
    %1982 = vmatpush1.msra.mxu0 %v749
    %1983 = vmatprep.subr.mxu0 %v754
    %1984 = vmatpush1.msra.mxu0 %v753
    %1985 = vmatprep.subr.mxu0 %v758
    %1986 = vmatpush1.msra.mxu0 %v757
    %1987 = vmatprep.subr.mxu0 %v762
    %1988 = vmatpush1.msra.mxu0 %v761
    %1989 = vmatprep.subr.mxu0 %v766
    %1990 = vmatpush1.msra.mxu0 %v765
    %1991 = vmatprep.subr.mxu0 %v770
    %1992 = vmatpush1.msra.mxu0 %v769
    %1993 = vmatprep.subr.mxu0 %v774
    %1994 = vmatpush1.msra.mxu0 %v773
    %1995 = vmatprep.subr.mxu0 %v778
    %1996 = vmatpush1.msra.mxu0 %v777
    %1997 = vmatprep.subr.mxu0 %v782
    %1998 = vmatpush1.msra.mxu0 %v781
    %1999 = vmatprep.subr.mxu0 %v786
    %2000 = vmatpush1.msra.mxu0 %v785
    %2001 = vmatprep.subr.mxu0 %v790
    %2002 = vmatpush1.msra.mxu0 %v789
    %2003 = vmatprep.subr.mxu0 %v794
    %2004 = vmatpush1.msra.mxu0 %v793
    %2005 = vmatprep.subr.mxu0 %v798
    %2006 = vmatpush1.msra.mxu0 %v797
    %2007 = vmatprep.subr.mxu0 %v802
    %2008 = vmatpush1.msra.mxu0 %v801
    %2009 = vmatprep.subr.mxu0 0.0
    %2010 = vmatpush1.msra.mxu0 0.0
    %2011 = vmatprep.subr.mxu0 0.0
    %2012 = vmatpush1.msra.mxu0 0.0
    %2013 = vmatprep.subr.mxu0 0.0
    %2014 = vmatpush1.msra.mxu0 0.0
    %2015 = vmatprep.subr.mxu0 0.0
    %2016 = vmatpush1.msra.mxu0 0.0
    %2017 = vmatprep.subr.mxu0 0.0
    %2018 = vmatpush1.msra.mxu0 0.0
    %2019 = vmatprep.subr.mxu0 0.0
    %2020 = vmatpush1.msra.mxu0 0.0
    %2021 = vmatprep.subr.mxu0 0.0
    %2022 = vmatpush1.msra.mxu0 0.0
    %2023 = vmatprep.subr.mxu0 0.0
    %2024 = vmatpush1.msra.mxu0 0.0
    %2025 = vmatprep.subr.mxu0 0.0
    %2026 = vmatpush1.msra.mxu0 0.0
    %2027 = vmatprep.subr.mxu0 0.0
    %2028 = vmatpush1.msra.mxu0 0.0
    %2029 = vmatprep.subr.mxu0 0.0
    %2030 = vmatpush1.msra.mxu0 0.0
    %2031 = vmatprep.subr.mxu0 0.0
    %2032 = vmatpush1.msra.mxu0 0.0
    %2033 = vmatprep.subr.mxu0 0.0
    %2034 = vmatpush1.msra.mxu0 0.0
    %2035 = vmatprep.subr.mxu0 0.0
    %2036 = vmatpush1.msra.mxu0 0.0
    %2037 = vmatprep.subr.mxu0 0.0
    %2038 = vmatpush1.msra.mxu0 0.0
    %2039 = vmatprep.subr.mxu0 0.0
    %2040 = vmatpush1.msra.mxu0 0.0
    %2041 = vmatprep.subr.mxu0 0.0
    %2042 = vmatpush1.msra.mxu0 0.0
    %2043 = vmatprep.subr.mxu0 0.0
    %2044 = vmatpush1.msra.mxu0 0.0
    %2045 = vmatprep.mubr.f32.mxu0 0.0
    %2046 = vmatmul.mubr.f32.gmra.mrb[0].mxu0 %v1979
    %v2047 = vpop.f32.mrb[0].mxu0
    %v2048 = vadd.f32 %v1823, %v2047
    %v2049 = vpop.f32.mrb[0].mxu0
    %v2050 = vadd.f32 %v1825, %v2049
    %2051 = vdwg.mxu0
    %2052 = vmatprep.subr.mxu0 %v752
    %2053 = vmatpush1.msra.mxu0 %v751
    %2054 = vmatprep.subr.mxu0 %v756
    %2055 = vmatpush1.msra.mxu0 %v755
    %2056 = vmatprep.subr.mxu0 %v760
    %2057 = vmatpush1.msra.mxu0 %v759
    %2058 = vmatprep.subr.mxu0 %v764
    %2059 = vmatpush1.msra.mxu0 %v763
    %2060 = vmatprep.subr.mxu0 %v768
    %2061 = vmatpush1.msra.mxu0 %v767
    %2062 = vmatprep.subr.mxu0 %v772
    %2063 = vmatpush1.msra.mxu0 %v771
    %2064 = vmatprep.subr.mxu0 %v776
    %2065 = vmatpush1.msra.mxu0 %v775
    %2066 = vmatprep.subr.mxu0 %v780
    %2067 = vmatpush1.msra.mxu0 %v779
    %2068 = vmatprep.subr.mxu0 %v784
    %2069 = vmatpush1.msra.mxu0 %v783
    %2070 = vmatprep.subr.mxu0 %v788
    %2071 = vmatpush1.msra.mxu0 %v787
    %2072 = vmatprep.subr.mxu0 %v792
    %2073 = vmatpush1.msra.mxu0 %v791
    %2074 = vmatprep.subr.mxu0 %v796
    %2075 = vmatpush1.msra.mxu0 %v795
    %2076 = vmatprep.subr.mxu0 %v800
    %2077 = vmatpush1.msra.mxu0 %v799
    %2078 = vmatprep.subr.mxu0 %v804
    %2079 = vmatpush1.msra.mxu0 %v803
    %2080 = vmatprep.subr.mxu0 0.0
    %2081 = vmatpush1.msra.mxu0 0.0
    %2082 = vmatprep.subr.mxu0 0.0
    %2083 = vmatpush1.msra.mxu0 0.0
    %2084 = vmatprep.subr.mxu0 0.0
    %2085 = vmatpush1.msra.mxu0 0.0
    %2086 = vmatprep.subr.mxu0 0.0
    %2087 = vmatpush1.msra.mxu0 0.0
    %2088 = vmatprep.subr.mxu0 0.0
    %2089 = vmatpush1.msra.mxu0 0.0
    %2090 = vmatprep.subr.mxu0 0.0
    %2091 = vmatpush1.msra.mxu0 0.0
    %2092 = vmatprep.subr.mxu0 0.0
    %2093 = vmatpush1.msra.mxu0 0.0
    %2094 = vmatprep.subr.mxu0 0.0
    %2095 = vmatpush1.msra.mxu0 0.0
    %2096 = vmatprep.subr.mxu0 0.0
    %2097 = vmatpush1.msra.mxu0 0.0
    %2098 = vmatprep.subr.mxu0 0.0
    %2099 = vmatpush1.msra.mxu0 0.0
    %2100 = vmatprep.subr.mxu0 0.0
    %2101 = vmatpush1.msra.mxu0 0.0
    %2102 = vmatprep.subr.mxu0 0.0
    %2103 = vmatpush1.msra.mxu0 0.0
    %2104 = vmatprep.subr.mxu0 0.0
    %2105 = vmatpush1.msra.mxu0 0.0
    %2106 = vmatprep.subr.mxu0 0.0
    %2107 = vmatpush1.msra.mxu0 0.0
    %2108 = vmatprep.subr.mxu0 0.0
    %2109 = vmatpush1.msra.mxu0 0.0
    %2110 = vmatprep.subr.mxu0 0.0
    %2111 = vmatpush1.msra.mxu0 0.0
    %2112 = vmatprep.subr.mxu0 0.0
    %2113 = vmatpush1.msra.mxu0 0.0
    %2114 = vmatprep.subr.mxu0 0.0
    %2115 = vmatpush1.msra.mxu0 0.0
    %2116 = vmatprep.mubr.f32.mxu0 0.0
    %2117 = vmatmul.mubr.f32.gmra.mrb[0].mxu0 %v1979
    %v2118 = vpop.f32.mrb[0].mxu0
    %v2119 = vadd.f32 %v1894, %v2118
    %v2120 = vpop.f32.mrb[0].mxu0
    %v2121 = vadd.f32 %v1896, %v2120
    %2122 = vdwg.mxu0
    %v2123 = vadd.f32 %v2048, %v962
    %v2124 = vadd.f32 %v2050, %v966
    %v2125 = vadd.f32 %v2119, %v970
    %v2126 = vadd.f32 %v2121, %v974
    %v2127 = vxor.u32 %v2123, 2147483648
    %v2128 = vxor.u32 %v2124, 2147483648
    %v2129 = vxor.u32 %v2125, 2147483648
    %v2130 = vmul.f32 %v2127, 1.442695
    %v2131 = vpow.pop %v2130
    %v2132 = vmul.f32 %v2128, 1.442695
    %v2133 = vpow.pop %v2132
    %v2134 = vmul.f32 %v2129, 1.442695
    %v2135 = vpow.pop %v2134
    %v2136 = vadd.f32 %v2131, 1.0
    %v2137 = vadd.f32 %v2133, 1.0
    %v2138 = vadd.f32 %v2135, 1.0
    %v2139 = vrcp.pop %v2136
    %v2140 = vmul.f32 1.0, %v2139
    %v2141 = vrcp.pop %v2137
    %v2142 = vmul.f32 1.0, %v2141
    %v2143 = vrcp.pop %v2138
    %v2144 = vmul.f32 1.0, %v2143
    %v2145 = vtanh.pop %v2125
    %v2146 = vtanh.pop %v2126
    %v2147 = vmul.f32 %v2140, %v1590
    %v2148 = vmul.f32 %v2142, %v1591
    %2151 = vrot.lane.b32.xlu0 %v2145, 48
    %v2152 = vpop.permute.xlu0 %2151
    %2153 = vrot.lane.b32.xlu0 %v2146, 48
    %v2154 = vpop.permute.xlu0 %2153
    %v2155 = vsel %vm726, %v2152, %v2154
    %v2157 = vmul.f32 %v2140, %v2155
    %2159 = vrot.lane.b32.xlu0 %v2157, 112
    %v2160 = vpop.permute.xlu0 %2159
    %v2162 = vadd.f32 %v2147, %v2160
    %v2163 = vadd.f32 %v2148, %v2160
    %v2164 = vtanh.pop %v2162
    %v2165 = vtanh.pop %v2163
    %2168 = vrot.lane.b32.xlu0 %v2164, 112
    %v2169 = vpop.permute.xlu0 %2168
    %2170 = vrot.lane.b32.xlu0 %v2165, 112
    %v2171 = vpop.permute.xlu0 %2170
    %v2172 = vsel %vm350, %v2169, %v2171
    %v2175 = vmul.f32 %v2142, %v2172
    %v2176 = vmul.f32 %v2144, %v2171
    %2177 = vmatprep.subr.mxu0 %v295
    %2178 = vmatpush1.msra.mxu0 %v294
    %2179 = vmatprep.subr.mxu0 %v299
    %2180 = vmatpush1.msra.mxu0 %v298
    %2181 = vmatprep.subr.mxu0 %v303
    %2182 = vmatpush1.msra.mxu0 %v302
    %2183 = vmatprep.subr.mxu0 %v307
    %2184 = vmatpush1.msra.mxu0 %v306
    %2185 = vmatprep.subr.mxu0 %v311
    %2186 = vmatpush1.msra.mxu0 %v310
    %2187 = vmatprep.subr.mxu0 %v315
    %2188 = vmatpush1.msra.mxu0 %v314
    %2189 = vmatprep.subr.mxu0 %v319
    %2190 = vmatpush1.msra.mxu0 %v318
    %2191 = vmatprep.subr.mxu0 %v323
    %2192 = vmatpush1.msra.mxu0 %v322
    %2193 = vmatprep.subr.mxu0 %v327
    %2194 = vmatpush1.msra.mxu0 %v326
    %2195 = vmatprep.subr.mxu0 %v331
    %2196 = vmatpush1.msra.mxu0 %v330
    %2197 = vmatprep.subr.mxu0 %v335
    %2198 = vmatpush1.msra.mxu0 %v334
    %2199 = vmatprep.subr.mxu0 %v339
    %2200 = vmatpush1.msra.mxu0 %v338
    %2201 = vmatprep.subr.mxu0 %v343
    %2202 = vmatpush1.msra.mxu0 %v342
    %2203 = vmatprep.subr.mxu0 %v347
    %2204 = vmatpush1.msra.mxu0 %v346
    %2205 = vmatprep.subr.mxu0 0.0
    %2206 = vmatpush1.msra.mxu0 0.0
    %2207 = vmatprep.subr.mxu0 0.0
    %2208 = vmatpush1.msra.mxu0 0.0
    %2209 = vmatprep.subr.mxu0 0.0
    %2210 = vmatpush1.msra.mxu0 0.0
    %2211 = vmatprep.subr.mxu0 0.0
    %2212 = vmatpush1.msra.mxu0 0.0
    %2213 = vmatprep.subr.mxu0 0.0
    %2214 = vmatpush1.msra.mxu0 0.0
    %2215 = vmatprep.subr.mxu0 0.0
    %2216 = vmatpush1.msra.mxu0 0.0
    %2217 = vmatprep.subr.mxu0 0.0
    %2218 = vmatpush1.msra.mxu0 0.0
    %2219 = vmatprep.subr.mxu0 0.0
    %2220 = vmatpush1.msra.mxu0 0.0
    %2221 = vmatprep.subr.mxu0 0.0
    %2222 = vmatpush1.msra.mxu0 0.0
    %2223 = vmatprep.subr.mxu0 0.0
    %2224 = vmatpush1.msra.mxu0 0.0
    %2225 = vmatprep.subr.mxu0 0.0
    %2226 = vmatpush1.msra.mxu0 0.0
    %2227 = vmatprep.subr.mxu0 0.0
    %2228 = vmatpush1.msra.mxu0 0.0
    %2229 = vmatprep.subr.mxu0 0.0
    %2230 = vmatpush1.msra.mxu0 0.0
    %2231 = vmatprep.subr.mxu0 0.0
    %2232 = vmatpush1.msra.mxu0 0.0
    %2233 = vmatprep.subr.mxu0 0.0
    %2234 = vmatpush1.msra.mxu0 0.0
    %2235 = vmatprep.subr.mxu0 0.0
    %2236 = vmatpush1.msra.mxu0 0.0
    %2237 = vmatprep.subr.mxu0 0.0
    %2238 = vmatpush1.msra.mxu0 0.0
    %2239 = vmatprep.subr.mxu0 0.0
    %2240 = vmatpush1.msra.mxu0 0.0
    %2241 = vmatprep.mubr.f32.mxu0 0.0
    %2242 = vmatmul.mubr.f32.gmra.mrb[0].mxu0 %v1979
    %v2243 = vpop.f32.mrb[0].mxu0
    %v2244 = vadd.f32 0.0, %v2243
    %v2245 = vpop.f32.mrb[0].mxu0
    %v2246 = vadd.f32 0.0, %v2245
    %2247 = vdwg.mxu0
    %2248 = vmatprep.subr.mxu0 %v297
    %2249 = vmatpush1.msra.mxu0 %v296
    %2250 = vmatprep.subr.mxu0 %v301
    %2251 = vmatpush1.msra.mxu0 %v300
    %2252 = vmatprep.subr.mxu0 %v305
    %2253 = vmatpush1.msra.mxu0 %v304
    %2254 = vmatprep.subr.mxu0 %v309
    %2255 = vmatpush1.msra.mxu0 %v308
    %2256 = vmatprep.subr.mxu0 %v313
    %2257 = vmatpush1.msra.mxu0 %v312
    %2258 = vmatprep.subr.mxu0 %v317
    %2259 = vmatpush1.msra.mxu0 %v316
    %2260 = vmatprep.subr.mxu0 %v321
    %2261 = vmatpush1.msra.mxu0 %v320
    %2262 = vmatprep.subr.mxu0 %v325
    %2263 = vmatpush1.msra.mxu0 %v324
    %2264 = vmatprep.subr.mxu0 %v329
    %2265 = vmatpush1.msra.mxu0 %v328
    %2266 = vmatprep.subr.mxu0 %v333
    %2267 = vmatpush1.msra.mxu0 %v332
    %2268 = vmatprep.subr.mxu0 %v337
    %2269 = vmatpush1.msra.mxu0 %v336
    %2270 = vmatprep.subr.mxu0 %v341
    %2271 = vmatpush1.msra.mxu0 %v340
    %2272 = vmatprep.subr.mxu0 %v345
    %2273 = vmatpush1.msra.mxu0 %v344
    %2274 = vmatprep.subr.mxu0 %v349
    %2275 = vmatpush1.msra.mxu0 %v348
    %2276 = vmatprep.subr.mxu0 0.0
    %2277 = vmatpush1.msra.mxu0 0.0
    %2278 = vmatprep.subr.mxu0 0.0
    %2279 = vmatpush1.msra.mxu0 0.0
    %2280 = vmatprep.subr.mxu0 0.0
    %2281 = vmatpush1.msra.mxu0 0.0
    %2282 = vmatprep.subr.mxu0 0.0
    %2283 = vmatpush1.msra.mxu0 0.0
    %2284 = vmatprep.subr.mxu0 0.0
    %2285 = vmatpush1.msra.mxu0 0.0
    %2286 = vmatprep.subr.mxu0 0.0
    %2287 = vmatpush1.msra.mxu0 0.0
    %2288 = vmatprep.subr.mxu0 0.0
    %2289 = vmatpush1.msra.mxu0 0.0
    %2290 = vmatprep.subr.mxu0 0.0
    %2291 = vmatpush1.msra.mxu0 0.0
    %2292 = vmatprep.subr.mxu0 0.0
    %2293 = vmatpush1.msra.mxu0 0.0
    %2294 = vmatprep.subr.mxu0 0.0
    %2295 = vmatpush1.msra.mxu0 0.0
    %2296 = vmatprep.subr.mxu0 0.0
    %2297 = vmatpush1.msra.mxu0 0.0
    %2298 = vmatprep.subr.mxu0 0.0
    %2299 = vmatpush1.msra.mxu0 0.0
    %2300 = vmatprep.subr.mxu0 0.0
    %2301 = vmatpush1.msra.mxu0 0.0
    %2302 = vmatprep.subr.mxu0 0.0
    %2303 = vmatpush1.msra.mxu0 0.0
    %2304 = vmatprep.subr.mxu0 0.0
    %2305 = vmatpush1.msra.mxu0 0.0
    %2306 = vmatprep.subr.mxu0 0.0
    %2307 = vmatpush1.msra.mxu0 0.0
    %2308 = vmatprep.subr.mxu0 0.0
    %2309 = vmatpush1.msra.mxu0 0.0
    %2310 = vmatprep.subr.mxu0 0.0
    %2311 = vmatpush1.msra.mxu0 0.0
    %2312 = vmatprep.mubr.f32.mxu0 0.0
    %2313 = vmatmul.mubr.f32.gmra.mrb[0].mxu0 %v1979
    %v2314 = vpop.f32.mrb[0].mxu0
    %v2315 = vadd.f32 0.0, %v2314
    %v2316 = vpop.f32.mrb[0].mxu0
    %v2317 = vadd.f32 0.0, %v2316
    %2318 = vdwg.mxu0
    %2321 = vrot.lane.b32.xlu0 %v2175, 32
    %v2322 = vpop.permute.xlu0 %2321
    %2323 = vrot.lane.b32.xlu0 %v2176, 32
    %v2324 = vpop.permute.xlu0 %2323
    %v2325 = vsel %vm811, %v2322, %v2324
    %v2326 = vsel %vm350, %v2325, 0
    %2328 = vmatprep.subr.mxu0 %v497
    %2329 = vmatpush1.msra.mxu0 %v496
    %2330 = vmatprep.subr.mxu0 %v501
    %2331 = vmatpush1.msra.mxu0 %v500
    %2332 = vmatprep.subr.mxu0 %v505
    %2333 = vmatpush1.msra.mxu0 %v504
    %2334 = vmatprep.subr.mxu0 %v509
    %2335 = vmatpush1.msra.mxu0 %v508
    %2336 = vmatprep.subr.mxu0 %v513
    %2337 = vmatpush1.msra.mxu0 %v512
    %2338 = vmatprep.subr.mxu0 %v517
    %2339 = vmatpush1.msra.mxu0 %v516
    %2340 = vmatprep.subr.mxu0 %v521
    %2341 = vmatpush1.msra.mxu0 %v520
    %2342 = vmatprep.subr.mxu0 %v525
    %2343 = vmatpush1.msra.mxu0 %v524
    %2344 = vmatprep.subr.mxu0 %v529
    %2345 = vmatpush1.msra.mxu0 %v528
    %2346 = vmatprep.subr.mxu0 %v533
    %2347 = vmatpush1.msra.mxu0 %v532
    %2348 = vmatprep.subr.mxu0 %v537
    %2349 = vmatpush1.msra.mxu0 %v536
    %2350 = vmatprep.subr.mxu0 %v541
    %2351 = vmatpush1.msra.mxu0 %v540
    %2352 = vmatprep.subr.mxu0 %v545
    %2353 = vmatpush1.msra.mxu0 %v544
    %2354 = vmatprep.subr.mxu0 %v549
    %2355 = vmatpush1.msra.mxu0 %v548
    %2356 = vmatprep.subr.mxu0 0.0
    %2357 = vmatpush1.msra.mxu0 0.0
    %2358 = vmatprep.subr.mxu0 0.0
    %2359 = vmatpush1.msra.mxu0 0.0
    %2360 = vmatprep.subr.mxu0 0.0
    %2361 = vmatpush1.msra.mxu0 0.0
    %2362 = vmatprep.subr.mxu0 0.0
    %2363 = vmatpush1.msra.mxu0 0.0
    %2364 = vmatprep.subr.mxu0 0.0
    %2365 = vmatpush1.msra.mxu0 0.0
    %2366 = vmatprep.subr.mxu0 0.0
    %2367 = vmatpush1.msra.mxu0 0.0
    %2368 = vmatprep.subr.mxu0 0.0
    %2369 = vmatpush1.msra.mxu0 0.0
    %2370 = vmatprep.subr.mxu0 0.0
    %2371 = vmatpush1.msra.mxu0 0.0
    %2372 = vmatprep.subr.mxu0 0.0
    %2373 = vmatpush1.msra.mxu0 0.0
    %2374 = vmatprep.subr.mxu0 0.0
    %2375 = vmatpush1.msra.mxu0 0.0
    %2376 = vmatprep.subr.mxu0 0.0
    %2377 = vmatpush1.msra.mxu0 0.0
    %2378 = vmatprep.subr.mxu0 0.0
    %2379 = vmatpush1.msra.mxu0 0.0
    %2380 = vmatprep.subr.mxu0 0.0
    %2381 = vmatpush1.msra.mxu0 0.0
    %2382 = vmatprep.subr.mxu0 0.0
    %2383 = vmatpush1.msra.mxu0 0.0
    %2384 = vmatprep.subr.mxu0 0.0
    %2385 = vmatpush1.msra.mxu0 0.0
    %2386 = vmatprep.subr.mxu0 0.0
    %2387 = vmatpush1.msra.mxu0 0.0
    %2388 = vmatprep.subr.mxu0 0.0
    %2389 = vmatpush1.msra.mxu0 0.0
    %2390 = vmatprep.subr.mxu0 0.0
    %2391 = vmatpush1.msra.mxu0 0.0
    %2392 = vmatprep.mubr.f32.mxu0 0.0
    %2393 = vmatmul.mubr.f32.gmra.mrb[0].mxu0 %v2326
    %v2394 = vpop.f32.mrb[0].mxu0
    %v2395 = vadd.f32 0.0, %v2394
    %v2396 = vpop.f32.mrb[0].mxu0
    %v2397 = vadd.f32 0.0, %v2396
    %2398 = vdwg.mxu0
    %2399 = vmatprep.subr.mxu0 %v499
    %2400 = vmatpush1.msra.mxu0 %v498
    %2401 = vmatprep.subr.mxu0 %v503
    %2402 = vmatpush1.msra.mxu0 %v502
    %2403 = vmatprep.subr.mxu0 %v507
    %2404 = vmatpush1.msra.mxu0 %v506
    %2405 = vmatprep.subr.mxu0 %v511
    %2406 = vmatpush1.msra.mxu0 %v510
    %2407 = vmatprep.subr.mxu0 %v515
    %2408 = vmatpush1.msra.mxu0 %v514
    %2409 = vmatprep.subr.mxu0 %v519
    %2410 = vmatpush1.msra.mxu0 %v518
    %2411 = vmatprep.subr.mxu0 %v523
    %2412 = vmatpush1.msra.mxu0 %v522
    %2413 = vmatprep.subr.mxu0 %v527
    %2414 = vmatpush1.msra.mxu0 %v526
    %2415 = vmatprep.subr.mxu0 %v531
    %2416 = vmatpush1.msra.mxu0 %v530
    %2417 = vmatprep.subr.mxu0 %v535
    %2418 = vmatpush1.msra.mxu0 %v534
    %2419 = vmatprep.subr.mxu0 %v539
    %2420 = vmatpush1.msra.mxu0 %v538
    %2421 = vmatprep.subr.mxu0 %v543
    %2422 = vmatpush1.msra.mxu0 %v542
    %2423 = vmatprep.subr.mxu0 %v547
    %2424 = vmatpush1.msra.mxu0 %v546
    %2425 = vmatprep.subr.mxu0 %v551
    %2426 = vmatpush1.msra.mxu0 %v550
    %2427 = vmatprep.subr.mxu0 0.0
    %2428 = vmatpush1.msra.mxu0 0.0
    %2429 = vmatprep.subr.mxu0 0.0
    %2430 = vmatpush1.msra.mxu0 0.0
    %2431 = vmatprep.subr.mxu0 0.0
    %2432 = vmatpush1.msra.mxu0 0.0
    %2433 = vmatprep.subr.mxu0 0.0
    %2434 = vmatpush1.msra.mxu0 0.0
    %2435 = vmatprep.subr.mxu0 0.0
    %2436 = vmatpush1.msra.mxu0 0.0
    %2437 = vmatprep.subr.mxu0 0.0
    %2438 = vmatpush1.msra.mxu0 0.0
    %2439 = vmatprep.subr.mxu0 0.0
    %2440 = vmatpush1.msra.mxu0 0.0
    %2441 = vmatprep.subr.mxu0 0.0
    %2442 = vmatpush1.msra.mxu0 0.0
    %2443 = vmatprep.subr.mxu0 0.0
    %2444 = vmatpush1.msra.mxu0 0.0
    %2445 = vmatprep.subr.mxu0 0.0
    %2446 = vmatpush1.msra.mxu0 0.0
    %2447 = vmatprep.subr.mxu0 0.0
    %2448 = vmatpush1.msra.mxu0 0.0
    %2449 = vmatprep.subr.mxu0 0.0
    %2450 = vmatpush1.msra.mxu0 0.0
    %2451 = vmatprep.subr.mxu0 0.0
    %2452 = vmatpush1.msra.mxu0 0.0
    %2453 = vmatprep.subr.mxu0 0.0
    %2454 = vmatpush1.msra.mxu0 0.0
    %2455 = vmatprep.subr.mxu0 0.0
    %2456 = vmatpush1.msra.mxu0 0.0
    %2457 = vmatprep.subr.mxu0 0.0
    %2458 = vmatpush1.msra.mxu0 0.0
    %2459 = vmatprep.subr.mxu0 0.0
    %2460 = vmatpush1.msra.mxu0 0.0
    %2461 = vmatprep.subr.mxu0 0.0
    %2462 = vmatpush1.msra.mxu0 0.0
    %2463 = vmatprep.mubr.f32.mxu0 0.0
    %2464 = vmatmul.mubr.f32.gmra.mrb[0].mxu0 %v2326
    %v2465 = vpop.f32.mrb[0].mxu0
    %v2466 = vadd.f32 0.0, %v2465
    %v2467 = vpop.f32.mrb[0].mxu0
    %v2468 = vadd.f32 0.0, %v2467
    %2469 = vdwg.mxu0
    %v2474 = vrot.slane %v2244, 2
    %v2475 = vrot.slane %v2246, 2
    %v2476 = vrot.slane %v2315, 2
    %v2477 = vrot.slane %v2317, 2
    %v2482 = vadd.f32 %v207, %v2474
    %v2483 = vadd.f32 %v209, %v2475
    %v2484 = vadd.f32 %v284, %v2476
    %v2485 = vadd.f32 %v286, %v2477
    %v2486 = vxor.u32 %v2482, 2147483648
    %v2487 = vxor.u32 %v2483, 2147483648
    %v2488 = vxor.u32 %v2484, 2147483648
    %v2489 = vmul.f32 %v2486, 1.442695
    %v2490 = vpow.pop %v2489
    %v2491 = vmul.f32 %v2487, 1.442695
    %v2492 = vpow.pop %v2491
    %v2493 = vmul.f32 %v2488, 1.442695
    %v2494 = vpow.pop %v2493
    %v2495 = vadd.f32 %v2490, 1.0
    %v2496 = vadd.f32 %v2492, 1.0
    %v2497 = vadd.f32 %v2494, 1.0
    %v2498 = vrcp.pop %v2495
    %v2499 = vmul.f32 1.0, %v2498
    %v2500 = vrcp.pop %v2496
    %v2501 = vmul.f32 1.0, %v2500
    %v2502 = vrcp.pop %v2497
    %v2503 = vmul.f32 1.0, %v2502
    %v2504 = vtanh.pop %v2484
    %v2505 = vtanh.pop %v2485
    %v2508 = vrot.slane %v1955, 6
    %v2509 = vrot.slane %v1956, 6
    %v2512 = vmul.f32 %v2499, %v2508
    %v2513 = vmul.f32 %v2501, %v2509
    %2516 = vrot.lane.b32.xlu0 %v2504, 48
    %v2517 = vpop.permute.xlu0 %2516
    %2518 = vrot.lane.b32.xlu0 %v2505, 48
    %v2519 = vpop.permute.xlu0 %2518
    %v2520 = vsel %vm726, %v2517, %v2519
    %v2522 = vmul.f32 %v2499, %v2520
    %2524 = vrot.lane.b32.xlu0 %v2522, 112
    %v2525 = vpop.permute.xlu0 %2524
    %v2527 = vadd.f32 %v2512, %v2525
    %v2528 = vadd.f32 %v2513, %v2525
    %v2529 = vtanh.pop %v2527
    %v2530 = vtanh.pop %v2528
    %2533 = vrot.lane.b32.xlu0 %v2529, 112
    %v2534 = vpop.permute.xlu0 %2533
    %2535 = vrot.lane.b32.xlu0 %v2530, 112
    %v2536 = vpop.permute.xlu0 %2535
    %v2537 = vsel %vm350, %v2534, %v2536
    %v2540 = vmul.f32 %v2501, %v2537
    %v2541 = vmul.f32 %v2503, %v2536
    %v2544 = vrot.slane %v2540, 6
    %v2545 = vrot.slane %v2541, 6
    %2546 = vrot.lane.b32.xlu0 %v2544, 32
    %v2547 = vpop.permute.xlu0 %2546
    %2548 = vrot.lane.b32.xlu0 %v2545, 32
    %v2549 = vpop.permute.xlu0 %2548
    %v2550 = vsel %vm811, %v2547, %v2549
    %v2551 = vsel %vm350, %v2550, 0
    %2553 = vmatprep.subr.mxu0 %v750
    %2554 = vmatpush1.msra.mxu0 %v749
    %2555 = vmatprep.subr.mxu0 %v754
    %2556 = vmatpush1.msra.mxu0 %v753
    %2557 = vmatprep.subr.mxu0 %v758
    %2558 = vmatpush1.msra.mxu0 %v757
    %2559 = vmatprep.subr.mxu0 %v762
    %2560 = vmatpush1.msra.mxu0 %v761
    %2561 = vmatprep.subr.mxu0 %v766
    %2562 = vmatpush1.msra.mxu0 %v765
    %2563 = vmatprep.subr.mxu0 %v770
    %2564 = vmatpush1.msra.mxu0 %v769
    %2565 = vmatprep.subr.mxu0 %v774
    %2566 = vmatpush1.msra.mxu0 %v773
    %2567 = vmatprep.subr.mxu0 %v778
    %2568 = vmatpush1.msra.mxu0 %v777
    %2569 = vmatprep.subr.mxu0 %v782
    %2570 = vmatpush1.msra.mxu0 %v781
    %2571 = vmatprep.subr.mxu0 %v786
    %2572 = vmatpush1.msra.mxu0 %v785
    %2573 = vmatprep.subr.mxu0 %v790
    %2574 = vmatpush1.msra.mxu0 %v789
    %2575 = vmatprep.subr.mxu0 %v794
    %2576 = vmatpush1.msra.mxu0 %v793
    %2577 = vmatprep.subr.mxu0 %v798
    %2578 = vmatpush1.msra.mxu0 %v797
    %2579 = vmatprep.subr.mxu0 %v802
    %2580 = vmatpush1.msra.mxu0 %v801
    %2581 = vmatprep.subr.mxu0 0.0
    %2582 = vmatpush1.msra.mxu0 0.0
    %2583 = vmatprep.subr.mxu0 0.0
    %2584 = vmatpush1.msra.mxu0 0.0
    %2585 = vmatprep.subr.mxu0 0.0
    %2586 = vmatpush1.msra.mxu0 0.0
    %2587 = vmatprep.subr.mxu0 0.0
    %2588 = vmatpush1.msra.mxu0 0.0
    %2589 = vmatprep.subr.mxu0 0.0
    %2590 = vmatpush1.msra.mxu0 0.0
    %2591 = vmatprep.subr.mxu0 0.0
    %2592 = vmatpush1.msra.mxu0 0.0
    %2593 = vmatprep.subr.mxu0 0.0
    %2594 = vmatpush1.msra.mxu0 0.0
    %2595 = vmatprep.subr.mxu0 0.0
    %2596 = vmatpush1.msra.mxu0 0.0
    %2597 = vmatprep.subr.mxu0 0.0
    %2598 = vmatpush1.msra.mxu0 0.0
    %2599 = vmatprep.subr.mxu0 0.0
    %2600 = vmatpush1.msra.mxu0 0.0
    %2601 = vmatprep.subr.mxu0 0.0
    %2602 = vmatpush1.msra.mxu0 0.0
    %2603 = vmatprep.subr.mxu0 0.0
    %2604 = vmatpush1.msra.mxu0 0.0
    %2605 = vmatprep.subr.mxu0 0.0
    %2606 = vmatpush1.msra.mxu0 0.0
    %2607 = vmatprep.subr.mxu0 0.0
    %2608 = vmatpush1.msra.mxu0 0.0
    %2609 = vmatprep.subr.mxu0 0.0
    %2610 = vmatpush1.msra.mxu0 0.0
    %2611 = vmatprep.subr.mxu0 0.0
    %2612 = vmatpush1.msra.mxu0 0.0
    %2613 = vmatprep.subr.mxu0 0.0
    %2614 = vmatpush1.msra.mxu0 0.0
    %2615 = vmatprep.subr.mxu0 0.0
    %2616 = vmatpush1.msra.mxu0 0.0
    %2617 = vmatprep.mubr.f32.mxu0 0.0
    %2618 = vmatmul.mubr.f32.gmra.mrb[0].mxu0 %v2551
    %v2619 = vpop.f32.mrb[0].mxu0
    %v2620 = vadd.f32 %v2395, %v2619
    %v2621 = vpop.f32.mrb[0].mxu0
    %v2622 = vadd.f32 %v2397, %v2621
    %2623 = vdwg.mxu0
    %2624 = vmatprep.subr.mxu0 %v752
    %2625 = vmatpush1.msra.mxu0 %v751
    %2626 = vmatprep.subr.mxu0 %v756
    %2627 = vmatpush1.msra.mxu0 %v755
    %2628 = vmatprep.subr.mxu0 %v760
    %2629 = vmatpush1.msra.mxu0 %v759
    %2630 = vmatprep.subr.mxu0 %v764
    %2631 = vmatpush1.msra.mxu0 %v763
    %2632 = vmatprep.subr.mxu0 %v768
    %2633 = vmatpush1.msra.mxu0 %v767
    %2634 = vmatprep.subr.mxu0 %v772
    %2635 = vmatpush1.msra.mxu0 %v771
    %2636 = vmatprep.subr.mxu0 %v776
    %2637 = vmatpush1.msra.mxu0 %v775
    %2638 = vmatprep.subr.mxu0 %v780
    %2639 = vmatpush1.msra.mxu0 %v779
    %2640 = vmatprep.subr.mxu0 %v784
    %2641 = vmatpush1.msra.mxu0 %v783
    %2642 = vmatprep.subr.mxu0 %v788
    %2643 = vmatpush1.msra.mxu0 %v787
    %2644 = vmatprep.subr.mxu0 %v792
    %2645 = vmatpush1.msra.mxu0 %v791
    %2646 = vmatprep.subr.mxu0 %v796
    %2647 = vmatpush1.msra.mxu0 %v795
    %2648 = vmatprep.subr.mxu0 %v800
    %2649 = vmatpush1.msra.mxu0 %v799
    %2650 = vmatprep.subr.mxu0 %v804
    %2651 = vmatpush1.msra.mxu0 %v803
    %2652 = vmatprep.subr.mxu0 0.0
    %2653 = vmatpush1.msra.mxu0 0.0
    %2654 = vmatprep.subr.mxu0 0.0
    %2655 = vmatpush1.msra.mxu0 0.0
    %2656 = vmatprep.subr.mxu0 0.0
    %2657 = vmatpush1.msra.mxu0 0.0
    %2658 = vmatprep.subr.mxu0 0.0
    %2659 = vmatpush1.msra.mxu0 0.0
    %2660 = vmatprep.subr.mxu0 0.0
    %2661 = vmatpush1.msra.mxu0 0.0
    %2662 = vmatprep.subr.mxu0 0.0
    %2663 = vmatpush1.msra.mxu0 0.0
    %2664 = vmatprep.subr.mxu0 0.0
    %2665 = vmatpush1.msra.mxu0 0.0
    %2666 = vmatprep.subr.mxu0 0.0
    %2667 = vmatpush1.msra.mxu0 0.0
    %2668 = vmatprep.subr.mxu0 0.0
    %2669 = vmatpush1.msra.mxu0 0.0
    %2670 = vmatprep.subr.mxu0 0.0
    %2671 = vmatpush1.msra.mxu0 0.0
    %2672 = vmatprep.subr.mxu0 0.0
    %2673 = vmatpush1.msra.mxu0 0.0
    %2674 = vmatprep.subr.mxu0 0.0
    %2675 = vmatpush1.msra.mxu0 0.0
    %2676 = vmatprep.subr.mxu0 0.0
    %2677 = vmatpush1.msra.mxu0 0.0
    %2678 = vmatprep.subr.mxu0 0.0
    %2679 = vmatpush1.msra.mxu0 0.0
    %2680 = vmatprep.subr.mxu0 0.0
    %2681 = vmatpush1.msra.mxu0 0.0
    %2682 = vmatprep.subr.mxu0 0.0
    %2683 = vmatpush1.msra.mxu0 0.0
    %2684 = vmatprep.subr.mxu0 0.0
    %2685 = vmatpush1.msra.mxu0 0.0
    %2686 = vmatprep.subr.mxu0 0.0
    %2687 = vmatpush1.msra.mxu0 0.0
    %2688 = vmatprep.mubr.f32.mxu0 0.0
    %2689 = vmatmul.mubr.f32.gmra.mrb[0].mxu0 %v2551
    %v2690 = vpop.f32.mrb[0].mxu0
    %v2691 = vadd.f32 %v2466, %v2690
    %v2692 = vpop.f32.mrb[0].mxu0
    %v2693 = vadd.f32 %v2468, %v2692
    %2694 = vdwg.mxu0
    %v2695 = vadd.f32 %v2620, %v962
    %v2696 = vadd.f32 %v2622, %v966
    %v2697 = vadd.f32 %v2691, %v970
    %v2698 = vadd.f32 %v2693, %v974
    %v2699 = vxor.u32 %v2695, 2147483648
    %v2700 = vxor.u32 %v2696, 2147483648
    %v2701 = vxor.u32 %v2697, 2147483648
    %v2702 = vmul.f32 %v2699, 1.442695
    %v2703 = vpow.pop %v2702
    %v2704 = vmul.f32 %v2700, 1.442695
    %v2705 = vpow.pop %v2704
    %v2706 = vmul.f32 %v2701, 1.442695
    %v2707 = vpow.pop %v2706
    %v2708 = vadd.f32 %v2703, 1.0
    %v2709 = vadd.f32 %v2705, 1.0
    %v2710 = vadd.f32 %v2707, 1.0
    %v2711 = vrcp.pop %v2708
    %v2712 = vmul.f32 1.0, %v2711
    %v2713 = vrcp.pop %v2709
    %v2714 = vmul.f32 1.0, %v2713
    %v2715 = vrcp.pop %v2710
    %v2716 = vmul.f32 1.0, %v2715
    %v2717 = vtanh.pop %v2697
    %v2718 = vtanh.pop %v2698
    %v2719 = vmul.f32 %v2712, %v2162
    %v2720 = vmul.f32 %v2714, %v2163
    %2723 = vrot.lane.b32.xlu0 %v2717, 48
    %v2724 = vpop.permute.xlu0 %2723
    %2725 = vrot.lane.b32.xlu0 %v2718, 48
    %v2726 = vpop.permute.xlu0 %2725
    %v2727 = vsel %vm726, %v2724, %v2726
    %v2729 = vmul.f32 %v2712, %v2727
    %2731 = vrot.lane.b32.xlu0 %v2729, 112
    %v2732 = vpop.permute.xlu0 %2731
    %v2734 = vadd.f32 %v2719, %v2732
    %v2735 = vadd.f32 %v2720, %v2732
    %v2736 = vtanh.pop %v2734
    %v2737 = vtanh.pop %v2735
    %2740 = vrot.lane.b32.xlu0 %v2736, 112
    %v2741 = vpop.permute.xlu0 %2740
    %2742 = vrot.lane.b32.xlu0 %v2737, 112
    %v2743 = vpop.permute.xlu0 %2742
    %v2744 = vsel %vm350, %v2741, %v2743
    %v2747 = vmul.f32 %v2714, %v2744
    %v2748 = vmul.f32 %v2716, %v2743
    %2749 = vmatprep.subr.mxu0 %v295
    %2750 = vmatpush1.msra.mxu0 %v294
    %2751 = vmatprep.subr.mxu0 %v299
    %2752 = vmatpush1.msra.mxu0 %v298
    %2753 = vmatprep.subr.mxu0 %v303
    %2754 = vmatpush1.msra.mxu0 %v302
    %2755 = vmatprep.subr.mxu0 %v307
    %2756 = vmatpush1.msra.mxu0 %v306
    %2757 = vmatprep.subr.mxu0 %v311
    %2758 = vmatpush1.msra.mxu0 %v310
    %2759 = vmatprep.subr.mxu0 %v315
    %2760 = vmatpush1.msra.mxu0 %v314
    %2761 = vmatprep.subr.mxu0 %v319
    %2762 = vmatpush1.msra.mxu0 %v318
    %2763 = vmatprep.subr.mxu0 %v323
    %2764 = vmatpush1.msra.mxu0 %v322
    %2765 = vmatprep.subr.mxu0 %v327
    %2766 = vmatpush1.msra.mxu0 %v326
    %2767 = vmatprep.subr.mxu0 %v331
    %2768 = vmatpush1.msra.mxu0 %v330
    %2769 = vmatprep.subr.mxu0 %v335
    %2770 = vmatpush1.msra.mxu0 %v334
    %2771 = vmatprep.subr.mxu0 %v339
    %2772 = vmatpush1.msra.mxu0 %v338
    %2773 = vmatprep.subr.mxu0 %v343
    %2774 = vmatpush1.msra.mxu0 %v342
    %2775 = vmatprep.subr.mxu0 %v347
    %2776 = vmatpush1.msra.mxu0 %v346
    %2777 = vmatprep.subr.mxu0 0.0
    %2778 = vmatpush1.msra.mxu0 0.0
    %2779 = vmatprep.subr.mxu0 0.0
    %2780 = vmatpush1.msra.mxu0 0.0
    %2781 = vmatprep.subr.mxu0 0.0
    %2782 = vmatpush1.msra.mxu0 0.0
    %2783 = vmatprep.subr.mxu0 0.0
    %2784 = vmatpush1.msra.mxu0 0.0
    %2785 = vmatprep.subr.mxu0 0.0
    %2786 = vmatpush1.msra.mxu0 0.0
    %2787 = vmatprep.subr.mxu0 0.0
    %2788 = vmatpush1.msra.mxu0 0.0
    %2789 = vmatprep.subr.mxu0 0.0
    %2790 = vmatpush1.msra.mxu0 0.0
    %2791 = vmatprep.subr.mxu0 0.0
    %2792 = vmatpush1.msra.mxu0 0.0
    %2793 = vmatprep.subr.mxu0 0.0
    %2794 = vmatpush1.msra.mxu0 0.0
    %2795 = vmatprep.subr.mxu0 0.0
    %2796 = vmatpush1.msra.mxu0 0.0
    %2797 = vmatprep.subr.mxu0 0.0
    %2798 = vmatpush1.msra.mxu0 0.0
    %2799 = vmatprep.subr.mxu0 0.0
    %2800 = vmatpush1.msra.mxu0 0.0
    %2801 = vmatprep.subr.mxu0 0.0
    %2802 = vmatpush1.msra.mxu0 0.0
    %2803 = vmatprep.subr.mxu0 0.0
    %2804 = vmatpush1.msra.mxu0 0.0
    %2805 = vmatprep.subr.mxu0 0.0
    %2806 = vmatpush1.msra.mxu0 0.0
    %2807 = vmatprep.subr.mxu0 0.0
    %2808 = vmatpush1.msra.mxu0 0.0
    %2809 = vmatprep.subr.mxu0 0.0
    %2810 = vmatpush1.msra.mxu0 0.0
    %2811 = vmatprep.subr.mxu0 0.0
    %2812 = vmatpush1.msra.mxu0 0.0
    %2813 = vmatprep.mubr.f32.mxu0 0.0
    %2814 = vmatmul.mubr.f32.gmra.mrb[0].mxu0 %v2551
    %v2815 = vpop.f32.mrb[0].mxu0
    %v2816 = vadd.f32 0.0, %v2815
    %v2817 = vpop.f32.mrb[0].mxu0
    %v2818 = vadd.f32 0.0, %v2817
    %2819 = vdwg.mxu0
    %2820 = vmatprep.subr.mxu0 %v297
    %2821 = vmatpush1.msra.mxu0 %v296
    %2822 = vmatprep.subr.mxu0 %v301
    %2823 = vmatpush1.msra.mxu0 %v300
    %2824 = vmatprep.subr.mxu0 %v305
    %2825 = vmatpush1.msra.mxu0 %v304
    %2826 = vmatprep.subr.mxu0 %v309
    %2827 = vmatpush1.msra.mxu0 %v308
    %2828 = vmatprep.subr.mxu0 %v313
    %2829 = vmatpush1.msra.mxu0 %v312
    %2830 = vmatprep.subr.mxu0 %v317
    %2831 = vmatpush1.msra.mxu0 %v316
    %2832 = vmatprep.subr.mxu0 %v321
    %2833 = vmatpush1.msra.mxu0 %v320
    %2834 = vmatprep.subr.mxu0 %v325
    %2835 = vmatpush1.msra.mxu0 %v324
    %2836 = vmatprep.subr.mxu0 %v329
    %2837 = vmatpush1.msra.mxu0 %v328
    %2838 = vmatprep.subr.mxu0 %v333
    %2839 = vmatpush1.msra.mxu0 %v332
    %2840 = vmatprep.subr.mxu0 %v337
    %2841 = vmatpush1.msra.mxu0 %v336
    %2842 = vmatprep.subr.mxu0 %v341
    %2843 = vmatpush1.msra.mxu0 %v340
    %2844 = vmatprep.subr.mxu0 %v345
    %2845 = vmatpush1.msra.mxu0 %v344
    %2846 = vmatprep.subr.mxu0 %v349
    %2847 = vmatpush1.msra.mxu0 %v348
    %2848 = vmatprep.subr.mxu0 0.0
    %2849 = vmatpush1.msra.mxu0 0.0
    %2850 = vmatprep.subr.mxu0 0.0
    %2851 = vmatpush1.msra.mxu0 0.0
    %2852 = vmatprep.subr.mxu0 0.0
    %2853 = vmatpush1.msra.mxu0 0.0
    %2854 = vmatprep.subr.mxu0 0.0
    %2855 = vmatpush1.msra.mxu0 0.0
    %2856 = vmatprep.subr.mxu0 0.0
    %2857 = vmatpush1.msra.mxu0 0.0
    %2858 = vmatprep.subr.mxu0 0.0
    %2859 = vmatpush1.msra.mxu0 0.0
    %2860 = vmatprep.subr.mxu0 0.0
    %2861 = vmatpush1.msra.mxu0 0.0
    %2862 = vmatprep.subr.mxu0 0.0
    %2863 = vmatpush1.msra.mxu0 0.0
    %2864 = vmatprep.subr.mxu0 0.0
    %2865 = vmatpush1.msra.mxu0 0.0
    %2866 = vmatprep.subr.mxu0 0.0
    %2867 = vmatpush1.msra.mxu0 0.0
    %2868 = vmatprep.subr.mxu0 0.0
    %2869 = vmatpush1.msra.mxu0 0.0
    %2870 = vmatprep.subr.mxu0 0.0
    %2871 = vmatpush1.msra.mxu0 0.0
    %2872 = vmatprep.subr.mxu0 0.0
    %2873 = vmatpush1.msra.mxu0 0.0
    %2874 = vmatprep.subr.mxu0 0.0
    %2875 = vmatpush1.msra.mxu0 0.0
    %2876 = vmatprep.subr.mxu0 0.0
    %2877 = vmatpush1.msra.mxu0 0.0
    %2878 = vmatprep.subr.mxu0 0.0
    %2879 = vmatpush1.msra.mxu0 0.0
    %2880 = vmatprep.subr.mxu0 0.0
    %2881 = vmatpush1.msra.mxu0 0.0
    %2882 = vmatprep.subr.mxu0 0.0
    %2883 = vmatpush1.msra.mxu0 0.0
    %2884 = vmatprep.mubr.f32.mxu0 0.0
    %2885 = vmatmul.mubr.f32.gmra.mrb[0].mxu0 %v2551
    %v2886 = vpop.f32.mrb[0].mxu0
    %v2887 = vadd.f32 0.0, %v2886
    %v2888 = vpop.f32.mrb[0].mxu0
    %v2889 = vadd.f32 0.0, %v2888
    %2890 = vdwg.mxu0
    %2893 = vrot.lane.b32.xlu0 %v2747, 32
    %v2894 = vpop.permute.xlu0 %2893
    %2895 = vrot.lane.b32.xlu0 %v2748, 32
    %v2896 = vpop.permute.xlu0 %2895
    %v2897 = vsel %vm811, %v2894, %v2896
    %v2898 = vsel %vm350, %v2897, 0
    %2900 = vmatprep.subr.mxu0 %v497
    %2901 = vmatpush1.msra.mxu0 %v496
    %2902 = vmatprep.subr.mxu0 %v501
    %2903 = vmatpush1.msra.mxu0 %v500
    %2904 = vmatprep.subr.mxu0 %v505
    %2905 = vmatpush1.msra.mxu0 %v504
    %2906 = vmatprep.subr.mxu0 %v509
    %2907 = vmatpush1.msra.mxu0 %v508
    %2908 = vmatprep.subr.mxu0 %v513
    %2909 = vmatpush1.msra.mxu0 %v512
    %2910 = vmatprep.subr.mxu0 %v517
    %2911 = vmatpush1.msra.mxu0 %v516
    %2912 = vmatprep.subr.mxu0 %v521
    %2913 = vmatpush1.msra.mxu0 %v520
    %2914 = vmatprep.subr.mxu0 %v525
    %2915 = vmatpush1.msra.mxu0 %v524
    %2916 = vmatprep.subr.mxu0 %v529
    %2917 = vmatpush1.msra.mxu0 %v528
    %2918 = vmatprep.subr.mxu0 %v533
    %2919 = vmatpush1.msra.mxu0 %v532
    %2920 = vmatprep.subr.mxu0 %v537
    %2921 = vmatpush1.msra.mxu0 %v536
    %2922 = vmatprep.subr.mxu0 %v541
    %2923 = vmatpush1.msra.mxu0 %v540
    %2924 = vmatprep.subr.mxu0 %v545
    %2925 = vmatpush1.msra.mxu0 %v544
    %2926 = vmatprep.subr.mxu0 %v549
    %2927 = vmatpush1.msra.mxu0 %v548
    %2928 = vmatprep.subr.mxu0 0.0
    %2929 = vmatpush1.msra.mxu0 0.0
    %2930 = vmatprep.subr.mxu0 0.0
    %2931 = vmatpush1.msra.mxu0 0.0
    %2932 = vmatprep.subr.mxu0 0.0
    %2933 = vmatpush1.msra.mxu0 0.0
    %2934 = vmatprep.subr.mxu0 0.0
    %2935 = vmatpush1.msra.mxu0 0.0
    %2936 = vmatprep.subr.mxu0 0.0
    %2937 = vmatpush1.msra.mxu0 0.0
    %2938 = vmatprep.subr.mxu0 0.0
    %2939 = vmatpush1.msra.mxu0 0.0
    %2940 = vmatprep.subr.mxu0 0.0
    %2941 = vmatpush1.msra.mxu0 0.0
    %2942 = vmatprep.subr.mxu0 0.0
    %2943 = vmatpush1.msra.mxu0 0.0
    %2944 = vmatprep.subr.mxu0 0.0
    %2945 = vmatpush1.msra.mxu0 0.0
    %2946 = vmatprep.subr.mxu0 0.0
    %2947 = vmatpush1.msra.mxu0 0.0
    %2948 = vmatprep.subr.mxu0 0.0
    %2949 = vmatpush1.msra.mxu0 0.0
    %2950 = vmatprep.subr.mxu0 0.0
    %2951 = vmatpush1.msra.mxu0 0.0
    %2952 = vmatprep.subr.mxu0 0.0
    %2953 = vmatpush1.msra.mxu0 0.0
    %2954 = vmatprep.subr.mxu0 0.0
    %2955 = vmatpush1.msra.mxu0 0.0
    %2956 = vmatprep.subr.mxu0 0.0
    %2957 = vmatpush1.msra.mxu0 0.0
    %2958 = vmatprep.subr.mxu0 0.0
    %2959 = vmatpush1.msra.mxu0 0.0
    %2960 = vmatprep.subr.mxu0 0.0
    %2961 = vmatpush1.msra.mxu0 0.0
    %2962 = vmatprep.subr.mxu0 0.0
    %2963 = vmatpush1.msra.mxu0 0.0
    %2964 = vmatprep.mubr.f32.mxu0 0.0
    %2965 = vmatmul.mubr.f32.gmra.mrb[0].mxu0 %v2898
    %v2966 = vpop.f32.mrb[0].mxu0
    %v2967 = vadd.f32 0.0, %v2966
    %v2968 = vpop.f32.mrb[0].mxu0
    %v2969 = vadd.f32 0.0, %v2968
    %2970 = vdwg.mxu0
    %2971 = vmatprep.subr.mxu0 %v499
    %2972 = vmatpush1.msra.mxu0 %v498
    %2973 = vmatprep.subr.mxu0 %v503
    %2974 = vmatpush1.msra.mxu0 %v502
    %2975 = vmatprep.subr.mxu0 %v507
    %2976 = vmatpush1.msra.mxu0 %v506
    %2977 = vmatprep.subr.mxu0 %v511
    %2978 = vmatpush1.msra.mxu0 %v510
    %2979 = vmatprep.subr.mxu0 %v515
    %2980 = vmatpush1.msra.mxu0 %v514
    %2981 = vmatprep.subr.mxu0 %v519
    %2982 = vmatpush1.msra.mxu0 %v518
    %2983 = vmatprep.subr.mxu0 %v523
    %2984 = vmatpush1.msra.mxu0 %v522
    %2985 = vmatprep.subr.mxu0 %v527
    %2986 = vmatpush1.msra.mxu0 %v526
    %2987 = vmatprep.subr.mxu0 %v531
    %2988 = vmatpush1.msra.mxu0 %v530
    %2989 = vmatprep.subr.mxu0 %v535
    %2990 = vmatpush1.msra.mxu0 %v534
    %2991 = vmatprep.subr.mxu0 %v539
    %2992 = vmatpush1.msra.mxu0 %v538
    %2993 = vmatprep.subr.mxu0 %v543
    %2994 = vmatpush1.msra.mxu0 %v542
    %2995 = vmatprep.subr.mxu0 %v547
    %2996 = vmatpush1.msra.mxu0 %v546
    %2997 = vmatprep.subr.mxu0 %v551
    %2998 = vmatpush1.msra.mxu0 %v550
    %2999 = vmatprep.subr.mxu0 0.0
    %3000 = vmatpush1.msra.mxu0 0.0
    %3001 = vmatprep.subr.mxu0 0.0
    %3002 = vmatpush1.msra.mxu0 0.0
    %3003 = vmatprep.subr.mxu0 0.0
    %3004 = vmatpush1.msra.mxu0 0.0
    %3005 = vmatprep.subr.mxu0 0.0
    %3006 = vmatpush1.msra.mxu0 0.0
    %3007 = vmatprep.subr.mxu0 0.0
    %3008 = vmatpush1.msra.mxu0 0.0
    %3009 = vmatprep.subr.mxu0 0.0
    %3010 = vmatpush1.msra.mxu0 0.0
    %3011 = vmatprep.subr.mxu0 0.0
    %3012 = vmatpush1.msra.mxu0 0.0
    %3013 = vmatprep.subr.mxu0 0.0
    %3014 = vmatpush1.msra.mxu0 0.0
    %3015 = vmatprep.subr.mxu0 0.0
    %3016 = vmatpush1.msra.mxu0 0.0
    %3017 = vmatprep.subr.mxu0 0.0
    %3018 = vmatpush1.msra.mxu0 0.0
    %3019 = vmatprep.subr.mxu0 0.0
    %3020 = vmatpush1.msra.mxu0 0.0
    %3021 = vmatprep.subr.mxu0 0.0
    %3022 = vmatpush1.msra.mxu0 0.0
    %3023 = vmatprep.subr.mxu0 0.0
    %3024 = vmatpush1.msra.mxu0 0.0
    %3025 = vmatprep.subr.mxu0 0.0
    %3026 = vmatpush1.msra.mxu0 0.0
    %3027 = vmatprep.subr.mxu0 0.0
    %3028 = vmatpush1.msra.mxu0 0.0
    %3029 = vmatprep.subr.mxu0 0.0
    %3030 = vmatpush1.msra.mxu0 0.0
    %3031 = vmatprep.subr.mxu0 0.0
    %3032 = vmatpush1.msra.mxu0 0.0
    %3033 = vmatprep.subr.mxu0 0.0
    %3034 = vmatpush1.msra.mxu0 0.0
    %3035 = vmatprep.mubr.f32.mxu0 0.0
    %3036 = vmatmul.mubr.f32.gmra.mrb[0].mxu0 %v2898
    %v3037 = vpop.f32.mrb[0].mxu0
    %v3038 = vadd.f32 0.0, %v3037
    %v3039 = vpop.f32.mrb[0].mxu0
    %v3040 = vadd.f32 0.0, %v3039
    %3041 = vdwg.mxu0
    %v3042 = vadd.f32 %v213, %v2816
    %v3043 = vadd.f32 %v215, %v2818
    %v3044 = vadd.f32 %v290, %v2887
    %v3045 = vadd.f32 %v292, %v2889
    %v3046 = vxor.u32 %v3042, 2147483648
    %v3047 = vxor.u32 %v3043, 2147483648
    %v3048 = vxor.u32 %v3044, 2147483648
    %v3049 = vmul.f32 %v3046, 1.442695
    %v3050 = vpow.pop %v3049
    %v3051 = vmul.f32 %v3047, 1.442695
    %v3052 = vpow.pop %v3051
    %v3053 = vmul.f32 %v3048, 1.442695
    %v3054 = vpow.pop %v3053
    %v3055 = vadd.f32 %v3050, 1.0
    %v3056 = vadd.f32 %v3052, 1.0
    %v3057 = vadd.f32 %v3054, 1.0
    %v3058 = vrcp.pop %v3055
    %v3059 = vmul.f32 1.0, %v3058
    %v3060 = vrcp.pop %v3056
    %v3061 = vmul.f32 1.0, %v3060
    %v3062 = vrcp.pop %v3057
    %v3063 = vmul.f32 1.0, %v3062
    %v3064 = vtanh.pop %v3044
    %v3065 = vtanh.pop %v3045
    %v3068 = vrot.slane %v2527, 6
    %v3069 = vrot.slane %v2528, 6
    %v3072 = vmul.f32 %v3059, %v3068
    %v3073 = vmul.f32 %v3061, %v3069
    %3076 = vrot.lane.b32.xlu0 %v3064, 48
    %v3077 = vpop.permute.xlu0 %3076
    %3078 = vrot.lane.b32.xlu0 %v3065, 48
    %v3079 = vpop.permute.xlu0 %3078
    %v3080 = vsel %vm726, %v3077, %v3079
    %v3082 = vmul.f32 %v3059, %v3080
    %3084 = vrot.lane.b32.xlu0 %v3082, 112
    %v3085 = vpop.permute.xlu0 %3084
    %v3087 = vadd.f32 %v3072, %v3085
    %v3088 = vadd.f32 %v3073, %v3085
    %v3089 = vtanh.pop %v3087
    %v3090 = vtanh.pop %v3088
    %3093 = vrot.lane.b32.xlu0 %v3089, 112
    %v3094 = vpop.permute.xlu0 %3093
    %3095 = vrot.lane.b32.xlu0 %v3090, 112
    %v3096 = vpop.permute.xlu0 %3095
    %v3097 = vsel %vm350, %v3094, %v3096
    %v3100 = vmul.f32 %v3061, %v3097
    %v3101 = vmul.f32 %v3063, %v3096
    %3104 = vrot.lane.b32.xlu0 %v3100, 32
    %v3105 = vpop.permute.xlu0 %3104
    %3106 = vrot.lane.b32.xlu0 %v3101, 32
    %v3107 = vpop.permute.xlu0 %3106
    %v3108 = vsel %vm811, %v3105, %v3107
    %v3109 = vsel %vm350, %v3108, 0
    %3111 = vmatprep.subr.mxu0 %v750
    %3112 = vmatpush1.msra.mxu0 %v749
    %3113 = vmatprep.subr.mxu0 %v754
    %3114 = vmatpush1.msra.mxu0 %v753
    %3115 = vmatprep.subr.mxu0 %v758
    %3116 = vmatpush1.msra.mxu0 %v757
    %3117 = vmatprep.subr.mxu0 %v762
    %3118 = vmatpush1.msra.mxu0 %v761
    %3119 = vmatprep.subr.mxu0 %v766
    %3120 = vmatpush1.msra.mxu0 %v765
    %3121 = vmatprep.subr.mxu0 %v770
    %3122 = vmatpush1.msra.mxu0 %v769
    %3123 = vmatprep.subr.mxu0 %v774
    %3124 = vmatpush1.msra.mxu0 %v773
    %3125 = vmatprep.subr.mxu0 %v778
    %3126 = vmatpush1.msra.mxu0 %v777
    %3127 = vmatprep.subr.mxu0 %v782
    %3128 = vmatpush1.msra.mxu0 %v781
    %3129 = vmatprep.subr.mxu0 %v786
    %3130 = vmatpush1.msra.mxu0 %v785
    %3131 = vmatprep.subr.mxu0 %v790
    %3132 = vmatpush1.msra.mxu0 %v789
    %3133 = vmatprep.subr.mxu0 %v794
    %3134 = vmatpush1.msra.mxu0 %v793
    %3135 = vmatprep.subr.mxu0 %v798
    %3136 = vmatpush1.msra.mxu0 %v797
    %3137 = vmatprep.subr.mxu0 %v802
    %3138 = vmatpush1.msra.mxu0 %v801
    %3139 = vmatprep.subr.mxu0 0.0
    %3140 = vmatpush1.msra.mxu0 0.0
    %3141 = vmatprep.subr.mxu0 0.0
    %3142 = vmatpush1.msra.mxu0 0.0
    %3143 = vmatprep.subr.mxu0 0.0
    %3144 = vmatpush1.msra.mxu0 0.0
    %3145 = vmatprep.subr.mxu0 0.0
    %3146 = vmatpush1.msra.mxu0 0.0
    %3147 = vmatprep.subr.mxu0 0.0
    %3148 = vmatpush1.msra.mxu0 0.0
    %3149 = vmatprep.subr.mxu0 0.0
    %3150 = vmatpush1.msra.mxu0 0.0
    %3151 = vmatprep.subr.mxu0 0.0
    %3152 = vmatpush1.msra.mxu0 0.0
    %3153 = vmatprep.subr.mxu0 0.0
    %3154 = vmatpush1.msra.mxu0 0.0
    %3155 = vmatprep.subr.mxu0 0.0
    %3156 = vmatpush1.msra.mxu0 0.0
    %3157 = vmatprep.subr.mxu0 0.0
    %3158 = vmatpush1.msra.mxu0 0.0
    %3159 = vmatprep.subr.mxu0 0.0
    %3160 = vmatpush1.msra.mxu0 0.0
    %3161 = vmatprep.subr.mxu0 0.0
    %3162 = vmatpush1.msra.mxu0 0.0
    %3163 = vmatprep.subr.mxu0 0.0
    %3164 = vmatpush1.msra.mxu0 0.0
    %3165 = vmatprep.subr.mxu0 0.0
    %3166 = vmatpush1.msra.mxu0 0.0
    %3167 = vmatprep.subr.mxu0 0.0
    %3168 = vmatpush1.msra.mxu0 0.0
    %3169 = vmatprep.subr.mxu0 0.0
    %3170 = vmatpush1.msra.mxu0 0.0
    %3171 = vmatprep.subr.mxu0 0.0
    %3172 = vmatpush1.msra.mxu0 0.0
    %3173 = vmatprep.subr.mxu0 0.0
    %3174 = vmatpush1.msra.mxu0 0.0
    %3175 = vmatprep.mubr.f32.mxu0 0.0
    %3176 = vmatmul.mubr.f32.gmra.mrb[0].mxu0 %v3109
    %v3177 = vpop.f32.mrb[0].mxu0
    %v3178 = vadd.f32 %v2967, %v3177
    %v3179 = vpop.f32.mrb[0].mxu0
    %v3180 = vadd.f32 %v2969, %v3179
    %3181 = vdwg.mxu0
    %3182 = vmatprep.subr.mxu0 %v752
    %3183 = vmatpush1.msra.mxu0 %v751
    %3184 = vmatprep.subr.mxu0 %v756
    %3185 = vmatpush1.msra.mxu0 %v755
    %3186 = vmatprep.subr.mxu0 %v760
    %3187 = vmatpush1.msra.mxu0 %v759
    %3188 = vmatprep.subr.mxu0 %v764
    %3189 = vmatpush1.msra.mxu0 %v763
    %3190 = vmatprep.subr.mxu0 %v768
    %3191 = vmatpush1.msra.mxu0 %v767
    %3192 = vmatprep.subr.mxu0 %v772
    %3193 = vmatpush1.msra.mxu0 %v771
    %3194 = vmatprep.subr.mxu0 %v776
    %3195 = vmatpush1.msra.mxu0 %v775
    %3196 = vmatprep.subr.mxu0 %v780
    %3197 = vmatpush1.msra.mxu0 %v779
    %3198 = vmatprep.subr.mxu0 %v784
    %3199 = vmatpush1.msra.mxu0 %v783
    %3200 = vmatprep.subr.mxu0 %v788
    %3201 = vmatpush1.msra.mxu0 %v787
    %3202 = vmatprep.subr.mxu0 %v792
    %3203 = vmatpush1.msra.mxu0 %v791
    %3204 = vmatprep.subr.mxu0 %v796
    %3205 = vmatpush1.msra.mxu0 %v795
    %3206 = vmatprep.subr.mxu0 %v800
    %3207 = vmatpush1.msra.mxu0 %v799
    %3208 = vmatprep.subr.mxu0 %v804
    %3209 = vmatpush1.msra.mxu0 %v803
    %3210 = vmatprep.subr.mxu0 0.0
    %3211 = vmatpush1.msra.mxu0 0.0
    %3212 = vmatprep.subr.mxu0 0.0
    %3213 = vmatpush1.msra.mxu0 0.0
    %3214 = vmatprep.subr.mxu0 0.0
    %3215 = vmatpush1.msra.mxu0 0.0
    %3216 = vmatprep.subr.mxu0 0.0
    %3217 = vmatpush1.msra.mxu0 0.0
    %3218 = vmatprep.subr.mxu0 0.0
    %3219 = vmatpush1.msra.mxu0 0.0
    %3220 = vmatprep.subr.mxu0 0.0
    %3221 = vmatpush1.msra.mxu0 0.0
    %3222 = vmatprep.subr.mxu0 0.0
    %3223 = vmatpush1.msra.mxu0 0.0
    %3224 = vmatprep.subr.mxu0 0.0
    %3225 = vmatpush1.msra.mxu0 0.0
    %3226 = vmatprep.subr.mxu0 0.0
    %3227 = vmatpush1.msra.mxu0 0.0
    %3228 = vmatprep.subr.mxu0 0.0
    %3229 = vmatpush1.msra.mxu0 0.0
    %3230 = vmatprep.subr.mxu0 0.0
    %3231 = vmatpush1.msra.mxu0 0.0
    %3232 = vmatprep.subr.mxu0 0.0
    %3233 = vmatpush1.msra.mxu0 0.0
    %3234 = vmatprep.subr.mxu0 0.0
    %3235 = vmatpush1.msra.mxu0 0.0
    %3236 = vmatprep.subr.mxu0 0.0
    %3237 = vmatpush1.msra.mxu0 0.0
    %3238 = vmatprep.subr.mxu0 0.0
    %3239 = vmatpush1.msra.mxu0 0.0
    %3240 = vmatprep.subr.mxu0 0.0
    %3241 = vmatpush1.msra.mxu0 0.0
    %3242 = vmatprep.subr.mxu0 0.0
    %3243 = vmatpush1.msra.mxu0 0.0
    %3244 = vmatprep.subr.mxu0 0.0
    %3245 = vmatpush1.msra.mxu0 0.0
    %3246 = vmatprep.mubr.f32.mxu0 0.0
    %3247 = vmatmul.mubr.f32.gmra.mrb[0].mxu0 %v3109
    %v3248 = vpop.f32.mrb[0].mxu0
    %v3249 = vadd.f32 %v3038, %v3248
    %v3250 = vpop.f32.mrb[0].mxu0
    %v3251 = vadd.f32 %v3040, %v3250
    %3252 = vdwg.mxu0
    %v3253 = vadd.f32 %v3178, %v962
    %v3254 = vadd.f32 %v3180, %v966
    %v3255 = vadd.f32 %v3249, %v970
    %v3256 = vadd.f32 %v3251, %v974
    %v3257 = vxor.u32 %v3253, 2147483648
    %v3258 = vxor.u32 %v3254, 2147483648
    %v3259 = vxor.u32 %v3255, 2147483648
    %v3260 = vmul.f32 %v3257, 1.442695
    %v3261 = vpow.pop %v3260
    %v3262 = vmul.f32 %v3258, 1.442695
    %v3263 = vpow.pop %v3262
    %v3264 = vmul.f32 %v3259, 1.442695
    %v3265 = vpow.pop %v3264
    %v3266 = vadd.f32 %v3261, 1.0
    %v3267 = vadd.f32 %v3263, 1.0
    %v3268 = vadd.f32 %v3265, 1.0
    %v3269 = vrcp.pop %v3266
    %v3270 = vmul.f32 1.0, %v3269
    %v3271 = vrcp.pop %v3267
    %v3272 = vmul.f32 1.0, %v3271
    %v3273 = vrcp.pop %v3268
    %v3274 = vmul.f32 1.0, %v3273
    %v3275 = vtanh.pop %v3255
    %v3276 = vtanh.pop %v3256
    %v3277 = vmul.f32 %v3270, %v2734
    %v3278 = vmul.f32 %v3272, %v2735
    %3281 = vrot.lane.b32.xlu0 %v3275, 48
    %v3282 = vpop.permute.xlu0 %3281
    %3283 = vrot.lane.b32.xlu0 %v3276, 48
    %v3284 = vpop.permute.xlu0 %3283
    %v3285 = vsel %vm726, %v3282, %v3284
    %v3287 = vmul.f32 %v3270, %v3285
    %3289 = vrot.lane.b32.xlu0 %v3287, 112
    %v3290 = vpop.permute.xlu0 %3289
    %v3292 = vadd.f32 %v3277, %v3290
    %v3293 = vadd.f32 %v3278, %v3290
    %v3294 = vtanh.pop %v3292
    %v3295 = vtanh.pop %v3293
    %3298 = vrot.lane.b32.xlu0 %v3294, 112
    %v3299 = vpop.permute.xlu0 %3298
    %3300 = vrot.lane.b32.xlu0 %v3295, 112
    %v3301 = vpop.permute.xlu0 %3300
    %v3302 = vsel %vm350, %v3299, %v3301
    %v3305 = vmul.f32 %v3272, %v3302
    %v3306 = vmul.f32 %v3274, %v3301
    %3307 = vmatprep.subr.mxu0 %v295
    %3308 = vmatpush1.msra.mxu0 %v294
    %3309 = vmatprep.subr.mxu0 %v299
    %3310 = vmatpush1.msra.mxu0 %v298
    %3311 = vmatprep.subr.mxu0 %v303
    %3312 = vmatpush1.msra.mxu0 %v302
    %3313 = vmatprep.subr.mxu0 %v307
    %3314 = vmatpush1.msra.mxu0 %v306
    %3315 = vmatprep.subr.mxu0 %v311
    %3316 = vmatpush1.msra.mxu0 %v310
    %3317 = vmatprep.subr.mxu0 %v315
    %3318 = vmatpush1.msra.mxu0 %v314
    %3319 = vmatprep.subr.mxu0 %v319
    %3320 = vmatpush1.msra.mxu0 %v318
    %3321 = vmatprep.subr.mxu0 %v323
    %3322 = vmatpush1.msra.mxu0 %v322
    %3323 = vmatprep.subr.mxu0 %v327
    %3324 = vmatpush1.msra.mxu0 %v326
    %3325 = vmatprep.subr.mxu0 %v331
    %3326 = vmatpush1.msra.mxu0 %v330
    %3327 = vmatprep.subr.mxu0 %v335
    %3328 = vmatpush1.msra.mxu0 %v334
    %3329 = vmatprep.subr.mxu0 %v339
    %3330 = vmatpush1.msra.mxu0 %v338
    %3331 = vmatprep.subr.mxu0 %v343
    %3332 = vmatpush1.msra.mxu0 %v342
    %3333 = vmatprep.subr.mxu0 %v347
    %3334 = vmatpush1.msra.mxu0 %v346
    %3335 = vmatprep.subr.mxu0 0.0
    %3336 = vmatpush1.msra.mxu0 0.0
    %3337 = vmatprep.subr.mxu0 0.0
    %3338 = vmatpush1.msra.mxu0 0.0
    %3339 = vmatprep.subr.mxu0 0.0
    %3340 = vmatpush1.msra.mxu0 0.0
    %3341 = vmatprep.subr.mxu0 0.0
    %3342 = vmatpush1.msra.mxu0 0.0
    %3343 = vmatprep.subr.mxu0 0.0
    %3344 = vmatpush1.msra.mxu0 0.0
    %3345 = vmatprep.subr.mxu0 0.0
    %3346 = vmatpush1.msra.mxu0 0.0
    %3347 = vmatprep.subr.mxu0 0.0
    %3348 = vmatpush1.msra.mxu0 0.0
    %3349 = vmatprep.subr.mxu0 0.0
    %3350 = vmatpush1.msra.mxu0 0.0
    %3351 = vmatprep.subr.mxu0 0.0
    %3352 = vmatpush1.msra.mxu0 0.0
    %3353 = vmatprep.subr.mxu0 0.0
    %3354 = vmatpush1.msra.mxu0 0.0
    %3355 = vmatprep.subr.mxu0 0.0
    %3356 = vmatpush1.msra.mxu0 0.0
    %3357 = vmatprep.subr.mxu0 0.0
    %3358 = vmatpush1.msra.mxu0 0.0
    %3359 = vmatprep.subr.mxu0 0.0
    %3360 = vmatpush1.msra.mxu0 0.0
    %3361 = vmatprep.subr.mxu0 0.0
    %3362 = vmatpush1.msra.mxu0 0.0
    %3363 = vmatprep.subr.mxu0 0.0
    %3364 = vmatpush1.msra.mxu0 0.0
    %3365 = vmatprep.subr.mxu0 0.0
    %3366 = vmatpush1.msra.mxu0 0.0
    %3367 = vmatprep.subr.mxu0 0.0
    %3368 = vmatpush1.msra.mxu0 0.0
    %3369 = vmatprep.subr.mxu0 0.0
    %3370 = vmatpush1.msra.mxu0 0.0
    %3371 = vmatprep.mubr.f32.mxu0 0.0
    %3372 = vmatmul.mubr.f32.gmra.mrb[0].mxu0 %v3109
    %v3373 = vpop.f32.mrb[0].mxu0
    %v3374 = vadd.f32 0.0, %v3373
    %v3375 = vpop.f32.mrb[0].mxu0
    %v3376 = vadd.f32 0.0, %v3375
    %3377 = vdwg.mxu0
    %3378 = vmatprep.subr.mxu0 %v297
    %3379 = vmatpush1.msra.mxu0 %v296
    %3380 = vmatprep.subr.mxu0 %v301
    %3381 = vmatpush1.msra.mxu0 %v300
    %3382 = vmatprep.subr.mxu0 %v305
    %3383 = vmatpush1.msra.mxu0 %v304
    %3384 = vmatprep.subr.mxu0 %v309
    %3385 = vmatpush1.msra.mxu0 %v308
    %3386 = vmatprep.subr.mxu0 %v313
    %3387 = vmatpush1.msra.mxu0 %v312
    %3388 = vmatprep.subr.mxu0 %v317
    %3389 = vmatpush1.msra.mxu0 %v316
    %3390 = vmatprep.subr.mxu0 %v321
    %3391 = vmatpush1.msra.mxu0 %v320
    %3392 = vmatprep.subr.mxu0 %v325
    %3393 = vmatpush1.msra.mxu0 %v324
    %3394 = vmatprep.subr.mxu0 %v329
    %3395 = vmatpush1.msra.mxu0 %v328
    %3396 = vmatprep.subr.mxu0 %v333
    %3397 = vmatpush1.msra.mxu0 %v332
    %3398 = vmatprep.subr.mxu0 %v337
    %3399 = vmatpush1.msra.mxu0 %v336
    %3400 = vmatprep.subr.mxu0 %v341
    %3401 = vmatpush1.msra.mxu0 %v340
    %3402 = vmatprep.subr.mxu0 %v345
    %3403 = vmatpush1.msra.mxu0 %v344
    %3404 = vmatprep.subr.mxu0 %v349
    %3405 = vmatpush1.msra.mxu0 %v348
    %3406 = vmatprep.subr.mxu0 0.0
    %3407 = vmatpush1.msra.mxu0 0.0
    %3408 = vmatprep.subr.mxu0 0.0
    %3409 = vmatpush1.msra.mxu0 0.0
    %3410 = vmatprep.subr.mxu0 0.0
    %3411 = vmatpush1.msra.mxu0 0.0
    %3412 = vmatprep.subr.mxu0 0.0
    %3413 = vmatpush1.msra.mxu0 0.0
    %3414 = vmatprep.subr.mxu0 0.0
    %3415 = vmatpush1.msra.mxu0 0.0
    %3416 = vmatprep.subr.mxu0 0.0
    %3417 = vmatpush1.msra.mxu0 0.0
    %3418 = vmatprep.subr.mxu0 0.0
    %3419 = vmatpush1.msra.mxu0 0.0
    %3420 = vmatprep.subr.mxu0 0.0
    %3421 = vmatpush1.msra.mxu0 0.0
    %3422 = vmatprep.subr.mxu0 0.0
    %3423 = vmatpush1.msra.mxu0 0.0
    %3424 = vmatprep.subr.mxu0 0.0
    %3425 = vmatpush1.msra.mxu0 0.0
    %3426 = vmatprep.subr.mxu0 0.0
    %3427 = vmatpush1.msra.mxu0 0.0
    %3428 = vmatprep.subr.mxu0 0.0
    %3429 = vmatpush1.msra.mxu0 0.0
    %3430 = vmatprep.subr.mxu0 0.0
    %3431 = vmatpush1.msra.mxu0 0.0
    %3432 = vmatprep.subr.mxu0 0.0
    %3433 = vmatpush1.msra.mxu0 0.0
    %3434 = vmatprep.subr.mxu0 0.0
    %3435 = vmatpush1.msra.mxu0 0.0
    %3436 = vmatprep.subr.mxu0 0.0
    %3437 = vmatpush1.msra.mxu0 0.0
    %3438 = vmatprep.subr.mxu0 0.0
    %3439 = vmatpush1.msra.mxu0 0.0
    %3440 = vmatprep.subr.mxu0 0.0
    %3441 = vmatpush1.msra.mxu0 0.0
    %3442 = vmatprep.mubr.f32.mxu0 0.0
    %3443 = vmatmul.mubr.f32.gmra.mrb[0].mxu0 %v3109
    %v3444 = vpop.f32.mrb[0].mxu0
    %v3445 = vadd.f32 0.0, %v3444
    %v3446 = vpop.f32.mrb[0].mxu0
    %v3447 = vadd.f32 0.0, %v3446
    %3448 = vdwg.mxu0
    %3451 = vrot.lane.b32.xlu0 %v3305, 32
    %v3452 = vpop.permute.xlu0 %3451
    %3453 = vrot.lane.b32.xlu0 %v3306, 32
    %v3454 = vpop.permute.xlu0 %3453
    %v3455 = vsel %vm811, %v3452, %v3454
    %v3456 = vsel %vm350, %v3455, 0
    %3458 = vmatprep.subr.mxu0 %v497
    %3459 = vmatpush1.msra.mxu0 %v496
    %3460 = vmatprep.subr.mxu0 %v501
    %3461 = vmatpush1.msra.mxu0 %v500
    %3462 = vmatprep.subr.mxu0 %v505
    %3463 = vmatpush1.msra.mxu0 %v504
    %3464 = vmatprep.subr.mxu0 %v509
    %3465 = vmatpush1.msra.mxu0 %v508
    %3466 = vmatprep.subr.mxu0 %v513
    %3467 = vmatpush1.msra.mxu0 %v512
    %3468 = vmatprep.subr.mxu0 %v517
    %3469 = vmatpush1.msra.mxu0 %v516
    %3470 = vmatprep.subr.mxu0 %v521
    %3471 = vmatpush1.msra.mxu0 %v520
    %3472 = vmatprep.subr.mxu0 %v525
    %3473 = vmatpush1.msra.mxu0 %v524
    %3474 = vmatprep.subr.mxu0 %v529
    %3475 = vmatpush1.msra.mxu0 %v528
    %3476 = vmatprep.subr.mxu0 %v533
    %3477 = vmatpush1.msra.mxu0 %v532
    %3478 = vmatprep.subr.mxu0 %v537
    %3479 = vmatpush1.msra.mxu0 %v536
    %3480 = vmatprep.subr.mxu0 %v541
    %3481 = vmatpush1.msra.mxu0 %v540
    %3482 = vmatprep.subr.mxu0 %v545
    %3483 = vmatpush1.msra.mxu0 %v544
    %3484 = vmatprep.subr.mxu0 %v549
    %3485 = vmatpush1.msra.mxu0 %v548
    %3486 = vmatprep.subr.mxu0 0.0
    %3487 = vmatpush1.msra.mxu0 0.0
    %3488 = vmatprep.subr.mxu0 0.0
    %3489 = vmatpush1.msra.mxu0 0.0
    %3490 = vmatprep.subr.mxu0 0.0
    %3491 = vmatpush1.msra.mxu0 0.0
    %3492 = vmatprep.subr.mxu0 0.0
    %3493 = vmatpush1.msra.mxu0 0.0
    %3494 = vmatprep.subr.mxu0 0.0
    %3495 = vmatpush1.msra.mxu0 0.0
    %3496 = vmatprep.subr.mxu0 0.0
    %3497 = vmatpush1.msra.mxu0 0.0
    %3498 = vmatprep.subr.mxu0 0.0
    %3499 = vmatpush1.msra.mxu0 0.0
    %3500 = vmatprep.subr.mxu0 0.0
    %3501 = vmatpush1.msra.mxu0 0.0
    %3502 = vmatprep.subr.mxu0 0.0
    %3503 = vmatpush1.msra.mxu0 0.0
    %3504 = vmatprep.subr.mxu0 0.0
    %3505 = vmatpush1.msra.mxu0 0.0
    %3506 = vmatprep.subr.mxu0 0.0
    %3507 = vmatpush1.msra.mxu0 0.0
    %3508 = vmatprep.subr.mxu0 0.0
    %3509 = vmatpush1.msra.mxu0 0.0
    %3510 = vmatprep.subr.mxu0 0.0
    %3511 = vmatpush1.msra.mxu0 0.0
    %3512 = vmatprep.subr.mxu0 0.0
    %3513 = vmatpush1.msra.mxu0 0.0
    %3514 = vmatprep.subr.mxu0 0.0
    %3515 = vmatpush1.msra.mxu0 0.0
    %3516 = vmatprep.subr.mxu0 0.0
    %3517 = vmatpush1.msra.mxu0 0.0
    %3518 = vmatprep.subr.mxu0 0.0
    %3519 = vmatpush1.msra.mxu0 0.0
    %3520 = vmatprep.subr.mxu0 0.0
    %3521 = vmatpush1.msra.mxu0 0.0
    %3522 = vmatprep.mubr.f32.mxu0 0.0
    %3523 = vmatmul.mubr.f32.gmra.mrb[0].mxu0 %v3456
    %v3524 = vpop.f32.mrb[0].mxu0
    %v3525 = vadd.f32 0.0, %v3524
    %v3526 = vpop.f32.mrb[0].mxu0
    %v3527 = vadd.f32 0.0, %v3526
    %3528 = vdwg.mxu0
    %3529 = vmatprep.subr.mxu0 %v499
    %3530 = vmatpush1.msra.mxu0 %v498
    %3531 = vmatprep.subr.mxu0 %v503
    %3532 = vmatpush1.msra.mxu0 %v502
    %3533 = vmatprep.subr.mxu0 %v507
    %3534 = vmatpush1.msra.mxu0 %v506
    %3535 = vmatprep.subr.mxu0 %v511
    %3536 = vmatpush1.msra.mxu0 %v510
    %3537 = vmatprep.subr.mxu0 %v515
    %3538 = vmatpush1.msra.mxu0 %v514
    %3539 = vmatprep.subr.mxu0 %v519
    %3540 = vmatpush1.msra.mxu0 %v518
    %3541 = vmatprep.subr.mxu0 %v523
    %3542 = vmatpush1.msra.mxu0 %v522
    %3543 = vmatprep.subr.mxu0 %v527
    %3544 = vmatpush1.msra.mxu0 %v526
    %3545 = vmatprep.subr.mxu0 %v531
    %3546 = vmatpush1.msra.mxu0 %v530
    %3547 = vmatprep.subr.mxu0 %v535
    %3548 = vmatpush1.msra.mxu0 %v534
    %3549 = vmatprep.subr.mxu0 %v539
    %3550 = vmatpush1.msra.mxu0 %v538
    %3551 = vmatprep.subr.mxu0 %v543
    %3552 = vmatpush1.msra.mxu0 %v542
    %3553 = vmatprep.subr.mxu0 %v547
    %3554 = vmatpush1.msra.mxu0 %v546
    %3555 = vmatprep.subr.mxu0 %v551
    %3556 = vmatpush1.msra.mxu0 %v550
    %3557 = vmatprep.subr.mxu0 0.0
    %3558 = vmatpush1.msra.mxu0 0.0
    %3559 = vmatprep.subr.mxu0 0.0
    %3560 = vmatpush1.msra.mxu0 0.0
    %3561 = vmatprep.subr.mxu0 0.0
    %3562 = vmatpush1.msra.mxu0 0.0
    %3563 = vmatprep.subr.mxu0 0.0
    %3564 = vmatpush1.msra.mxu0 0.0
    %3565 = vmatprep.subr.mxu0 0.0
    %3566 = vmatpush1.msra.mxu0 0.0
    %3567 = vmatprep.subr.mxu0 0.0
    %3568 = vmatpush1.msra.mxu0 0.0
    %3569 = vmatprep.subr.mxu0 0.0
    %3570 = vmatpush1.msra.mxu0 0.0
    %3571 = vmatprep.subr.mxu0 0.0
    %3572 = vmatpush1.msra.mxu0 0.0
    %3573 = vmatprep.subr.mxu0 0.0
    %3574 = vmatpush1.msra.mxu0 0.0
    %3575 = vmatprep.subr.mxu0 0.0
    %3576 = vmatpush1.msra.mxu0 0.0
    %3577 = vmatprep.subr.mxu0 0.0
    %3578 = vmatpush1.msra.mxu0 0.0
    %3579 = vmatprep.subr.mxu0 0.0
    %3580 = vmatpush1.msra.mxu0 0.0
    %3581 = vmatprep.subr.mxu0 0.0
    %3582 = vmatpush1.msra.mxu0 0.0
    %3583 = vmatprep.subr.mxu0 0.0
    %3584 = vmatpush1.msra.mxu0 0.0
    %3585 = vmatprep.subr.mxu0 0.0
    %3586 = vmatpush1.msra.mxu0 0.0
    %3587 = vmatprep.subr.mxu0 0.0
    %3588 = vmatpush1.msra.mxu0 0.0
    %3589 = vmatprep.subr.mxu0 0.0
    %3590 = vmatpush1.msra.mxu0 0.0
    %3591 = vmatprep.subr.mxu0 0.0
    %3592 = vmatpush1.msra.mxu0 0.0
    %3593 = vmatprep.mubr.f32.mxu0 0.0
    %3594 = vmatmul.mubr.f32.gmra.mrb[0].mxu0 %v3456
    %v3595 = vpop.f32.mrb[0].mxu0
    %v3596 = vadd.f32 0.0, %v3595
    %v3597 = vpop.f32.mrb[0].mxu0
    %v3598 = vadd.f32 0.0, %v3597
    %3599 = vdwg.mxu0
    %v3604 = vrot.slane %v3374, 6
    %v3605 = vrot.slane %v3376, 6
    %v3606 = vrot.slane %v3445, 6
    %v3607 = vrot.slane %v3447, 6
    %v3612 = vadd.f32 %v213, %v3604
    %v3613 = vadd.f32 %v215, %v3605
    %v3614 = vadd.f32 %v290, %v3606
    %v3615 = vadd.f32 %v292, %v3607
    %v3616 = vxor.u32 %v3612, 2147483648
    %v3617 = vxor.u32 %v3613, 2147483648
    %v3618 = vxor.u32 %v3614, 2147483648
    %v3619 = vmul.f32 %v3616, 1.442695
    %v3620 = vpow.pop %v3619
    %v3621 = vmul.f32 %v3617, 1.442695
    %v3622 = vpow.pop %v3621
    %v3623 = vmul.f32 %v3618, 1.442695
    %v3624 = vpow.pop %v3623
    %v3625 = vadd.f32 %v3620, 1.0
    %v3626 = vadd.f32 %v3622, 1.0
    %v3627 = vadd.f32 %v3624, 1.0
    %v3628 = vrcp.pop %v3625
    %v3629 = vmul.f32 1.0, %v3628
    %v3630 = vrcp.pop %v3626
    %v3631 = vmul.f32 1.0, %v3630
    %v3632 = vrcp.pop %v3627
    %v3633 = vmul.f32 1.0, %v3632
    %v3634 = vtanh.pop %v3614
    %v3635 = vtanh.pop %v3615
    %v3638 = vrot.slane %v3087, 6
    %v3639 = vrot.slane %v3088, 6
    %v3642 = vmul.f32 %v3629, %v3638
    %v3643 = vmul.f32 %v3631, %v3639
    %3646 = vrot.lane.b32.xlu0 %v3634, 48
    %v3647 = vpop.permute.xlu0 %3646
    %3648 = vrot.lane.b32.xlu0 %v3635, 48
    %v3649 = vpop.permute.xlu0 %3648
    %v3650 = vsel %vm726, %v3647, %v3649
    %v3652 = vmul.f32 %v3629, %v3650
    %3654 = vrot.lane.b32.xlu0 %v3652, 112
    %v3655 = vpop.permute.xlu0 %3654
    %v3657 = vadd.f32 %v3642, %v3655
    %v3658 = vadd.f32 %v3643, %v3655
    %v3659 = vtanh.pop %v3657
    %v3660 = vtanh.pop %v3658
    %3663 = vrot.lane.b32.xlu0 %v3659, 112
    %v3664 = vpop.permute.xlu0 %3663
    %3665 = vrot.lane.b32.xlu0 %v3660, 112
    %v3666 = vpop.permute.xlu0 %3665
    %v3667 = vsel %vm350, %v3664, %v3666
    %v3670 = vmul.f32 %v3631, %v3667
    %v3671 = vmul.f32 %v3633, %v3666
    %v3674 = vrot.slane %v3670, 2
    %v3675 = vrot.slane %v3671, 2
    %3676 = vrot.lane.b32.xlu0 %v3674, 32
    %v3677 = vpop.permute.xlu0 %3676
    %3678 = vrot.lane.b32.xlu0 %v3675, 32
    %v3679 = vpop.permute.xlu0 %3678
    %v3680 = vsel %vm811, %v3677, %v3679
    %v3681 = vsel %vm350, %v3680, 0
    %3683 = vmatprep.subr.mxu0 %v750
    %3684 = vmatpush1.msra.mxu0 %v749
    %3685 = vmatprep.subr.mxu0 %v754
    %3686 = vmatpush1.msra.mxu0 %v753
    %3687 = vmatprep.subr.mxu0 %v758
    %3688 = vmatpush1.msra.mxu0 %v757
    %3689 = vmatprep.subr.mxu0 %v762
    %3690 = vmatpush1.msra.mxu0 %v761
    %3691 = vmatprep.subr.mxu0 %v766
    %3692 = vmatpush1.msra.mxu0 %v765
    %3693 = vmatprep.subr.mxu0 %v770
    %3694 = vmatpush1.msra.mxu0 %v769
    %3695 = vmatprep.subr.mxu0 %v774
    %3696 = vmatpush1.msra.mxu0 %v773
    %3697 = vmatprep.subr.mxu0 %v778
    %3698 = vmatpush1.msra.mxu0 %v777
    %3699 = vmatprep.subr.mxu0 %v782
    %3700 = vmatpush1.msra.mxu0 %v781
    %3701 = vmatprep.subr.mxu0 %v786
    %3702 = vmatpush1.msra.mxu0 %v785
    %3703 = vmatprep.subr.mxu0 %v790
    %3704 = vmatpush1.msra.mxu0 %v789
    %3705 = vmatprep.subr.mxu0 %v794
    %3706 = vmatpush1.msra.mxu0 %v793
    %3707 = vmatprep.subr.mxu0 %v798
    %3708 = vmatpush1.msra.mxu0 %v797
    %3709 = vmatprep.subr.mxu0 %v802
    %3710 = vmatpush1.msra.mxu0 %v801
    %3711 = vmatprep.subr.mxu0 0.0
    %3712 = vmatpush1.msra.mxu0 0.0
    %3713 = vmatprep.subr.mxu0 0.0
    %3714 = vmatpush1.msra.mxu0 0.0
    %3715 = vmatprep.subr.mxu0 0.0
    %3716 = vmatpush1.msra.mxu0 0.0
    %3717 = vmatprep.subr.mxu0 0.0
    %3718 = vmatpush1.msra.mxu0 0.0
    %3719 = vmatprep.subr.mxu0 0.0
    %3720 = vmatpush1.msra.mxu0 0.0
    %3721 = vmatprep.subr.mxu0 0.0
    %3722 = vmatpush1.msra.mxu0 0.0
    %3723 = vmatprep.subr.mxu0 0.0
    %3724 = vmatpush1.msra.mxu0 0.0
    %3725 = vmatprep.subr.mxu0 0.0
    %3726 = vmatpush1.msra.mxu0 0.0
    %3727 = vmatprep.subr.mxu0 0.0
    %3728 = vmatpush1.msra.mxu0 0.0
    %3729 = vmatprep.subr.mxu0 0.0
    %3730 = vmatpush1.msra.mxu0 0.0
    %3731 = vmatprep.subr.mxu0 0.0
    %3732 = vmatpush1.msra.mxu0 0.0
    %3733 = vmatprep.subr.mxu0 0.0
    %3734 = vmatpush1.msra.mxu0 0.0
    %3735 = vmatprep.subr.mxu0 0.0
    %3736 = vmatpush1.msra.mxu0 0.0
    %3737 = vmatprep.subr.mxu0 0.0
    %3738 = vmatpush1.msra.mxu0 0.0
    %3739 = vmatprep.subr.mxu0 0.0
    %3740 = vmatpush1.msra.mxu0 0.0
    %3741 = vmatprep.subr.mxu0 0.0
    %3742 = vmatpush1.msra.mxu0 0.0
    %3743 = vmatprep.subr.mxu0 0.0
    %3744 = vmatpush1.msra.mxu0 0.0
    %3745 = vmatprep.subr.mxu0 0.0
    %3746 = vmatpush1.msra.mxu0 0.0
    %3747 = vmatprep.mubr.f32.mxu0 0.0
    %3748 = vmatmul.mubr.f32.gmra.mrb[0].mxu0 %v3681
    %v3749 = vpop.f32.mrb[0].mxu0
    %v3750 = vadd.f32 %v3525, %v3749
    %v3751 = vpop.f32.mrb[0].mxu0
    %v3752 = vadd.f32 %v3527, %v3751
    %3753 = vdwg.mxu0
    %3754 = vmatprep.subr.mxu0 %v752
    %3755 = vmatpush1.msra.mxu0 %v751
    %3756 = vmatprep.subr.mxu0 %v756
    %3757 = vmatpush1.msra.mxu0 %v755
    %3758 = vmatprep.subr.mxu0 %v760
    %3759 = vmatpush1.msra.mxu0 %v759
    %3760 = vmatprep.subr.mxu0 %v764
    %3761 = vmatpush1.msra.mxu0 %v763
    %3762 = vmatprep.subr.mxu0 %v768
    %3763 = vmatpush1.msra.mxu0 %v767
    %3764 = vmatprep.subr.mxu0 %v772
    %3765 = vmatpush1.msra.mxu0 %v771
    %3766 = vmatprep.subr.mxu0 %v776
    %3767 = vmatpush1.msra.mxu0 %v775
    %3768 = vmatprep.subr.mxu0 %v780
    %3769 = vmatpush1.msra.mxu0 %v779
    %3770 = vmatprep.subr.mxu0 %v784
    %3771 = vmatpush1.msra.mxu0 %v783
    %3772 = vmatprep.subr.mxu0 %v788
    %3773 = vmatpush1.msra.mxu0 %v787
    %3774 = vmatprep.subr.mxu0 %v792
    %3775 = vmatpush1.msra.mxu0 %v791
    %3776 = vmatprep.subr.mxu0 %v796
    %3777 = vmatpush1.msra.mxu0 %v795
    %3778 = vmatprep.subr.mxu0 %v800
    %3779 = vmatpush1.msra.mxu0 %v799
    %3780 = vmatprep.subr.mxu0 %v804
    %3781 = vmatpush1.msra.mxu0 %v803
    %3782 = vmatprep.subr.mxu0 0.0
    %3783 = vmatpush1.msra.mxu0 0.0
    %3784 = vmatprep.subr.mxu0 0.0
    %3785 = vmatpush1.msra.mxu0 0.0
    %3786 = vmatprep.subr.mxu0 0.0
    %3787 = vmatpush1.msra.mxu0 0.0
    %3788 = vmatprep.subr.mxu0 0.0
    %3789 = vmatpush1.msra.mxu0 0.0
    %3790 = vmatprep.subr.mxu0 0.0
    %3791 = vmatpush1.msra.mxu0 0.0
    %3792 = vmatprep.subr.mxu0 0.0
    %3793 = vmatpush1.msra.mxu0 0.0
    %3794 = vmatprep.subr.mxu0 0.0
    %3795 = vmatpush1.msra.mxu0 0.0
    %3796 = vmatprep.subr.mxu0 0.0
    %3797 = vmatpush1.msra.mxu0 0.0
    %3798 = vmatprep.subr.mxu0 0.0
    %3799 = vmatpush1.msra.mxu0 0.0
    %3800 = vmatprep.subr.mxu0 0.0
    %3801 = vmatpush1.msra.mxu0 0.0
    %3802 = vmatprep.subr.mxu0 0.0
    %3803 = vmatpush1.msra.mxu0 0.0
    %3804 = vmatprep.subr.mxu0 0.0
    %3805 = vmatpush1.msra.mxu0 0.0
    %3806 = vmatprep.subr.mxu0 0.0
    %3807 = vmatpush1.msra.mxu0 0.0
    %3808 = vmatprep.subr.mxu0 0.0
    %3809 = vmatpush1.msra.mxu0 0.0
    %3810 = vmatprep.subr.mxu0 0.0
    %3811 = vmatpush1.msra.mxu0 0.0
    %3812 = vmatprep.subr.mxu0 0.0
    %3813 = vmatpush1.msra.mxu0 0.0
    %3814 = vmatprep.subr.mxu0 0.0
    %3815 = vmatpush1.msra.mxu0 0.0
    %3816 = vmatprep.subr.mxu0 0.0
    %3817 = vmatpush1.msra.mxu0 0.0
    %3818 = vmatprep.mubr.f32.mxu0 0.0
    %3819 = vmatmul.mubr.f32.gmra.mrb[0].mxu0 %v3681
    %v3820 = vpop.f32.mrb[0].mxu0
    %v3821 = vadd.f32 %v3596, %v3820
    %v3822 = vpop.f32.mrb[0].mxu0
    %v3823 = vadd.f32 %v3598, %v3822
    %3824 = vdwg.mxu0
    %v3825 = vadd.f32 %v3750, %v962
    %v3826 = vadd.f32 %v3752, %v966
    %v3827 = vadd.f32 %v3821, %v970
    %v3828 = vadd.f32 %v3823, %v974
    %v3829 = vxor.u32 %v3825, 2147483648
    %v3830 = vxor.u32 %v3826, 2147483648
    %v3831 = vxor.u32 %v3827, 2147483648
    %v3832 = vmul.f32 %v3829, 1.442695
    %v3833 = vpow.pop %v3832
    %v3834 = vmul.f32 %v3830, 1.442695
    %v3835 = vpow.pop %v3834
    %v3836 = vmul.f32 %v3831, 1.442695
    %v3837 = vpow.pop %v3836
    %v3838 = vadd.f32 %v3833, 1.0
    %v3839 = vadd.f32 %v3835, 1.0
    %v3840 = vadd.f32 %v3837, 1.0
    %v3841 = vrcp.pop %v3838
    %v3842 = vmul.f32 1.0, %v3841
    %v3843 = vrcp.pop %v3839
    %v3844 = vmul.f32 1.0, %v3843
    %v3845 = vrcp.pop %v3840
    %v3846 = vmul.f32 1.0, %v3845
    %v3847 = vtanh.pop %v3827
    %v3848 = vtanh.pop %v3828
    %v3849 = vmul.f32 %v3842, %v3292
    %v3850 = vmul.f32 %v3844, %v3293
    %3853 = vrot.lane.b32.xlu0 %v3847, 48
    %v3854 = vpop.permute.xlu0 %3853
    %3855 = vrot.lane.b32.xlu0 %v3848, 48
    %v3856 = vpop.permute.xlu0 %3855
    %v3857 = vsel %vm726, %v3854, %v3856
    %v3859 = vmul.f32 %v3842, %v3857
    %3861 = vrot.lane.b32.xlu0 %v3859, 112
    %v3862 = vpop.permute.xlu0 %3861
    %v3864 = vadd.f32 %v3849, %v3862
    %v3865 = vadd.f32 %v3850, %v3862
    %v3866 = vtanh.pop %v3864
    %v3867 = vtanh.pop %v3865
    %3870 = vrot.lane.b32.xlu0 %v3866, 112
    %v3871 = vpop.permute.xlu0 %3870
    %3872 = vrot.lane.b32.xlu0 %v3867, 112
    %v3873 = vpop.permute.xlu0 %3872
    %v3874 = vsel %vm350, %v3871, %v3873
    %v3877 = vmul.f32 %v3844, %v3874
    %v3878 = vmul.f32 %v3846, %v3873
    %3879 = vmatprep.subr.mxu0 %v295
    %3880 = vmatpush1.msra.mxu0 %v294
    %3881 = vmatprep.subr.mxu0 %v299
    %3882 = vmatpush1.msra.mxu0 %v298
    %3883 = vmatprep.subr.mxu0 %v303
    %3884 = vmatpush1.msra.mxu0 %v302
    %3885 = vmatprep.subr.mxu0 %v307
    %3886 = vmatpush1.msra.mxu0 %v306
    %3887 = vmatprep.subr.mxu0 %v311
    %3888 = vmatpush1.msra.mxu0 %v310
    %3889 = vmatprep.subr.mxu0 %v315
    %3890 = vmatpush1.msra.mxu0 %v314
    %3891 = vmatprep.subr.mxu0 %v319
    %3892 = vmatpush1.msra.mxu0 %v318
    %3893 = vmatprep.subr.mxu0 %v323
    %3894 = vmatpush1.msra.mxu0 %v322
    %3895 = vmatprep.subr.mxu0 %v327
    %3896 = vmatpush1.msra.mxu0 %v326
    %3897 = vmatprep.subr.mxu0 %v331
    %3898 = vmatpush1.msra.mxu0 %v330
    %3899 = vmatprep.subr.mxu0 %v335
    %3900 = vmatpush1.msra.mxu0 %v334
    %3901 = vmatprep.subr.mxu0 %v339
    %3902 = vmatpush1.msra.mxu0 %v338
    %3903 = vmatprep.subr.mxu0 %v343
    %3904 = vmatpush1.msra.mxu0 %v342
    %3905 = vmatprep.subr.mxu0 %v347
    %3906 = vmatpush1.msra.mxu0 %v346
    %3907 = vmatprep.subr.mxu0 0.0
    %3908 = vmatpush1.msra.mxu0 0.0
    %3909 = vmatprep.subr.mxu0 0.0
    %3910 = vmatpush1.msra.mxu0 0.0
    %3911 = vmatprep.subr.mxu0 0.0
    %3912 = vmatpush1.msra.mxu0 0.0
    %3913 = vmatprep.subr.mxu0 0.0
    %3914 = vmatpush1.msra.mxu0 0.0
    %3915 = vmatprep.subr.mxu0 0.0
    %3916 = vmatpush1.msra.mxu0 0.0
    %3917 = vmatprep.subr.mxu0 0.0
    %3918 = vmatpush1.msra.mxu0 0.0
    %3919 = vmatprep.subr.mxu0 0.0
    %3920 = vmatpush1.msra.mxu0 0.0
    %3921 = vmatprep.subr.mxu0 0.0
    %3922 = vmatpush1.msra.mxu0 0.0
    %3923 = vmatprep.subr.mxu0 0.0
    %3924 = vmatpush1.msra.mxu0 0.0
    %3925 = vmatprep.subr.mxu0 0.0
    %3926 = vmatpush1.msra.mxu0 0.0
    %3927 = vmatprep.subr.mxu0 0.0
    %3928 = vmatpush1.msra.mxu0 0.0
    %3929 = vmatprep.subr.mxu0 0.0
    %3930 = vmatpush1.msra.mxu0 0.0
    %3931 = vmatprep.subr.mxu0 0.0
    %3932 = vmatpush1.msra.mxu0 0.0
    %3933 = vmatprep.subr.mxu0 0.0
    %3934 = vmatpush1.msra.mxu0 0.0
    %3935 = vmatprep.subr.mxu0 0.0
    %3936 = vmatpush1.msra.mxu0 0.0
    %3937 = vmatprep.subr.mxu0 0.0
    %3938 = vmatpush1.msra.mxu0 0.0
    %3939 = vmatprep.subr.mxu0 0.0
    %3940 = vmatpush1.msra.mxu0 0.0
    %3941 = vmatprep.subr.mxu0 0.0
    %3942 = vmatpush1.msra.mxu0 0.0
    %3943 = vmatprep.mubr.f32.mxu0 0.0
    %3944 = vmatmul.mubr.f32.gmra.mrb[0].mxu0 %v3681
    %v3945 = vpop.f32.mrb[0].mxu0
    %v3946 = vadd.f32 0.0, %v3945
    %v3947 = vpop.f32.mrb[0].mxu0
    %v3948 = vadd.f32 0.0, %v3947
    %3949 = vdwg.mxu0
    %3950 = vmatprep.subr.mxu0 %v297
    %3951 = vmatpush1.msra.mxu0 %v296
    %3952 = vmatprep.subr.mxu0 %v301
    %3953 = vmatpush1.msra.mxu0 %v300
    %3954 = vmatprep.subr.mxu0 %v305
    %3955 = vmatpush1.msra.mxu0 %v304
    %3956 = vmatprep.subr.mxu0 %v309
    %3957 = vmatpush1.msra.mxu0 %v308
    %3958 = vmatprep.subr.mxu0 %v313
    %3959 = vmatpush1.msra.mxu0 %v312
    %3960 = vmatprep.subr.mxu0 %v317
    %3961 = vmatpush1.msra.mxu0 %v316
    %3962 = vmatprep.subr.mxu0 %v321
    %3963 = vmatpush1.msra.mxu0 %v320
    %3964 = vmatprep.subr.mxu0 %v325
    %3965 = vmatpush1.msra.mxu0 %v324
    %3966 = vmatprep.subr.mxu0 %v329
    %3967 = vmatpush1.msra.mxu0 %v328
    %3968 = vmatprep.subr.mxu0 %v333
    %3969 = vmatpush1.msra.mxu0 %v332
    %3970 = vmatprep.subr.mxu0 %v337
    %3971 = vmatpush1.msra.mxu0 %v336
    %3972 = vmatprep.subr.mxu0 %v341
    %3973 = vmatpush1.msra.mxu0 %v340
    %3974 = vmatprep.subr.mxu0 %v345
    %3975 = vmatpush1.msra.mxu0 %v344
    %3976 = vmatprep.subr.mxu0 %v349
    %3977 = vmatpush1.msra.mxu0 %v348
    %3978 = vmatprep.subr.mxu0 0.0
    %3979 = vmatpush1.msra.mxu0 0.0
    %3980 = vmatprep.subr.mxu0 0.0
    %3981 = vmatpush1.msra.mxu0 0.0
    %3982 = vmatprep.subr.mxu0 0.0
    %3983 = vmatpush1.msra.mxu0 0.0
    %3984 = vmatprep.subr.mxu0 0.0
    %3985 = vmatpush1.msra.mxu0 0.0
    %3986 = vmatprep.subr.mxu0 0.0
    %3987 = vmatpush1.msra.mxu0 0.0
    %3988 = vmatprep.subr.mxu0 0.0
    %3989 = vmatpush1.msra.mxu0 0.0
    %3990 = vmatprep.subr.mxu0 0.0
    %3991 = vmatpush1.msra.mxu0 0.0
    %3992 = vmatprep.subr.mxu0 0.0
    %3993 = vmatpush1.msra.mxu0 0.0
    %3994 = vmatprep.subr.mxu0 0.0
    %3995 = vmatpush1.msra.mxu0 0.0
    %3996 = vmatprep.subr.mxu0 0.0
    %3997 = vmatpush1.msra.mxu0 0.0
    %3998 = vmatprep.subr.mxu0 0.0
    %3999 = vmatpush1.msra.mxu0 0.0
    %4000 = vmatprep.subr.mxu0 0.0
    %4001 = vmatpush1.msra.mxu0 0.0
    %4002 = vmatprep.subr.mxu0 0.0
    %4003 = vmatpush1.msra.mxu0 0.0
    %4004 = vmatprep.subr.mxu0 0.0
    %4005 = vmatpush1.msra.mxu0 0.0
    %4006 = vmatprep.subr.mxu0 0.0
    %4007 = vmatpush1.msra.mxu0 0.0
    %4008 = vmatprep.subr.mxu0 0.0
    %4009 = vmatpush1.msra.mxu0 0.0
    %4010 = vmatprep.subr.mxu0 0.0
    %4011 = vmatpush1.msra.mxu0 0.0
    %4012 = vmatprep.subr.mxu0 0.0
    %4013 = vmatpush1.msra.mxu0 0.0
    %4014 = vmatprep.mubr.f32.mxu0 0.0
    %4015 = vmatmul.mubr.f32.gmra.mrb[0].mxu0 %v3681
    %v4016 = vpop.f32.mrb[0].mxu0
    %v4017 = vadd.f32 0.0, %v4016
    %v4018 = vpop.f32.mrb[0].mxu0
    %v4019 = vadd.f32 0.0, %v4018
    %4020 = vdwg.mxu0
    %4023 = vrot.lane.b32.xlu0 %v3877, 32
    %v4024 = vpop.permute.xlu0 %4023
    %4025 = vrot.lane.b32.xlu0 %v3878, 32
    %v4026 = vpop.permute.xlu0 %4025
    %v4027 = vsel %vm811, %v4024, %v4026
    %v4028 = vsel %vm350, %v4027, 0
    %4030 = vmatprep.subr.mxu0 %v497
    %4031 = vmatpush1.msra.mxu0 %v496
    %4032 = vmatprep.subr.mxu0 %v501
    %4033 = vmatpush1.msra.mxu0 %v500
    %4034 = vmatprep.subr.mxu0 %v505
    %4035 = vmatpush1.msra.mxu0 %v504
    %4036 = vmatprep.subr.mxu0 %v509
    %4037 = vmatpush1.msra.mxu0 %v508
    %4038 = vmatprep.subr.mxu0 %v513
    %4039 = vmatpush1.msra.mxu0 %v512
    %4040 = vmatprep.subr.mxu0 %v517
    %4041 = vmatpush1.msra.mxu0 %v516
    %4042 = vmatprep.subr.mxu0 %v521
    %4043 = vmatpush1.msra.mxu0 %v520
    %4044 = vmatprep.subr.mxu0 %v525
    %4045 = vmatpush1.msra.mxu0 %v524
    %4046 = vmatprep.subr.mxu0 %v529
    %4047 = vmatpush1.msra.mxu0 %v528
    %4048 = vmatprep.subr.mxu0 %v533
    %4049 = vmatpush1.msra.mxu0 %v532
    %4050 = vmatprep.subr.mxu0 %v537
    %4051 = vmatpush1.msra.mxu0 %v536
    %4052 = vmatprep.subr.mxu0 %v541
    %4053 = vmatpush1.msra.mxu0 %v540
    %4054 = vmatprep.subr.mxu0 %v545
    %4055 = vmatpush1.msra.mxu0 %v544
    %4056 = vmatprep.subr.mxu0 %v549
    %4057 = vmatpush1.msra.mxu0 %v548
    %4058 = vmatprep.subr.mxu0 0.0
    %4059 = vmatpush1.msra.mxu0 0.0
    %4060 = vmatprep.subr.mxu0 0.0
    %4061 = vmatpush1.msra.mxu0 0.0
    %4062 = vmatprep.subr.mxu0 0.0
    %4063 = vmatpush1.msra.mxu0 0.0
    %4064 = vmatprep.subr.mxu0 0.0
    %4065 = vmatpush1.msra.mxu0 0.0
    %4066 = vmatprep.subr.mxu0 0.0
    %4067 = vmatpush1.msra.mxu0 0.0
    %4068 = vmatprep.subr.mxu0 0.0
    %4069 = vmatpush1.msra.mxu0 0.0
    %4070 = vmatprep.subr.mxu0 0.0
    %4071 = vmatpush1.msra.mxu0 0.0
    %4072 = vmatprep.subr.mxu0 0.0
    %4073 = vmatpush1.msra.mxu0 0.0
    %4074 = vmatprep.subr.mxu0 0.0
    %4075 = vmatpush1.msra.mxu0 0.0
    %4076 = vmatprep.subr.mxu0 0.0
    %4077 = vmatpush1.msra.mxu0 0.0
    %4078 = vmatprep.subr.mxu0 0.0
    %4079 = vmatpush1.msra.mxu0 0.0
    %4080 = vmatprep.subr.mxu0 0.0
    %4081 = vmatpush1.msra.mxu0 0.0
    %4082 = vmatprep.subr.mxu0 0.0
    %4083 = vmatpush1.msra.mxu0 0.0
    %4084 = vmatprep.subr.mxu0 0.0
    %4085 = vmatpush1.msra.mxu0 0.0
    %4086 = vmatprep.subr.mxu0 0.0
    %4087 = vmatpush1.msra.mxu0 0.0
    %4088 = vmatprep.subr.mxu0 0.0
    %4089 = vmatpush1.msra.mxu0 0.0
    %4090 = vmatprep.subr.mxu0 0.0
    %4091 = vmatpush1.msra.mxu0 0.0
    %4092 = vmatprep.subr.mxu0 0.0
    %4093 = vmatpush1.msra.mxu0 0.0
    %4094 = vmatprep.mubr.f32.mxu0 0.0
    %4095 = vmatmul.mubr.f32.gmra.mrb[0].mxu0 %v4028
    %v4096 = vpop.f32.mrb[0].mxu0
    %v4097 = vadd.f32 0.0, %v4096
    %v4098 = vpop.f32.mrb[0].mxu0
    %v4099 = vadd.f32 0.0, %v4098
    %4100 = vdwg.mxu0
    %4101 = vmatprep.subr.mxu0 %v499
    %4102 = vmatpush1.msra.mxu0 %v498
    %4103 = vmatprep.subr.mxu0 %v503
    %4104 = vmatpush1.msra.mxu0 %v502
    %4105 = vmatprep.subr.mxu0 %v507
    %4106 = vmatpush1.msra.mxu0 %v506
    %4107 = vmatprep.subr.mxu0 %v511
    %4108 = vmatpush1.msra.mxu0 %v510
    %4109 = vmatprep.subr.mxu0 %v515
    %4110 = vmatpush1.msra.mxu0 %v514
    %4111 = vmatprep.subr.mxu0 %v519
    %4112 = vmatpush1.msra.mxu0 %v518
    %4113 = vmatprep.subr.mxu0 %v523
    %4114 = vmatpush1.msra.mxu0 %v522
    %4115 = vmatprep.subr.mxu0 %v527
    %4116 = vmatpush1.msra.mxu0 %v526
    %4117 = vmatprep.subr.mxu0 %v531
    %4118 = vmatpush1.msra.mxu0 %v530
    %4119 = vmatprep.subr.mxu0 %v535
    %4120 = vmatpush1.msra.mxu0 %v534
    %4121 = vmatprep.subr.mxu0 %v539
    %4122 = vmatpush1.msra.mxu0 %v538
    %4123 = vmatprep.subr.mxu0 %v543
    %4124 = vmatpush1.msra.mxu0 %v542
    %4125 = vmatprep.subr.mxu0 %v547
    %4126 = vmatpush1.msra.mxu0 %v546
    %4127 = vmatprep.subr.mxu0 %v551
    %4128 = vmatpush1.msra.mxu0 %v550
    %4129 = vmatprep.subr.mxu0 0.0
    %4130 = vmatpush1.msra.mxu0 0.0
    %4131 = vmatprep.subr.mxu0 0.0
    %4132 = vmatpush1.msra.mxu0 0.0
    %4133 = vmatprep.subr.mxu0 0.0
    %4134 = vmatpush1.msra.mxu0 0.0
    %4135 = vmatprep.subr.mxu0 0.0
    %4136 = vmatpush1.msra.mxu0 0.0
    %4137 = vmatprep.subr.mxu0 0.0
    %4138 = vmatpush1.msra.mxu0 0.0
    %4139 = vmatprep.subr.mxu0 0.0
    %4140 = vmatpush1.msra.mxu0 0.0
    %4141 = vmatprep.subr.mxu0 0.0
    %4142 = vmatpush1.msra.mxu0 0.0
    %4143 = vmatprep.subr.mxu0 0.0
    %4144 = vmatpush1.msra.mxu0 0.0
    %4145 = vmatprep.subr.mxu0 0.0
    %4146 = vmatpush1.msra.mxu0 0.0
    %4147 = vmatprep.subr.mxu0 0.0
    %4148 = vmatpush1.msra.mxu0 0.0
    %4149 = vmatprep.subr.mxu0 0.0
    %4150 = vmatpush1.msra.mxu0 0.0
    %4151 = vmatprep.subr.mxu0 0.0
    %4152 = vmatpush1.msra.mxu0 0.0
    %4153 = vmatprep.subr.mxu0 0.0
    %4154 = vmatpush1.msra.mxu0 0.0
    %4155 = vmatprep.subr.mxu0 0.0
    %4156 = vmatpush1.msra.mxu0 0.0
    %4157 = vmatprep.subr.mxu0 0.0
    %4158 = vmatpush1.msra.mxu0 0.0
    %4159 = vmatprep.subr.mxu0 0.0
    %4160 = vmatpush1.msra.mxu0 0.0
    %4161 = vmatprep.subr.mxu0 0.0
    %4162 = vmatpush1.msra.mxu0 0.0
    %4163 = vmatprep.subr.mxu0 0.0
    %4164 = vmatpush1.msra.mxu0 0.0
    %4165 = vmatprep.mubr.f32.mxu0 0.0
    %4166 = vmatmul.mubr.f32.gmra.mrb[0].mxu0 %v4028
    %v4167 = vpop.f32.mrb[0].mxu0
    %v4168 = vadd.f32 0.0, %v4167
    %v4169 = vpop.f32.mrb[0].mxu0
    %v4170 = vadd.f32 0.0, %v4169
    %4171 = vdwg.mxu0
    %v4176 = vrot.slane %v3946, 4
    %v4177 = vrot.slane %v3948, 4
    %v4178 = vrot.slane %v4017, 4
    %v4179 = vrot.slane %v4019, 4
    %v4184 = vadd.f32 %v213, %v4176
    %v4185 = vadd.f32 %v215, %v4177
    %v4186 = vadd.f32 %v290, %v4178
    %v4187 = vadd.f32 %v292, %v4179
    %v4188 = vxor.u32 %v4184, 2147483648
    %v4189 = vxor.u32 %v4185, 2147483648
    %v4190 = vxor.u32 %v4186, 2147483648
    %v4191 = vmul.f32 %v4188, 1.442695
    %v4192 = vpow.pop %v4191
    %v4193 = vmul.f32 %v4189, 1.442695
    %v4194 = vpow.pop %v4193
    %v4195 = vmul.f32 %v4190, 1.442695
    %v4196 = vpow.pop %v4195
    %v4197 = vadd.f32 %v4192, 1.0
    %v4198 = vadd.f32 %v4194, 1.0
    %v4199 = vadd.f32 %v4196, 1.0
    %v4200 = vrcp.pop %v4197
    %v4201 = vmul.f32 1.0, %v4200
    %v4202 = vrcp.pop %v4198
    %v4203 = vmul.f32 1.0, %v4202
    %v4204 = vrcp.pop %v4199
    %v4205 = vmul.f32 1.0, %v4204
    %v4206 = vtanh.pop %v4186
    %v4207 = vtanh.pop %v4187
    %v4210 = vrot.slane %v3657, 6
    %v4211 = vrot.slane %v3658, 6
    %v4214 = vmul.f32 %v4201, %v4210
    %v4215 = vmul.f32 %v4203, %v4211
    %4218 = vrot.lane.b32.xlu0 %v4206, 48
    %v4219 = vpop.permute.xlu0 %4218
    %4220 = vrot.lane.b32.xlu0 %v4207, 48
    %v4221 = vpop.permute.xlu0 %4220
    %v4222 = vsel %vm726, %v4219, %v4221
    %v4224 = vmul.f32 %v4201, %v4222
    %4226 = vrot.lane.b32.xlu0 %v4224, 112
    %v4227 = vpop.permute.xlu0 %4226
    %v4229 = vadd.f32 %v4214, %v4227
    %v4230 = vadd.f32 %v4215, %v4227
    %v4231 = vtanh.pop %v4229
    %v4232 = vtanh.pop %v4230
    %4235 = vrot.lane.b32.xlu0 %v4231, 112
    %v4236 = vpop.permute.xlu0 %4235
    %4237 = vrot.lane.b32.xlu0 %v4232, 112
    %v4238 = vpop.permute.xlu0 %4237
    %v4239 = vsel %vm350, %v4236, %v4238
    %v4242 = vmul.f32 %v4203, %v4239
    %v4243 = vmul.f32 %v4205, %v4238
    %v4246 = vrot.slane %v4242, 4
    %v4247 = vrot.slane %v4243, 4
    %4248 = vrot.lane.b32.xlu0 %v4246, 32
    %v4249 = vpop.permute.xlu0 %4248
    %4250 = vrot.lane.b32.xlu0 %v4247, 32
    %v4251 = vpop.permute.xlu0 %4250
    %v4252 = vsel %vm811, %v4249, %v4251
    %v4253 = vsel %vm350, %v4252, 0
    %4255 = vmatprep.subr.mxu0 %v750
    %4256 = vmatpush1.msra.mxu0 %v749
    %4257 = vmatprep.subr.mxu0 %v754
    %4258 = vmatpush1.msra.mxu0 %v753
    %4259 = vmatprep.subr.mxu0 %v758
    %4260 = vmatpush1.msra.mxu0 %v757
    %4261 = vmatprep.subr.mxu0 %v762
    %4262 = vmatpush1.msra.mxu0 %v761
    %4263 = vmatprep.subr.mxu0 %v766
    %4264 = vmatpush1.msra.mxu0 %v765
    %4265 = vmatprep.subr.mxu0 %v770
    %4266 = vmatpush1.msra.mxu0 %v769
    %4267 = vmatprep.subr.mxu0 %v774
    %4268 = vmatpush1.msra.mxu0 %v773
    %4269 = vmatprep.subr.mxu0 %v778
    %4270 = vmatpush1.msra.mxu0 %v777
    %4271 = vmatprep.subr.mxu0 %v782
    %4272 = vmatpush1.msra.mxu0 %v781
    %4273 = vmatprep.subr.mxu0 %v786
    %4274 = vmatpush1.msra.mxu0 %v785
    %4275 = vmatprep.subr.mxu0 %v790
    %4276 = vmatpush1.msra.mxu0 %v789
    %4277 = vmatprep.subr.mxu0 %v794
    %4278 = vmatpush1.msra.mxu0 %v793
    %4279 = vmatprep.subr.mxu0 %v798
    %4280 = vmatpush1.msra.mxu0 %v797
    %4281 = vmatprep.subr.mxu0 %v802
    %4282 = vmatpush1.msra.mxu0 %v801
    %4283 = vmatprep.subr.mxu0 0.0
    %4284 = vmatpush1.msra.mxu0 0.0
    %4285 = vmatprep.subr.mxu0 0.0
    %4286 = vmatpush1.msra.mxu0 0.0
    %4287 = vmatprep.subr.mxu0 0.0
    %4288 = vmatpush1.msra.mxu0 0.0
    %4289 = vmatprep.subr.mxu0 0.0
    %4290 = vmatpush1.msra.mxu0 0.0
    %4291 = vmatprep.subr.mxu0 0.0
    %4292 = vmatpush1.msra.mxu0 0.0
    %4293 = vmatprep.subr.mxu0 0.0
    %4294 = vmatpush1.msra.mxu0 0.0
    %4295 = vmatprep.subr.mxu0 0.0
    %4296 = vmatpush1.msra.mxu0 0.0
    %4297 = vmatprep.subr.mxu0 0.0
    %4298 = vmatpush1.msra.mxu0 0.0
    %4299 = vmatprep.subr.mxu0 0.0
    %4300 = vmatpush1.msra.mxu0 0.0
    %4301 = vmatprep.subr.mxu0 0.0
    %4302 = vmatpush1.msra.mxu0 0.0
    %4303 = vmatprep.subr.mxu0 0.0
    %4304 = vmatpush1.msra.mxu0 0.0
    %4305 = vmatprep.subr.mxu0 0.0
    %4306 = vmatpush1.msra.mxu0 0.0
    %4307 = vmatprep.subr.mxu0 0.0
    %4308 = vmatpush1.msra.mxu0 0.0
    %4309 = vmatprep.subr.mxu0 0.0
    %4310 = vmatpush1.msra.mxu0 0.0
    %4311 = vmatprep.subr.mxu0 0.0
    %4312 = vmatpush1.msra.mxu0 0.0
    %4313 = vmatprep.subr.mxu0 0.0
    %4314 = vmatpush1.msra.mxu0 0.0
    %4315 = vmatprep.subr.mxu0 0.0
    %4316 = vmatpush1.msra.mxu0 0.0
    %4317 = vmatprep.subr.mxu0 0.0
    %4318 = vmatpush1.msra.mxu0 0.0
    %4319 = vmatprep.mubr.f32.mxu0 0.0
    %4320 = vmatmul.mubr.f32.gmra.mrb[0].mxu0 %v4253
    %v4321 = vpop.f32.mrb[0].mxu0
    %v4322 = vadd.f32 %v4097, %v4321
    %v4323 = vpop.f32.mrb[0].mxu0
    %v4324 = vadd.f32 %v4099, %v4323
    %4325 = vdwg.mxu0
    %4326 = vmatprep.subr.mxu0 %v752
    %4327 = vmatpush1.msra.mxu0 %v751
    %4328 = vmatprep.subr.mxu0 %v756
    %4329 = vmatpush1.msra.mxu0 %v755
    %4330 = vmatprep.subr.mxu0 %v760
    %4331 = vmatpush1.msra.mxu0 %v759
    %4332 = vmatprep.subr.mxu0 %v764
    %4333 = vmatpush1.msra.mxu0 %v763
    %4334 = vmatprep.subr.mxu0 %v768
    %4335 = vmatpush1.msra.mxu0 %v767
    %4336 = vmatprep.subr.mxu0 %v772
    %4337 = vmatpush1.msra.mxu0 %v771
    %4338 = vmatprep.subr.mxu0 %v776
    %4339 = vmatpush1.msra.mxu0 %v775
    %4340 = vmatprep.subr.mxu0 %v780
    %4341 = vmatpush1.msra.mxu0 %v779
    %4342 = vmatprep.subr.mxu0 %v784
    %4343 = vmatpush1.msra.mxu0 %v783
    %4344 = vmatprep.subr.mxu0 %v788
    %4345 = vmatpush1.msra.mxu0 %v787
    %4346 = vmatprep.subr.mxu0 %v792
    %4347 = vmatpush1.msra.mxu0 %v791
    %4348 = vmatprep.subr.mxu0 %v796
    %4349 = vmatpush1.msra.mxu0 %v795
    %4350 = vmatprep.subr.mxu0 %v800
    %4351 = vmatpush1.msra.mxu0 %v799
    %4352 = vmatprep.subr.mxu0 %v804
    %4353 = vmatpush1.msra.mxu0 %v803
    %4354 = vmatprep.subr.mxu0 0.0
    %4355 = vmatpush1.msra.mxu0 0.0
    %4356 = vmatprep.subr.mxu0 0.0
    %4357 = vmatpush1.msra.mxu0 0.0
    %4358 = vmatprep.subr.mxu0 0.0
    %4359 = vmatpush1.msra.mxu0 0.0
    %4360 = vmatprep.subr.mxu0 0.0
    %4361 = vmatpush1.msra.mxu0 0.0
    %4362 = vmatprep.subr.mxu0 0.0
    %4363 = vmatpush1.msra.mxu0 0.0
    %4364 = vmatprep.subr.mxu0 0.0
    %4365 = vmatpush1.msra.mxu0 0.0
    %4366 = vmatprep.subr.mxu0 0.0
    %4367 = vmatpush1.msra.mxu0 0.0
    %4368 = vmatprep.subr.mxu0 0.0
    %4369 = vmatpush1.msra.mxu0 0.0
    %4370 = vmatprep.subr.mxu0 0.0
    %4371 = vmatpush1.msra.mxu0 0.0
    %4372 = vmatprep.subr.mxu0 0.0
    %4373 = vmatpush1.msra.mxu0 0.0
    %4374 = vmatprep.subr.mxu0 0.0
    %4375 = vmatpush1.msra.mxu0 0.0
    %4376 = vmatprep.subr.mxu0 0.0
    %4377 = vmatpush1.msra.mxu0 0.0
    %4378 = vmatprep.subr.mxu0 0.0
    %4379 = vmatpush1.msra.mxu0 0.0
    %4380 = vmatprep.subr.mxu0 0.0
    %4381 = vmatpush1.msra.mxu0 0.0
    %4382 = vmatprep.subr.mxu0 0.0
    %4383 = vmatpush1.msra.mxu0 0.0
    %4384 = vmatprep.subr.mxu0 0.0
    %4385 = vmatpush1.msra.mxu0 0.0
    %4386 = vmatprep.subr.mxu0 0.0
    %4387 = vmatpush1.msra.mxu0 0.0
    %4388 = vmatprep.subr.mxu0 0.0
    %4389 = vmatpush1.msra.mxu0 0.0
    %4390 = vmatprep.mubr.f32.mxu0 0.0
    %4391 = vmatmul.mubr.f32.gmra.mrb[0].mxu0 %v4253
    %v4392 = vpop.f32.mrb[0].mxu0
    %v4393 = vadd.f32 %v4168, %v4392
    %v4394 = vpop.f32.mrb[0].mxu0
    %v4395 = vadd.f32 %v4170, %v4394
    %4396 = vdwg.mxu0
    %v4397 = vadd.f32 %v4322, %v962
    %v4398 = vadd.f32 %v4324, %v966
    %v4399 = vadd.f32 %v4393, %v970
    %v4400 = vadd.f32 %v4395, %v974
    %v4401 = vxor.u32 %v4397, 2147483648
    %v4402 = vxor.u32 %v4398, 2147483648
    %v4403 = vxor.u32 %v4399, 2147483648
    %v4404 = vmul.f32 %v4401, 1.442695
    %v4405 = vpow.pop %v4404
    %v4406 = vmul.f32 %v4402, 1.442695
    %v4407 = vpow.pop %v4406
    %v4408 = vmul.f32 %v4403, 1.442695
    %v4409 = vpow.pop %v4408
    %v4410 = vadd.f32 %v4405, 1.0
    %v4411 = vadd.f32 %v4407, 1.0
    %v4412 = vadd.f32 %v4409, 1.0
    %v4413 = vrcp.pop %v4410
    %v4414 = vmul.f32 1.0, %v4413
    %v4415 = vrcp.pop %v4411
    %v4416 = vmul.f32 1.0, %v4415
    %v4417 = vrcp.pop %v4412
    %v4418 = vmul.f32 1.0, %v4417
    %v4419 = vtanh.pop %v4399
    %v4420 = vtanh.pop %v4400
    %v4421 = vmul.f32 %v4414, %v3864
    %v4422 = vmul.f32 %v4416, %v3865
    %4425 = vrot.lane.b32.xlu0 %v4419, 48
    %v4426 = vpop.permute.xlu0 %4425
    %4427 = vrot.lane.b32.xlu0 %v4420, 48
    %v4428 = vpop.permute.xlu0 %4427
    %v4429 = vsel %vm726, %v4426, %v4428
    %v4431 = vmul.f32 %v4414, %v4429
    %4433 = vrot.lane.b32.xlu0 %v4431, 112
    %v4434 = vpop.permute.xlu0 %4433
    %v4436 = vadd.f32 %v4421, %v4434
    %v4437 = vadd.f32 %v4422, %v4434
    %v4438 = vtanh.pop %v4436
    %v4439 = vtanh.pop %v4437
    %4442 = vrot.lane.b32.xlu0 %v4438, 112
    %v4443 = vpop.permute.xlu0 %4442
    %4444 = vrot.lane.b32.xlu0 %v4439, 112
    %v4445 = vpop.permute.xlu0 %4444
    %v4446 = vsel %vm350, %v4443, %v4445
    %v4449 = vmul.f32 %v4416, %v4446
    %v4450 = vmul.f32 %v4418, %v4445
    %4451 = vmatprep.subr.mxu0 %v295
    %4452 = vmatpush1.msra.mxu0 %v294
    %4453 = vmatprep.subr.mxu0 %v299
    %4454 = vmatpush1.msra.mxu0 %v298
    %4455 = vmatprep.subr.mxu0 %v303
    %4456 = vmatpush1.msra.mxu0 %v302
    %4457 = vmatprep.subr.mxu0 %v307
    %4458 = vmatpush1.msra.mxu0 %v306
    %4459 = vmatprep.subr.mxu0 %v311
    %4460 = vmatpush1.msra.mxu0 %v310
    %4461 = vmatprep.subr.mxu0 %v315
    %4462 = vmatpush1.msra.mxu0 %v314
    %4463 = vmatprep.subr.mxu0 %v319
    %4464 = vmatpush1.msra.mxu0 %v318
    %4465 = vmatprep.subr.mxu0 %v323
    %4466 = vmatpush1.msra.mxu0 %v322
    %4467 = vmatprep.subr.mxu0 %v327
    %4468 = vmatpush1.msra.mxu0 %v326
    %4469 = vmatprep.subr.mxu0 %v331
    %4470 = vmatpush1.msra.mxu0 %v330
    %4471 = vmatprep.subr.mxu0 %v335
    %4472 = vmatpush1.msra.mxu0 %v334
    %4473 = vmatprep.subr.mxu0 %v339
    %4474 = vmatpush1.msra.mxu0 %v338
    %4475 = vmatprep.subr.mxu0 %v343
    %4476 = vmatpush1.msra.mxu0 %v342
    %4477 = vmatprep.subr.mxu0 %v347
    %4478 = vmatpush1.msra.mxu0 %v346
    %4479 = vmatprep.subr.mxu0 0.0
    %4480 = vmatpush1.msra.mxu0 0.0
    %4481 = vmatprep.subr.mxu0 0.0
    %4482 = vmatpush1.msra.mxu0 0.0
    %4483 = vmatprep.subr.mxu0 0.0
    %4484 = vmatpush1.msra.mxu0 0.0
    %4485 = vmatprep.subr.mxu0 0.0
    %4486 = vmatpush1.msra.mxu0 0.0
    %4487 = vmatprep.subr.mxu0 0.0
    %4488 = vmatpush1.msra.mxu0 0.0
    %4489 = vmatprep.subr.mxu0 0.0
    %4490 = vmatpush1.msra.mxu0 0.0
    %4491 = vmatprep.subr.mxu0 0.0
    %4492 = vmatpush1.msra.mxu0 0.0
    %4493 = vmatprep.subr.mxu0 0.0
    %4494 = vmatpush1.msra.mxu0 0.0
    %4495 = vmatprep.subr.mxu0 0.0
    %4496 = vmatpush1.msra.mxu0 0.0
    %4497 = vmatprep.subr.mxu0 0.0
    %4498 = vmatpush1.msra.mxu0 0.0
    %4499 = vmatprep.subr.mxu0 0.0
    %4500 = vmatpush1.msra.mxu0 0.0
    %4501 = vmatprep.subr.mxu0 0.0
    %4502 = vmatpush1.msra.mxu0 0.0
    %4503 = vmatprep.subr.mxu0 0.0
    %4504 = vmatpush1.msra.mxu0 0.0
    %4505 = vmatprep.subr.mxu0 0.0
    %4506 = vmatpush1.msra.mxu0 0.0
    %4507 = vmatprep.subr.mxu0 0.0
    %4508 = vmatpush1.msra.mxu0 0.0
    %4509 = vmatprep.subr.mxu0 0.0
    %4510 = vmatpush1.msra.mxu0 0.0
    %4511 = vmatprep.subr.mxu0 0.0
    %4512 = vmatpush1.msra.mxu0 0.0
    %4513 = vmatprep.subr.mxu0 0.0
    %4514 = vmatpush1.msra.mxu0 0.0
    %4515 = vmatprep.mubr.f32.mxu0 0.0
    %4516 = vmatmul.mubr.f32.gmra.mrb[0].mxu0 %v4253
    %v4517 = vpop.f32.mrb[0].mxu0
    %v4518 = vadd.f32 0.0, %v4517
    %v4519 = vpop.f32.mrb[0].mxu0
    %v4520 = vadd.f32 0.0, %v4519
    %4521 = vdwg.mxu0
    %4522 = vmatprep.subr.mxu0 %v297
    %4523 = vmatpush1.msra.mxu0 %v296
    %4524 = vmatprep.subr.mxu0 %v301
    %4525 = vmatpush1.msra.mxu0 %v300
    %4526 = vmatprep.subr.mxu0 %v305
    %4527 = vmatpush1.msra.mxu0 %v304
    %4528 = vmatprep.subr.mxu0 %v309
    %4529 = vmatpush1.msra.mxu0 %v308
    %4530 = vmatprep.subr.mxu0 %v313
    %4531 = vmatpush1.msra.mxu0 %v312
    %4532 = vmatprep.subr.mxu0 %v317
    %4533 = vmatpush1.msra.mxu0 %v316
    %4534 = vmatprep.subr.mxu0 %v321
    %4535 = vmatpush1.msra.mxu0 %v320
    %4536 = vmatprep.subr.mxu0 %v325
    %4537 = vmatpush1.msra.mxu0 %v324
    %4538 = vmatprep.subr.mxu0 %v329
    %4539 = vmatpush1.msra.mxu0 %v328
    %4540 = vmatprep.subr.mxu0 %v333
    %4541 = vmatpush1.msra.mxu0 %v332
    %4542 = vmatprep.subr.mxu0 %v337
    %4543 = vmatpush1.msra.mxu0 %v336
    %4544 = vmatprep.subr.mxu0 %v341
    %4545 = vmatpush1.msra.mxu0 %v340
    %4546 = vmatprep.subr.mxu0 %v345
    %4547 = vmatpush1.msra.mxu0 %v344
    %4548 = vmatprep.subr.mxu0 %v349
    %4549 = vmatpush1.msra.mxu0 %v348
    %4550 = vmatprep.subr.mxu0 0.0
    %4551 = vmatpush1.msra.mxu0 0.0
    %4552 = vmatprep.subr.mxu0 0.0
    %4553 = vmatpush1.msra.mxu0 0.0
    %4554 = vmatprep.subr.mxu0 0.0
    %4555 = vmatpush1.msra.mxu0 0.0
    %4556 = vmatprep.subr.mxu0 0.0
    %4557 = vmatpush1.msra.mxu0 0.0
    %4558 = vmatprep.subr.mxu0 0.0
    %4559 = vmatpush1.msra.mxu0 0.0
    %4560 = vmatprep.subr.mxu0 0.0
    %4561 = vmatpush1.msra.mxu0 0.0
    %4562 = vmatprep.subr.mxu0 0.0
    %4563 = vmatpush1.msra.mxu0 0.0
    %4564 = vmatprep.subr.mxu0 0.0
    %4565 = vmatpush1.msra.mxu0 0.0
    %4566 = vmatprep.subr.mxu0 0.0
    %4567 = vmatpush1.msra.mxu0 0.0
    %4568 = vmatprep.subr.mxu0 0.0
    %4569 = vmatpush1.msra.mxu0 0.0
    %4570 = vmatprep.subr.mxu0 0.0
    %4571 = vmatpush1.msra.mxu0 0.0
    %4572 = vmatprep.subr.mxu0 0.0
    %4573 = vmatpush1.msra.mxu0 0.0
    %4574 = vmatprep.subr.mxu0 0.0
    %4575 = vmatpush1.msra.mxu0 0.0
    %4576 = vmatprep.subr.mxu0 0.0
    %4577 = vmatpush1.msra.mxu0 0.0
    %4578 = vmatprep.subr.mxu0 0.0
    %4579 = vmatpush1.msra.mxu0 0.0
    %4580 = vmatprep.subr.mxu0 0.0
    %4581 = vmatpush1.msra.mxu0 0.0
    %4582 = vmatprep.subr.mxu0 0.0
    %4583 = vmatpush1.msra.mxu0 0.0
    %4584 = vmatprep.subr.mxu0 0.0
    %4585 = vmatpush1.msra.mxu0 0.0
    %4586 = vmatprep.mubr.f32.mxu0 0.0
    %4587 = vmatmul.mubr.f32.gmra.mrb[0].mxu0 %v4253
    %v4588 = vpop.f32.mrb[0].mxu0
    %v4589 = vadd.f32 0.0, %v4588
    %v4590 = vpop.f32.mrb[0].mxu0
    %v4591 = vadd.f32 0.0, %v4590
    %4592 = vdwg.mxu0
    %4595 = vrot.lane.b32.xlu0 %v4449, 32
    %v4596 = vpop.permute.xlu0 %4595
    %4597 = vrot.lane.b32.xlu0 %v4450, 32
    %v4598 = vpop.permute.xlu0 %4597
    %v4599 = vsel %vm811, %v4596, %v4598
    %v4600 = vsel %vm350, %v4599, 0
    %4602 = vmatprep.subr.mxu0 %v497
    %4603 = vmatpush1.msra.mxu0 %v496
    %4604 = vmatprep.subr.mxu0 %v501
    %4605 = vmatpush1.msra.mxu0 %v500
    %4606 = vmatprep.subr.mxu0 %v505
    %4607 = vmatpush1.msra.mxu0 %v504
    %4608 = vmatprep.subr.mxu0 %v509
    %4609 = vmatpush1.msra.mxu0 %v508
    %4610 = vmatprep.subr.mxu0 %v513
    %4611 = vmatpush1.msra.mxu0 %v512
    %4612 = vmatprep.subr.mxu0 %v517
    %4613 = vmatpush1.msra.mxu0 %v516
    %4614 = vmatprep.subr.mxu0 %v521
    %4615 = vmatpush1.msra.mxu0 %v520
    %4616 = vmatprep.subr.mxu0 %v525
    %4617 = vmatpush1.msra.mxu0 %v524
    %4618 = vmatprep.subr.mxu0 %v529
    %4619 = vmatpush1.msra.mxu0 %v528
    %4620 = vmatprep.subr.mxu0 %v533
    %4621 = vmatpush1.msra.mxu0 %v532
    %4622 = vmatprep.subr.mxu0 %v537
    %4623 = vmatpush1.msra.mxu0 %v536
    %4624 = vmatprep.subr.mxu0 %v541
    %4625 = vmatpush1.msra.mxu0 %v540
    %4626 = vmatprep.subr.mxu0 %v545
    %4627 = vmatpush1.msra.mxu0 %v544
    %4628 = vmatprep.subr.mxu0 %v549
    %4629 = vmatpush1.msra.mxu0 %v548
    %4630 = vmatprep.subr.mxu0 0.0
    %4631 = vmatpush1.msra.mxu0 0.0
    %4632 = vmatprep.subr.mxu0 0.0
    %4633 = vmatpush1.msra.mxu0 0.0
    %4634 = vmatprep.subr.mxu0 0.0
    %4635 = vmatpush1.msra.mxu0 0.0
    %4636 = vmatprep.subr.mxu0 0.0
    %4637 = vmatpush1.msra.mxu0 0.0
    %4638 = vmatprep.subr.mxu0 0.0
    %4639 = vmatpush1.msra.mxu0 0.0
    %4640 = vmatprep.subr.mxu0 0.0
    %4641 = vmatpush1.msra.mxu0 0.0
    %4642 = vmatprep.subr.mxu0 0.0
    %4643 = vmatpush1.msra.mxu0 0.0
    %4644 = vmatprep.subr.mxu0 0.0
    %4645 = vmatpush1.msra.mxu0 0.0
    %4646 = vmatprep.subr.mxu0 0.0
    %4647 = vmatpush1.msra.mxu0 0.0
    %4648 = vmatprep.subr.mxu0 0.0
    %4649 = vmatpush1.msra.mxu0 0.0
    %4650 = vmatprep.subr.mxu0 0.0
    %4651 = vmatpush1.msra.mxu0 0.0
    %4652 = vmatprep.subr.mxu0 0.0
    %4653 = vmatpush1.msra.mxu0 0.0
    %4654 = vmatprep.subr.mxu0 0.0
    %4655 = vmatpush1.msra.mxu0 0.0
    %4656 = vmatprep.subr.mxu0 0.0
    %4657 = vmatpush1.msra.mxu0 0.0
    %4658 = vmatprep.subr.mxu0 0.0
    %4659 = vmatpush1.msra.mxu0 0.0
    %4660 = vmatprep.subr.mxu0 0.0
    %4661 = vmatpush1.msra.mxu0 0.0
    %4662 = vmatprep.subr.mxu0 0.0
    %4663 = vmatpush1.msra.mxu0 0.0
    %4664 = vmatprep.subr.mxu0 0.0
    %4665 = vmatpush1.msra.mxu0 0.0
    %4666 = vmatprep.mubr.f32.mxu0 0.0
    %4667 = vmatmul.mubr.f32.gmra.mrb[0].mxu0 %v4600
    %v4668 = vpop.f32.mrb[0].mxu0
    %v4669 = vadd.f32 0.0, %v4668
    %v4670 = vpop.f32.mrb[0].mxu0
    %v4671 = vadd.f32 0.0, %v4670
    %4672 = vdwg.mxu0
    %4673 = vmatprep.subr.mxu0 %v499
    %4674 = vmatpush1.msra.mxu0 %v498
    %4675 = vmatprep.subr.mxu0 %v503
    %4676 = vmatpush1.msra.mxu0 %v502
    %4677 = vmatprep.subr.mxu0 %v507
    %4678 = vmatpush1.msra.mxu0 %v506
    %4679 = vmatprep.subr.mxu0 %v511
    %4680 = vmatpush1.msra.mxu0 %v510
    %4681 = vmatprep.subr.mxu0 %v515
    %4682 = vmatpush1.msra.mxu0 %v514
    %4683 = vmatprep.subr.mxu0 %v519
    %4684 = vmatpush1.msra.mxu0 %v518
    %4685 = vmatprep.subr.mxu0 %v523
    %4686 = vmatpush1.msra.mxu0 %v522
    %4687 = vmatprep.subr.mxu0 %v527
    %4688 = vmatpush1.msra.mxu0 %v526
    %4689 = vmatprep.subr.mxu0 %v531
    %4690 = vmatpush1.msra.mxu0 %v530
    %4691 = vmatprep.subr.mxu0 %v535
    %4692 = vmatpush1.msra.mxu0 %v534
    %4693 = vmatprep.subr.mxu0 %v539
    %4694 = vmatpush1.msra.mxu0 %v538
    %4695 = vmatprep.subr.mxu0 %v543
    %4696 = vmatpush1.msra.mxu0 %v542
    %4697 = vmatprep.subr.mxu0 %v547
    %4698 = vmatpush1.msra.mxu0 %v546
    %4699 = vmatprep.subr.mxu0 %v551
    %4700 = vmatpush1.msra.mxu0 %v550
    %4701 = vmatprep.subr.mxu0 0.0
    %4702 = vmatpush1.msra.mxu0 0.0
    %4703 = vmatprep.subr.mxu0 0.0
    %4704 = vmatpush1.msra.mxu0 0.0
    %4705 = vmatprep.subr.mxu0 0.0
    %4706 = vmatpush1.msra.mxu0 0.0
    %4707 = vmatprep.subr.mxu0 0.0
    %4708 = vmatpush1.msra.mxu0 0.0
    %4709 = vmatprep.subr.mxu0 0.0
    %4710 = vmatpush1.msra.mxu0 0.0
    %4711 = vmatprep.subr.mxu0 0.0
    %4712 = vmatpush1.msra.mxu0 0.0
    %4713 = vmatprep.subr.mxu0 0.0
    %4714 = vmatpush1.msra.mxu0 0.0
    %4715 = vmatprep.subr.mxu0 0.0
    %4716 = vmatpush1.msra.mxu0 0.0
    %4717 = vmatprep.subr.mxu0 0.0
    %4718 = vmatpush1.msra.mxu0 0.0
    %4719 = vmatprep.subr.mxu0 0.0
    %4720 = vmatpush1.msra.mxu0 0.0
    %4721 = vmatprep.subr.mxu0 0.0
    %4722 = vmatpush1.msra.mxu0 0.0
    %4723 = vmatprep.subr.mxu0 0.0
    %4724 = vmatpush1.msra.mxu0 0.0
    %4725 = vmatprep.subr.mxu0 0.0
    %4726 = vmatpush1.msra.mxu0 0.0
    %4727 = vmatprep.subr.mxu0 0.0
    %4728 = vmatpush1.msra.mxu0 0.0
    %4729 = vmatprep.subr.mxu0 0.0
    %4730 = vmatpush1.msra.mxu0 0.0
    %4731 = vmatprep.subr.mxu0 0.0
    %4732 = vmatpush1.msra.mxu0 0.0
    %4733 = vmatprep.subr.mxu0 0.0
    %4734 = vmatpush1.msra.mxu0 0.0
    %4735 = vmatprep.subr.mxu0 0.0
    %4736 = vmatpush1.msra.mxu0 0.0
    %4737 = vmatprep.mubr.f32.mxu0 0.0
    %4738 = vmatmul.mubr.f32.gmra.mrb[0].mxu0 %v4600
    %v4739 = vpop.f32.mrb[0].mxu0
    %v4740 = vadd.f32 0.0, %v4739
    %v4741 = vpop.f32.mrb[0].mxu0
    %v4742 = vadd.f32 0.0, %v4741
    %4743 = vdwg.mxu0
    %v4748 = vrot.slane %v4518, 2
    %v4749 = vrot.slane %v4520, 2
    %v4750 = vrot.slane %v4589, 2
    %v4751 = vrot.slane %v4591, 2
    %v4756 = vadd.f32 %v213, %v4748
    %v4757 = vadd.f32 %v215, %v4749
    %v4758 = vadd.f32 %v290, %v4750
    %v4759 = vadd.f32 %v292, %v4751
    %v4760 = vxor.u32 %v4756, 2147483648
    %v4761 = vxor.u32 %v4757, 2147483648
    %v4762 = vxor.u32 %v4758, 2147483648
    %v4763 = vmul.f32 %v4760, 1.442695
    %v4764 = vpow.pop %v4763
    %v4765 = vmul.f32 %v4761, 1.442695
    %v4766 = vpow.pop %v4765
    %v4767 = vmul.f32 %v4762, 1.442695
    %v4768 = vpow.pop %v4767
    %v4769 = vadd.f32 %v4764, 1.0
    %v4770 = vadd.f32 %v4766, 1.0
    %v4771 = vadd.f32 %v4768, 1.0
    %v4772 = vrcp.pop %v4769
    %v4773 = vmul.f32 1.0, %v4772
    %v4774 = vrcp.pop %v4770
    %v4775 = vmul.f32 1.0, %v4774
    %v4776 = vrcp.pop %v4771
    %v4777 = vmul.f32 1.0, %v4776
    %v4778 = vtanh.pop %v4758
    %v4779 = vtanh.pop %v4759
    %v4782 = vrot.slane %v4229, 6
    %v4783 = vrot.slane %v4230, 6
    %v4786 = vmul.f32 %v4773, %v4782
    %v4787 = vmul.f32 %v4775, %v4783
    %4790 = vrot.lane.b32.xlu0 %v4778, 48
    %v4791 = vpop.permute.xlu0 %4790
    %4792 = vrot.lane.b32.xlu0 %v4779, 48
    %v4793 = vpop.permute.xlu0 %4792
    %v4794 = vsel %vm726, %v4791, %v4793
    %v4796 = vmul.f32 %v4773, %v4794
    %4798 = vrot.lane.b32.xlu0 %v4796, 112
    %v4799 = vpop.permute.xlu0 %4798
    %v4801 = vadd.f32 %v4786, %v4799
    %v4802 = vadd.f32 %v4787, %v4799
    %v4803 = vtanh.pop %v4801
    %v4804 = vtanh.pop %v4802
    %4807 = vrot.lane.b32.xlu0 %v4803, 112
    %v4808 = vpop.permute.xlu0 %4807
    %4809 = vrot.lane.b32.xlu0 %v4804, 112
    %v4810 = vpop.permute.xlu0 %4809
    %v4811 = vsel %vm350, %v4808, %v4810
    %v4814 = vmul.f32 %v4775, %v4811
    %v4815 = vmul.f32 %v4777, %v4810
    %v4818 = vrot.slane %v4814, 6
    %v4819 = vrot.slane %v4815, 6
    %4820 = vrot.lane.b32.xlu0 %v4818, 32
    %v4821 = vpop.permute.xlu0 %4820
    %4822 = vrot.lane.b32.xlu0 %v4819, 32
    %v4823 = vpop.permute.xlu0 %4822
    %v4824 = vsel %vm811, %v4821, %v4823
    %v4825 = vsel %vm350, %v4824, 0
    %4827 = vmatprep.subr.mxu0 %v750
    %4828 = vmatpush1.msra.mxu0 %v749
    %4829 = vmatprep.subr.mxu0 %v754
    %4830 = vmatpush1.msra.mxu0 %v753
    %4831 = vmatprep.subr.mxu0 %v758
    %4832 = vmatpush1.msra.mxu0 %v757
    %4833 = vmatprep.subr.mxu0 %v762
    %4834 = vmatpush1.msra.mxu0 %v761
    %4835 = vmatprep.subr.mxu0 %v766
    %4836 = vmatpush1.msra.mxu0 %v765
    %4837 = vmatprep.subr.mxu0 %v770
    %4838 = vmatpush1.msra.mxu0 %v769
    %4839 = vmatprep.subr.mxu0 %v774
    %4840 = vmatpush1.msra.mxu0 %v773
    %4841 = vmatprep.subr.mxu0 %v778
    %4842 = vmatpush1.msra.mxu0 %v777
    %4843 = vmatprep.subr.mxu0 %v782
    %4844 = vmatpush1.msra.mxu0 %v781
    %4845 = vmatprep.subr.mxu0 %v786
    %4846 = vmatpush1.msra.mxu0 %v785
    %4847 = vmatprep.subr.mxu0 %v790
    %4848 = vmatpush1.msra.mxu0 %v789
    %4849 = vmatprep.subr.mxu0 %v794
    %4850 = vmatpush1.msra.mxu0 %v793
    %4851 = vmatprep.subr.mxu0 %v798
    %4852 = vmatpush1.msra.mxu0 %v797
    %4853 = vmatprep.subr.mxu0 %v802
    %4854 = vmatpush1.msra.mxu0 %v801
    %4855 = vmatprep.subr.mxu0 0.0
    %4856 = vmatpush1.msra.mxu0 0.0
    %4857 = vmatprep.subr.mxu0 0.0
    %4858 = vmatpush1.msra.mxu0 0.0
    %4859 = vmatprep.subr.mxu0 0.0
    %4860 = vmatpush1.msra.mxu0 0.0
    %4861 = vmatprep.subr.mxu0 0.0
    %4862 = vmatpush1.msra.mxu0 0.0
    %4863 = vmatprep.subr.mxu0 0.0
    %4864 = vmatpush1.msra.mxu0 0.0
    %4865 = vmatprep.subr.mxu0 0.0
    %4866 = vmatpush1.msra.mxu0 0.0
    %4867 = vmatprep.subr.mxu0 0.0
    %4868 = vmatpush1.msra.mxu0 0.0
    %4869 = vmatprep.subr.mxu0 0.0
    %4870 = vmatpush1.msra.mxu0 0.0
    %4871 = vmatprep.subr.mxu0 0.0
    %4872 = vmatpush1.msra.mxu0 0.0
    %4873 = vmatprep.subr.mxu0 0.0
    %4874 = vmatpush1.msra.mxu0 0.0
    %4875 = vmatprep.subr.mxu0 0.0
    %4876 = vmatpush1.msra.mxu0 0.0
    %4877 = vmatprep.subr.mxu0 0.0
    %4878 = vmatpush1.msra.mxu0 0.0
    %4879 = vmatprep.subr.mxu0 0.0
    %4880 = vmatpush1.msra.mxu0 0.0
    %4881 = vmatprep.subr.mxu0 0.0
    %4882 = vmatpush1.msra.mxu0 0.0
    %4883 = vmatprep.subr.mxu0 0.0
    %4884 = vmatpush1.msra.mxu0 0.0
    %4885 = vmatprep.subr.mxu0 0.0
    %4886 = vmatpush1.msra.mxu0 0.0
    %4887 = vmatprep.subr.mxu0 0.0
    %4888 = vmatpush1.msra.mxu0 0.0
    %4889 = vmatprep.subr.mxu0 0.0
    %4890 = vmatpush1.msra.mxu0 0.0
    %4891 = vmatprep.mubr.f32.mxu0 0.0
    %4892 = vmatmul.mubr.f32.gmra.mrb[0].mxu0 %v4825
    %v4893 = vpop.f32.mrb[0].mxu0
    %v4894 = vadd.f32 %v4669, %v4893
    %v4895 = vpop.f32.mrb[0].mxu0
    %v4896 = vadd.f32 %v4671, %v4895
    %4897 = vdwg.mxu0
    %4898 = vmatprep.subr.mxu0 %v752
    %4899 = vmatpush1.msra.mxu0 %v751
    %4900 = vmatprep.subr.mxu0 %v756
    %4901 = vmatpush1.msra.mxu0 %v755
    %4902 = vmatprep.subr.mxu0 %v760
    %4903 = vmatpush1.msra.mxu0 %v759
    %4904 = vmatprep.subr.mxu0 %v764
    %4905 = vmatpush1.msra.mxu0 %v763
    %4906 = vmatprep.subr.mxu0 %v768
    %4907 = vmatpush1.msra.mxu0 %v767
    %4908 = vmatprep.subr.mxu0 %v772
    %4909 = vmatpush1.msra.mxu0 %v771
    %4910 = vmatprep.subr.mxu0 %v776
    %4911 = vmatpush1.msra.mxu0 %v775
    %4912 = vmatprep.subr.mxu0 %v780
    %4913 = vmatpush1.msra.mxu0 %v779
    %4914 = vmatprep.subr.mxu0 %v784
    %4915 = vmatpush1.msra.mxu0 %v783
    %4916 = vmatprep.subr.mxu0 %v788
    %4917 = vmatpush1.msra.mxu0 %v787
    %4918 = vmatprep.subr.mxu0 %v792
    %4919 = vmatpush1.msra.mxu0 %v791
    %4920 = vmatprep.subr.mxu0 %v796
    %4921 = vmatpush1.msra.mxu0 %v795
    %4922 = vmatprep.subr.mxu0 %v800
    %4923 = vmatpush1.msra.mxu0 %v799
    %4924 = vmatprep.subr.mxu0 %v804
    %4925 = vmatpush1.msra.mxu0 %v803
    %4926 = vmatprep.subr.mxu0 0.0
    %4927 = vmatpush1.msra.mxu0 0.0
    %4928 = vmatprep.subr.mxu0 0.0
    %4929 = vmatpush1.msra.mxu0 0.0
    %4930 = vmatprep.subr.mxu0 0.0
    %4931 = vmatpush1.msra.mxu0 0.0
    %4932 = vmatprep.subr.mxu0 0.0
    %4933 = vmatpush1.msra.mxu0 0.0
    %4934 = vmatprep.subr.mxu0 0.0
    %4935 = vmatpush1.msra.mxu0 0.0
    %4936 = vmatprep.subr.mxu0 0.0
    %4937 = vmatpush1.msra.mxu0 0.0
    %4938 = vmatprep.subr.mxu0 0.0
    %4939 = vmatpush1.msra.mxu0 0.0
    %4940 = vmatprep.subr.mxu0 0.0
    %4941 = vmatpush1.msra.mxu0 0.0
    %4942 = vmatprep.subr.mxu0 0.0
    %4943 = vmatpush1.msra.mxu0 0.0
    %4944 = vmatprep.subr.mxu0 0.0
    %4945 = vmatpush1.msra.mxu0 0.0
    %4946 = vmatprep.subr.mxu0 0.0
    %4947 = vmatpush1.msra.mxu0 0.0
    %4948 = vmatprep.subr.mxu0 0.0
    %4949 = vmatpush1.msra.mxu0 0.0
    %4950 = vmatprep.subr.mxu0 0.0
    %4951 = vmatpush1.msra.mxu0 0.0
    %4952 = vmatprep.subr.mxu0 0.0
    %4953 = vmatpush1.msra.mxu0 0.0
    %4954 = vmatprep.subr.mxu0 0.0
    %4955 = vmatpush1.msra.mxu0 0.0
    %4956 = vmatprep.subr.mxu0 0.0
    %4957 = vmatpush1.msra.mxu0 0.0
    %4958 = vmatprep.subr.mxu0 0.0
    %4959 = vmatpush1.msra.mxu0 0.0
    %4960 = vmatprep.subr.mxu0 0.0
    %4961 = vmatpush1.msra.mxu0 0.0
    %4962 = vmatprep.mubr.f32.mxu0 0.0
    %4963 = vmatmul.mubr.f32.gmra.mrb[0].mxu0 %v4825
    %v4964 = vpop.f32.mrb[0].mxu0
    %v4965 = vadd.f32 %v4740, %v4964
    %v4966 = vpop.f32.mrb[0].mxu0
    %v4967 = vadd.f32 %v4742, %v4966
    %4968 = vdwg.mxu0
    %v4969 = vadd.f32 %v4894, %v962
    %v4970 = vadd.f32 %v4896, %v966
    %v4971 = vadd.f32 %v4965, %v970
    %v4972 = vadd.f32 %v4967, %v974
    %v4973 = vxor.u32 %v4969, 2147483648
    %v4974 = vxor.u32 %v4970, 2147483648
    %v4975 = vxor.u32 %v4971, 2147483648
    %v4976 = vmul.f32 %v4973, 1.442695
    %v4977 = vpow.pop %v4976
    %v4978 = vmul.f32 %v4974, 1.442695
    %v4979 = vpow.pop %v4978
    %v4980 = vmul.f32 %v4975, 1.442695
    %v4981 = vpow.pop %v4980
    %v4982 = vadd.f32 %v4977, 1.0
    %v4983 = vadd.f32 %v4979, 1.0
    %v4984 = vadd.f32 %v4981, 1.0
    %v4985 = vrcp.pop %v4982
    %v4986 = vmul.f32 1.0, %v4985
    %v4987 = vrcp.pop %v4983
    %v4988 = vmul.f32 1.0, %v4987
    %v4989 = vrcp.pop %v4984
    %v4990 = vmul.f32 1.0, %v4989
    %v4991 = vtanh.pop %v4971
    %v4992 = vtanh.pop %v4972
    %v4993 = vmul.f32 %v4986, %v4436
    %v4994 = vmul.f32 %v4988, %v4437
    %4997 = vrot.lane.b32.xlu0 %v4991, 48
    %v4998 = vpop.permute.xlu0 %4997
    %4999 = vrot.lane.b32.xlu0 %v4992, 48
    %v5000 = vpop.permute.xlu0 %4999
    %v5001 = vsel %vm726, %v4998, %v5000
    %v5003 = vmul.f32 %v4986, %v5001
    %5005 = vrot.lane.b32.xlu0 %v5003, 112
    %v5006 = vpop.permute.xlu0 %5005
    %v5008 = vadd.f32 %v4993, %v5006
    %v5009 = vadd.f32 %v4994, %v5006
    %v5010 = vtanh.pop %v5008
    %v5011 = vtanh.pop %v5009
    %5014 = vrot.lane.b32.xlu0 %v5010, 112
    %v5015 = vpop.permute.xlu0 %5014
    %5016 = vrot.lane.b32.xlu0 %v5011, 112
    %v5017 = vpop.permute.xlu0 %5016
    %v5018 = vsel %vm350, %v5015, %v5017
    %v5021 = vmul.f32 %v4988, %v5018
    %v5022 = vmul.f32 %v4990, %v5017
    %v5023 = vld [vmem:[%s7] sm:$0xff]
    %v5024 = vld [vmem:[%s7 + $0x8] sm:$0xff]
    %v5025 = vld [vmem:[%s7 + $0x10] sm:$0xff]
    %v5026 = vld [vmem:[%s7 + $0x18] sm:$0xff]
    %v5027 = vld [vmem:[%s7 + $0x20] sm:$0xff]
    %v5028 = vld [vmem:[%s7 + $0x28] sm:$0xff]
    %v5029 = vld [vmem:[%s7 + $0x30] sm:$0xff]
    %v5030 = vld [vmem:[%s7 + $0x38] sm:$0xff]
    %v5031 = vld [vmem:[%s7 + $0x40] sm:$0xff]
    %v5032 = vld [vmem:[%s7 + $0x48] sm:$0xff]
    %v5033 = vld [vmem:[%s7 + $0x50] sm:$0xff]
    %v5034 = vld [vmem:[%s7 + $0x58] sm:$0xff]
    %v5035 = vld [vmem:[%s7 + $0x60] sm:$0xff]
    %v5036 = vld [vmem:[%s7 + $0x68] sm:$0xff]
    %5039 = vrot.lane.b32.xlu0 %v5021, 32
    %v5040 = vpop.permute.xlu0 %5039
    %5041 = vrot.lane.b32.xlu0 %v5022, 32
    %v5042 = vpop.permute.xlu0 %5041
    %v5043 = vsel %vm811, %v5040, %v5042
    %v5044 = vsel %vm350, %v5043, 0
    %5046 = vmatprep.subr.mxu0 0.0
    %5047 = vmatpush1.msra.mxu0 %v5023
    %5048 = vmatprep.subr.mxu0 0.0
    %5049 = vmatpush1.msra.mxu0 %v5024
    %5050 = vmatprep.subr.mxu0 0.0
    %5051 = vmatpush1.msra.mxu0 %v5025
    %5052 = vmatprep.subr.mxu0 0.0
    %5053 = vmatpush1.msra.mxu0 %v5026
    %5054 = vmatprep.subr.mxu0 0.0
    %5055 = vmatpush1.msra.mxu0 %v5027
    %5056 = vmatprep.subr.mxu0 0.0
    %5057 = vmatpush1.msra.mxu0 %v5028
    %5058 = vmatprep.subr.mxu0 0.0
    %5059 = vmatpush1.msra.mxu0 %v5029
    %5060 = vmatprep.subr.mxu0 0.0
    %5061 = vmatpush1.msra.mxu0 %v5030
    %5062 = vmatprep.subr.mxu0 0.0
    %5063 = vmatpush1.msra.mxu0 %v5031
    %5064 = vmatprep.subr.mxu0 0.0
    %5065 = vmatpush1.msra.mxu0 %v5032
    %5066 = vmatprep.subr.mxu0 0.0
    %5067 = vmatpush1.msra.mxu0 %v5033
    %5068 = vmatprep.subr.mxu0 0.0
    %5069 = vmatpush1.msra.mxu0 %v5034
    %5070 = vmatprep.subr.mxu0 0.0
    %5071 = vmatpush1.msra.mxu0 %v5035
    %5072 = vmatprep.subr.mxu0 0.0
    %5073 = vmatpush1.msra.mxu0 %v5036
    %5074 = vmatprep.subr.mxu0 0.0
    %5075 = vmatpush1.msra.mxu0 0.0
    %5076 = vmatprep.subr.mxu0 0.0
    %5077 = vmatpush1.msra.mxu0 0.0
    %5078 = vmatprep.subr.mxu0 0.0
    %5079 = vmatpush1.msra.mxu0 0.0
    %5080 = vmatprep.subr.mxu0 0.0
    %5081 = vmatpush1.msra.mxu0 0.0
    %5082 = vmatprep.subr.mxu0 0.0
    %5083 = vmatpush1.msra.mxu0 0.0
    %5084 = vmatprep.subr.mxu0 0.0
    %5085 = vmatpush1.msra.mxu0 0.0
    %5086 = vmatprep.subr.mxu0 0.0
    %5087 = vmatpush1.msra.mxu0 0.0
    %5088 = vmatprep.subr.mxu0 0.0
    %5089 = vmatpush1.msra.mxu0 0.0
    %5090 = vmatprep.subr.mxu0 0.0
    %5091 = vmatpush1.msra.mxu0 0.0
    %5092 = vmatprep.subr.mxu0 0.0
    %5093 = vmatpush1.msra.mxu0 0.0
    %5094 = vmatprep.subr.mxu0 0.0
    %5095 = vmatpush1.msra.mxu0 0.0
    %5096 = vmatprep.subr.mxu0 0.0
    %5097 = vmatpush1.msra.mxu0 0.0
    %5098 = vmatprep.subr.mxu0 0.0
    %5099 = vmatpush1.msra.mxu0 0.0
    %5100 = vmatprep.subr.mxu0 0.0
    %5101 = vmatpush1.msra.mxu0 0.0
    %5102 = vmatprep.subr.mxu0 0.0
    %5103 = vmatpush1.msra.mxu0 0.0
    %5104 = vmatprep.subr.mxu0 0.0
    %5105 = vmatpush1.msra.mxu0 0.0
    %5106 = vmatprep.subr.mxu0 0.0
    %5107 = vmatpush1.msra.mxu0 0.0
    %5108 = vmatprep.subr.mxu0 0.0
    %5109 = vmatpush1.msra.mxu0 0.0
    %5110 = vmatprep.mubr.f32.mxu0 0.0
    %5111 = vmatmul.mubr.f32.gmra.mrb[0].mxu0 %v5044
    %v5112 = vpop.f32.mrb[0].mxu0
    %v5113 = vadd.f32 0.0, %v5112
    %v5114 = vpop.f32.mrb[0].mxu0
    %5115 = vdwg.mxu0
    %v5116 = vld [vmem:[%s8] sm:$0x1]
    %v5118 = vlaneseq
    %v5119 = vshrl.u32 %v5118, 7
    %v5120 = vsub.s32 0, %v5119
    %v5121 = vrot.slane %v5116, %v5120
    %v5123 = vmul.f32 %v5113, %v5121
    %v5124 = vld [vmem:[%s9] sm:$0x1]
    %v5126 = vlaneseq
    %v5127 = vshrl.u32 %v5126, 7
    %v5128 = vsub.s32 0, %v5127
    %v5129 = vrot.slane %v5124, %v5128
    %v5131 = vadd.f32 %v5123, %v5129
    %vm5132 = vcmp.ge.f32.partialorder %v5131, 0.0
    %v5133 = vmul.f32 %v5131, 0.2
    %v5134 = vsel %vm5132, %v5131, %v5133
    %v5135 = vld [vmem:[%s10] sm:$0xff]
    %v5136 = vld [vmem:[%s10 + $0x8] sm:$0xff]
    %v5137 = vld [vmem:[%s10 + $0x10] sm:$0xff]
    %v5138 = vld [vmem:[%s10 + $0x18] sm:$0xff]
    %v5139 = vld [vmem:[%s10 + $0x20] sm:$0xff]
    %v5140 = vld [vmem:[%s10 + $0x28] sm:$0xff]
    %v5141 = vld [vmem:[%s10 + $0x30] sm:$0xff]
    %vm5142 = vcmask 457728
    %v5144 = vsel %vm5142, %v5134, 0
    %5146 = vmatprep.subr.mxu0 0.0
    %5147 = vmatpush1.msra.mxu0 %v5135
    %5148 = vmatprep.subr.mxu0 0.0
    %5149 = vmatpush1.msra.mxu0 %v5136
    %5150 = vmatprep.subr.mxu0 0.0
    %5151 = vmatpush1.msra.mxu0 %v5137
    %5152 = vmatprep.subr.mxu0 0.0
    %5153 = vmatpush1.msra.mxu0 %v5138
    %5154 = vmatprep.subr.mxu0 0.0
    %5155 = vmatpush1.msra.mxu0 %v5139
    %5156 = vmatprep.subr.mxu0 0.0
    %5157 = vmatpush1.msra.mxu0 %v5140
    %5158 = vmatprep.subr.mxu0 0.0
    %5159 = vmatpush1.msra.mxu0 %v5141
    %5160 = vmatprep.subr.mxu0 0.0
    %5161 = vmatpush1.msra.mxu0 0.0
    %5162 = vmatprep.subr.mxu0 0.0
    %5163 = vmatpush1.msra.mxu0 0.0
    %5164 = vmatprep.subr.mxu0 0.0
    %5165 = vmatpush1.msra.mxu0 0.0
    %5166 = vmatprep.subr.mxu0 0.0
    %5167 = vmatpush1.msra.mxu0 0.0
    %5168 = vmatprep.subr.mxu0 0.0
    %5169 = vmatpush1.msra.mxu0 0.0
    %5170 = vmatprep.subr.mxu0 0.0
    %5171 = vmatpush1.msra.mxu0 0.0
    %5172 = vmatprep.subr.mxu0 0.0
    %5173 = vmatpush1.msra.mxu0 0.0
    %5174 = vmatprep.subr.mxu0 0.0
    %5175 = vmatpush1.msra.mxu0 0.0
    %5176 = vmatprep.subr.mxu0 0.0
    %5177 = vmatpush1.msra.mxu0 0.0
    %5178 = vmatprep.subr.mxu0 0.0
    %5179 = vmatpush1.msra.mxu0 0.0
    %5180 = vmatprep.subr.mxu0 0.0
    %5181 = vmatpush1.msra.mxu0 0.0
    %5182 = vmatprep.subr.mxu0 0.0
    %5183 = vmatpush1.msra.mxu0 0.0
    %5184 = vmatprep.subr.mxu0 0.0
    %5185 = vmatpush1.msra.mxu0 0.0
    %5186 = vmatprep.subr.mxu0 0.0
    %5187 = vmatpush1.msra.mxu0 0.0
    %5188 = vmatprep.subr.mxu0 0.0
    %5189 = vmatpush1.msra.mxu0 0.0
    %5190 = vmatprep.subr.mxu0 0.0
    %5191 = vmatpush1.msra.mxu0 0.0
    %5192 = vmatprep.subr.mxu0 0.0
    %5193 = vmatpush1.msra.mxu0 0.0
    %5194 = vmatprep.subr.mxu0 0.0
    %5195 = vmatpush1.msra.mxu0 0.0
    %5196 = vmatprep.subr.mxu0 0.0
    %5197 = vmatpush1.msra.mxu0 0.0
    %5198 = vmatprep.subr.mxu0 0.0
    %5199 = vmatpush1.msra.mxu0 0.0
    %5200 = vmatprep.subr.mxu0 0.0
    %5201 = vmatpush1.msra.mxu0 0.0
    %5202 = vmatprep.subr.mxu0 0.0
    %5203 = vmatpush1.msra.mxu0 0.0
    %5204 = vmatprep.subr.mxu0 0.0
    %5205 = vmatpush1.msra.mxu0 0.0
    %5206 = vmatprep.subr.mxu0 0.0
    %5207 = vmatpush1.msra.mxu0 0.0
    %5208 = vmatprep.subr.mxu0 0.0
    %5209 = vmatpush1.msra.mxu0 0.0
    %5210 = vmatprep.mubr.f32.mxu0 0.0
    %5211 = vmatmul.mubr.f32.gmra.mrb[0].mxu0 %v5144
    %v5212 = vpop.f32.mrb[0].mxu0
    %v5213 = vadd.f32 0.0, %v5212
    %v5214 = vpop.f32.mrb[0].mxu0
    %5215 = vdwg.mxu0
    %v5216 = vld [vmem:[%s11] sm:$0x1]
    %v5218 = vlaneseq
    %v5219 = vshrl.u32 %v5218, 7
    %v5220 = vsub.s32 0, %v5219
    %v5221 = vrot.slane %v5216, %v5220
    %v5223 = vmul.f32 %v5213, %v5221
    %v5224 = vld [vmem:[%s12] sm:$0x1]
    %v5226 = vlaneseq
    %v5227 = vshrl.u32 %v5226, 7
    %v5228 = vsub.s32 0, %v5227
    %v5229 = vrot.slane %v5224, %v5228
    %v5231 = vadd.f32 %v5223, %v5229
    %vm5232 = vcmask 123904
    %5233 = vst.msk [vmem:[#allocation8] sm:$0x3] %vm5232, %v5231
    // Predicated region
    $region66: #{tpu_custom_call.1} parent=1 // pred_check
      _
    $region67: #{tpu_custom_call.1} parent=1 // pred_check_branch
      %5235 = sbr.rel (0) target = $region69
    $region68: #{tpu_custom_call.1} parent=1 // pred_region
      %s5237 = ssub.s32 32, 32
      %5238 = vsyncadd [#allocation4], %s5237
      %s5240 = sshll.u32 [#allocation8], 4
      %s5241 = int_to_ptr.vmem [resolvable:$true] %s5240
      %5243 = dma.vmem_to_hbm [thread:$0]  %s5241, 32, %s13, [#allocation4]
    $region69: #{tpu_custom_call.1} parent=1 // pred_fallthru
      _
    // Predicated region
    $region70: #{tpu_custom_call.1} parent=1 // pred_check
      _
    $region71: #{tpu_custom_call.1} parent=1 // pred_check_branch
      %5245 = sbr.rel (0) target = $region73
    $region72: #{tpu_custom_call.1} parent=1 // pred_region
      %5246 = dma.done [#allocation4], 32
    $region73: #{tpu_custom_call.1} parent=1 // pred_fallthru
      _
    %5247 = vsyncpa [#allocation3], 1
    %5248 = vsyncpa [#allocation6], 1
    %5249 = vsyncpa [#allocation4], 1

</llo_original>
